<compile_context>
chip_gen: v7x
topology: tpu7x:2x2x1
jax: 0.10.0
libtpu: 0.0.40
codegen_flags: <defaults>
</compile_context>

<pallas_src>
import functools
import math

import jax
import jax.numpy as jnp
from jax.experimental import pallas as pl
from jax.experimental.pallas import tpu as pltpu

LN_EPS = 1e-5                      # torch.nn.LayerNorm default
NEG_FILL = float(-(2 ** 15) + 1)   # -32767.0, masked_fill value in the reference


# ---------------------------------------------------------------------------
# In-kernel helpers (all f32)
# ---------------------------------------------------------------------------
def _layernorm(x, gamma, beta):
    mean = jnp.mean(x, axis=-1, keepdims=True)
    xc = x - mean
    var = jnp.mean(xc * xc, axis=-1, keepdims=True)
    return xc * jax.lax.rsqrt(var + LN_EPS) * gamma + beta


def _gelu_tanh(x):
    # tanh GELU (EUP-friendly).  Deliberate ~1e-3 deviation from exact-erf
    # torch.nn.GELU(); well inside the bf16-matmul tolerance used here.
    c = math.sqrt(2.0 / math.pi)
    return 0.5 * x * (1.0 + jnp.tanh(c * (x + 0.044715 * x * x * x)))


# ---------------------------------------------------------------------------
# Kernel: ONE Linformer transformer layer for a tile of TB batch elements.
# grid = (B // TB, layersNum); the layer axis is the inner ("arbitrary") axis.
# xo_ref / so_ref double as the cross-layer carries (same block for all l).
# ---------------------------------------------------------------------------
def linformer_layer_kernel(*refs, TB, L, H, dk, Hdk, use_mask):
    if use_mask:
        (x_ref, qpad_ref,
         wqkv_ref, bqkv_ref, ef_ref, kvc_ref, wo_ref, bo_ref,
         g1_ref, be1_ref, w1_ref, b1_ref, w2_ref, b2_ref, g2_ref, be2_ref,
         xo_ref, so_ref) = refs
    else:
        (x_ref,
         wqkv_ref, bqkv_ref, ef_ref, kvc_ref, wo_ref, bo_ref,
         g1_ref, be1_ref, w1_ref, b1_ref, w2_ref, b2_ref, g2_ref, be2_ref,
         xo_ref, so_ref) = refs
        qpad_ref = None

    l_idx = pl.program_id(1)
    bf = jnp.bfloat16
    f32 = jnp.float32

    # ---- initialise the carries on the first layer of this batch tile
    @pl.when(l_idx == 0)
    def _init():
        xo_ref[...] = x_ref[...]
        so_ref[...] = jnp.zeros_like(so_ref)

    x2 = xo_ref[...]                               # (R, C) f32, R = TB*L
    xb = x2.astype(bf)

    # ---- fused Q/K/V projection (1/sqrt(dk) folded into the Q columns)
    qkv = jnp.dot(xb, wqkv_ref[0], preferred_element_type=f32) + bqkv_ref[0]
    q2 = qkv[:, 0 * Hdk:1 * Hdk]                   # (R, Hdk)  (x@WQ + bQ)/sqrt(dk)
    kp2 = qkv[:, 1 * Hdk:2 * Hdk]                  # (R, Hdk)   x@WK + bK
    vp2 = qkv[:, 2 * Hdk:3 * Hdk]                  # (R, Hdk)   x@WV + bV

    # ---- Linformer E/F projections (commuted past WK/WV; corr precomputed).
    #      Per-batch-element 2-D dots (TB is small & static) -> (TB, P, Hdk).
    e_w = ef_ref[0, 0]                             # (P, L) bf16
    f_w = ef_ref[0, 1]
    kc = kvc_ref[0, 0]                             # (P, Hdk) f32 bias correction
    vc = kvc_ref[0, 1]
    k_rows, v_rows = [], []
    for tb in range(TB):
        sl = slice(tb * L, (tb + 1) * L)
        k_rows.append(jnp.dot(e_w, kp2[sl].astype(bf), preferred_element_type=f32) + kc)
        v_rows.append(jnp.dot(f_w, vp2[sl].astype(bf), preferred_element_type=f32) + vc)
    k3 = jnp.stack(k_rows, axis=0)                 # (TB, P, Hdk) f32
    v3 = jnp.stack(v_rows, axis=0)                 # (TB, P, Hdk) f32
    q3 = q2.reshape(TB, L, Hdk)                    # leading-dim split (L is tile-aligned)

    if use_mask:
        masked_q = qpad_ref[...] == 0.0            # (TB, L, 1) bool (per-query-row fill)

    prev = so_ref[...]                             # (TB, H, L, P) f32 accumulated scores

    s_heads, z_heads = [], []
    for h in range(H):                             # static, small head loop
        hs = slice(h * dk, (h + 1) * dk)
        qh = q3[:, :, hs].astype(bf)               # (TB, L, dk)
        kh = k3[:, :, hs].astype(bf)               # (TB, P, dk)
        vh = v3[:, :, hs].astype(bf)               # (TB, P, dk)

        s = jnp.einsum('bld,bpd->blp', qh, kh, preferred_element_type=f32)  # (TB, L, P)
        s = s + prev[:, h]                         # residual "pre" scores (f32)
        if use_mask:
            s = jnp.where(masked_q, NEG_FILL, s)
        s_heads.append(s)

        # softmax over the P pseudo tokens (f32, EUP reciprocal)
        e = jnp.exp(s - jnp.max(s, axis=-1, keepdims=True))
        alpha = e * pl.reciprocal(jnp.sum(e, axis=-1, keepdims=True), approx=True)
        z_heads.append(jnp.einsum('blp,bpd->bld', alpha.astype(bf), vh,
                                  preferred_element_type=f32))              # (TB, L, dk)

    so_ref[...] = jnp.stack(s_heads, axis=1)       # single (TB, H, L, P) store
    z2 = jnp.concatenate(z_heads, axis=-1).reshape(TB * L, Hdk)

    # ---- WO + FFN_PostLN (dropout == identity at inference)
    # TODO(synk): training-time dropout would need pltpu.prng_* (not needed for fwd).
    z = jnp.dot(z2.astype(bf), wo_ref[0], preferred_element_type=f32) + bo_ref[0]
    z1 = _layernorm(x2 + z, g1_ref[0], be1_ref[0])
    h1 = jnp.dot(z1.astype(bf), w1_ref[0], preferred_element_type=f32) + b1_ref[0]
    ffn = jnp.dot(_gelu_tanh(h1).astype(bf), w2_ref[0],
                  preferred_element_type=f32) + b2_ref[0]
    xo_ref[...] = _layernorm(z1 + ffn, g2_ref[0], be2_ref[0])


# ---------------------------------------------------------------------------
# Parameter prep (pure JAX, once): stack per-layer weights, fuse QKV, fold the
# 1/sqrt(dk) scale, precompute E/F bias corrections, cast matmul weights bf16.
# ---------------------------------------------------------------------------
def prepare_stacked_params(raw_params, *, dk):
    inv = 1.0 / math.sqrt(dk)
    bf = jnp.bfloat16

    def corr(e_w, e_b, w, b):
        # (E @ x + e_b) @ W + b  ==  E @ (x @ W + b) + corr
        return ((1.0 - jnp.sum(e_w, axis=1))[:, None] * b[None, :]
                + e_b[:, None] * jnp.sum(w, axis=0)[None, :])

    def st(fn, dtype=jnp.float32):
        return jnp.stack([fn(p) for p in raw_params], axis=0).astype(dtype)

    return dict(
        wqkv=st(lambda p: jnp.concatenate([p["wq"] * inv, p["wk"], p["wv"]], axis=1), bf),
        bqkv=st(lambda p: jnp.concatenate([p["bq"] * inv, p["bk"], p["bv"]])[None, :]),
        ef=st(lambda p: jnp.stack([p["e_w"], p["f_w"]], axis=0), bf),        # (nL,2,P,L)
        kvc=st(lambda p: jnp.stack([corr(p["e_w"], p["e_b"], p["wk"], p["bk"]),
                                    corr(p["f_w"], p["f_b"], p["wv"], p["bv"])],
                                   axis=0)),                                 # (nL,2,P,Hdk)
        wo=st(lambda p: p["wo"], bf),
        bo=st(lambda p: p["bo"][None, :]),
        g1=st(lambda p: p["g1"][None, :]),
        be1=st(lambda p: p["be1"][None, :]),
        w1=st(lambda p: p["w1"], bf),
        b1=st(lambda p: p["b1"][None, :]),
        w2=st(lambda p: p["w2"], bf),
        b2=st(lambda p: p["b2"][None, :]),
        g2=st(lambda p: p["g2"][None, :]),
        be2=st(lambda p: p["be2"][None, :]),
    )


_WEIGHT_ORDER = ("wqkv", "bqkv", "ef", "kvc", "wo", "bo",
                 "g1", "be1", "w1", "b1", "w2", "b2", "g2", "be2")


def _choose_tb(B, L, target_rows=256, max_rows=2048):
    """Fold batch elements per grid step until the matmul M dim ~ target_rows."""
    best = None
    for tb in range(1, B + 1):
        if B % tb != 0:
            continue
        rows = tb * L
        if rows > max_rows:
            break
        if (rows % 8 == 0) or (tb == B):       # keep (8,128) block tiling legal
            best = tb
        if best is not None and rows >= target_rows:
            break
    return B if best is None else best


# ---------------------------------------------------------------------------
# pallas_call wrapper — forward of TransformerLayers_Linformer
# ---------------------------------------------------------------------------
def transformer_layers_linformer(x, maskPAD, stacked, *, dk, multiNum):
    """Returns (qx, kx, vx, scores, maskPAD) like the PyTorch module."""
    B, L, C = x.shape
    nL = stacked["wqkv"].shape[0]
    Hdk = dk * multiNum
    P = stacked["ef"].shape[2]
    use_mask = maskPAD is not None

    TB = _choose_tb(B, L)
    R = TB * L
    n_btiles = B // TB

    kern = functools.partial(linformer_layer_kernel, TB=TB, L=L, H=multiNum,
                             dk=dk, Hdk=Hdk, use_mask=use_mask)

    x2d = x.reshape(B * L, C)

    in_specs = [pl.BlockSpec((R, C), lambda b, l: (b, 0))]
    inputs = [x2d]
    if use_mask:
        # The reference only uses maskPAD[:, 0, :]; pass just that, lane-thin.
        qpad = maskPAD[:, 0, :, None]                        # (B, L, 1)
        in_specs.append(pl.BlockSpec((TB, L, 1), lambda b, l: (b, 0, 0)))
        inputs.append(qpad)

    def wspec(arr):
        # per-layer weight slab, streamed by layer index (double-buffered DMA
        # overlaps next-layer weight fetch with current-layer compute)
        zeros = (0,) * (arr.ndim - 1)
        return pl.BlockSpec((1,) + arr.shape[1:], lambda b, l, _z=zeros: (l,) + _z)

    for name in _WEIGHT_ORDER:
        arr = stacked[name]
        in_specs.append(wspec(arr))
        inputs.append(arr)

    out_shapes = (jax.ShapeDtypeStruct((B * L, C), jnp.float32),
                  jax.ShapeDtypeStruct((B, multiNum, L, P), jnp.float32))
    out_specs = (pl.BlockSpec((R, C), lambda b, l: (b, 0)),
                 pl.BlockSpec((TB, multiNum, L, P), lambda b, l: (b, 0, 0, 0)))

    # ---- scoped VMEM limit (2 layers of weights + activation blocks + headroom)
    weight_bytes = sum(int(stacked[n].size * stacked[n].dtype.itemsize)
                       for n in _WEIGHT_ORDER)
    per_layer_w = weight_bytes // nL
    act_block = 2 * R * C * 4 + TB * multiNum * L * P * 4 + (TB * L * 4 if use_mask else 0)
    interm = R * (5 * Hdk + 12 * C) * 4
    vmem_needed = 2 * per_layer_w + 2 * act_block + interm + (4 << 20)
    vmem_limit = int(min(max(vmem_needed, 32 << 20), 64 << 20))

    # ---- cost estimate (advisory)
    flops = 2 * B * nL * (L * C * 3 * Hdk          # fused QKV
                          + 2 * P * L * Hdk        # E/F projections
                          + 2 * L * P * Hdk        # scores + alpha@v
                          + L * Hdk * C            # WO
                          + 8 * L * C * C)         # FFN (C->4C->C)
    transcendentals = B * nL * (multiNum * L * P + 4 * C * L + multiNum * L)
    bytes_accessed = (int(x2d.size * 4) + (int(qpad.size * 4) if use_mask else 0)
                      + weight_bytes * n_btiles
                      + B * L * C * 4 + B * multiNum * L * P * 4)
    ce = pl.CostEstimate(flops=int(flops), transcendentals=int(transcendentals),
                         bytes_accessed=int(bytes_accessed))

    x_out2d, scores = pl.pallas_call(
        kern,
        out_shape=out_shapes,
        grid=(n_btiles, nL),
        in_specs=in_specs,
        out_specs=out_specs,
        compiler_params=pltpu.CompilerParams(
            dimension_semantics=("parallel", "arbitrary"),
            vmem_limit_bytes=vmem_limit),
        cost_estimate=ce,
    )(*inputs)

    x_out = x_out2d.reshape(B, L, C)
    return x_out, x_out, x_out, scores, maskPAD


# ---------------------------------------------------------------------------
# Deterministic parameter init (biases / LN affine get small random values so
# every bias / correction term in the kernel algebra is exercised).
# ---------------------------------------------------------------------------
def init_params(key, layersNum, feaSize, dk, multiNum, seqMaxLen, pseudoTknNum):
    C, Hdk, P, L, Hf = feaSize, dk * multiNum, pseudoTknNum, seqMaxLen, 4 * feaSize

    def tn(k, shape, std=0.02):
        return std * jax.random.truncated_normal(k, -2.0, 2.0, shape, jnp.float32)

    params = []
    for i in range(layersNum):
        ks = jax.random.split(jax.random.fold_in(key, i), 20)
        params.append(dict(
            wq=tn(ks[0], (C, Hdk)),  bq=tn(ks[1], (Hdk,)),
            wk=tn(ks[2], (C, Hdk)),  bk=tn(ks[3], (Hdk,)),
            wv=tn(ks[4], (C, Hdk)),  bv=tn(ks[5], (Hdk,)),
            wo=tn(ks[6], (Hdk, C)),  bo=tn(ks[7], (C,)),
            e_w=tn(ks[8], (P, L)),   e_b=tn(ks[9], (P,)),
            f_w=tn(ks[10], (P, L)),  f_b=tn(ks[11], (P,)),
            g1=1.0 + tn(ks[12], (C,)), be1=tn(ks[13], (C,)),
            w1=tn(ks[14], (C, Hf)),  b1=tn(ks[15], (Hf,)),
            w2=tn(ks[16], (Hf, C)),  b2=tn(ks[17], (C,)),
            g2=1.0 + tn(ks[18], (C,)), be2=tn(ks[19], (C,)),
        ))
    return params


# ---------------------------------------------------------------------------
# Pure-JAX f32 reference (mirrors the PyTorch forward op-for-op)
# ---------------------------------------------------------------------------
def _ref_ln(x, g, b):
    m = jnp.mean(x, axis=-1, keepdims=True)
    v = jnp.mean((x - m) ** 2, axis=-1, keepdims=True)
    return (x - m) / jnp.sqrt(v + LN_EPS) * g + b


def ref_forward(x, maskPAD, raw_params, *, dk, multiNum, pseudoTknNum):
    B, L, C = x.shape
    preScores = None
    for p in raw_params:
        qx = kx = vx = x
        q = (qx @ p["wq"] + p["bq"]).reshape(B, L, multiNum, dk).transpose(0, 2, 1, 3)
        kxp = jnp.einsum("pl,blc->bpc", p["e_w"], kx) + p["e_b"][None, :, None]
        k = (kxp @ p["wk"] + p["bk"]).reshape(B, pseudoTknNum, multiNum, dk).transpose(0, 2, 1, 3)
        vxp = jnp.einsum("pl,blc->bpc", p["f_w"], vx) + p["f_b"][None, :, None]
        v = (vxp @ p["wv"] + p["bv"]).reshape(B, pseudoTknNum, multiNum, dk).transpose(0, 2, 1, 3)
        s = jnp.einsum("bhld,bhpd->bhlp", q, k) / math.sqrt(dk)
        if preScores is not None:
            s = s + preScores
        if maskPAD is not None:
            s = jnp.where((maskPAD[:, 0] == 0)[:, None, :, None], NEG_FILL, s)
        alpha = jax.nn.softmax(s, axis=3)
        z = jnp.einsum("bhlp,bhpd->bhld", alpha, v).transpose(0, 2, 1, 3).reshape(B, L, -1)
        z = z @ p["wo"] + p["bo"]
        z1 = _ref_ln(vx + z, p["g1"], p["be1"])
        hdd = jax.nn.gelu(z1 @ p["w1"] + p["b1"], approximate=False)
        x = _ref_ln(z1 + (hdd @ p["w2"] + p["b2"]), p["g2"], p["be2"])
        preScores = s
    return x, preScores


# ---------------------------------------------------------------------------
if __name__ == "__main__":
    seqMaxLen, pseudoTknNum = 8, 4          # L, P  (E/F project L -> P)
    layersNum, feaSize, dk, multiNum = 2, 32, 8, 4
    B = 2

    key = jax.random.PRNGKey(0)
    k_x, k_p = jax.random.split(key)
    x = jax.random.normal(k_x, (B, seqMaxLen, feaSize), jnp.float32)

    raw_params = init_params(k_p, layersNum, feaSize, dk, multiNum, seqMaxLen, pseudoTknNum)
    stacked = prepare_stacked_params(raw_params, dk=dk)

    # padding mask: batch 0 fully valid, batch 1 has 3 padded tail tokens
    valid = (jnp.arange(seqMaxLen)[None, :] < jnp.array([[seqMaxLen], [5]])).astype(jnp.float32)
    maskPAD = valid[:, :, None] * valid[:, None, :]          # (B, L, L)

    # Tolerance is 2e-2: the kernel runs its matmuls in bf16 (native MXU path)
    # and uses tanh-GELU / approx reciprocal; the reference is exact f32.
    TOL = 2e-2
    for mp in (maskPAD, None):                               # masked + maskless variants
        qx_o, kx_o, vx_o, scores_o, _ = transformer_layers_linformer(
            x, mp, stacked, dk=dk, multiNum=multiNum)
        qx_o = jax.block_until_ready(qx_o)

        ref_x, ref_s = ref_forward(x, mp, raw_params, dk=dk,
                                   multiNum=multiNum, pseudoTknNum=pseudoTknNum)
        assert jnp.allclose(qx_o, ref_x, atol=TOL, rtol=TOL), "activation mismatch"
        assert jnp.allclose(scores_o, ref_s, atol=TOL, rtol=TOL), "scores mismatch"
        assert jnp.allclose(qx_o, kx_o) and jnp.allclose(qx_o, vx_o)

    print("KERNEL_OK")
</pallas_src>

<mosaic_0001>
module attributes {stable_mosaic.version = 11 : i64} {
  func.func @linformer_layer_kernel(%arg0: i32, %arg1: i32, %arg2: memref<16x32xf32, #tpu.memory_space<vmem>>, %arg3: memref<2x8x1xf32, #tpu.memory_space<vmem>>, %arg4: memref<1x32x96xbf16, #tpu.memory_space<vmem>>, %arg5: memref<1x1x96xf32, #tpu.memory_space<vmem>>, %arg6: memref<1x2x4x8xbf16, #tpu.memory_space<vmem>>, %arg7: memref<1x2x4x32xf32, #tpu.memory_space<vmem>>, %arg8: memref<1x32x32xbf16, #tpu.memory_space<vmem>>, %arg9: memref<1x1x32xf32, #tpu.memory_space<vmem>>, %arg10: memref<1x1x32xf32, #tpu.memory_space<vmem>>, %arg11: memref<1x1x32xf32, #tpu.memory_space<vmem>>, %arg12: memref<1x32x128xbf16, #tpu.memory_space<vmem>>, %arg13: memref<1x1x128xf32, #tpu.memory_space<vmem>>, %arg14: memref<1x128x32xbf16, #tpu.memory_space<vmem>>, %arg15: memref<1x1x32xf32, #tpu.memory_space<vmem>>, %arg16: memref<1x1x32xf32, #tpu.memory_space<vmem>>, %arg17: memref<1x1x32xf32, #tpu.memory_space<vmem>>, %arg18: memref<16x32xf32, #tpu.memory_space<vmem>>, %arg19: memref<2x4x8x4xf32, #tpu.memory_space<vmem>>) attributes {dimension_semantics = [#tpu.dimension_semantics<parallel>, #tpu.dimension_semantics<arbitrary>], iteration_bounds = array<i64: 1, 2>, scalar_prefetch = 0 : i64, scratch_operands = 0 : i64, tpu.core_type = #tpu.core_type<tc>, window_params = [{transform_indices = @transform_0, window_bounds = array<i64: 16, 32>}, {transform_indices = @transform_1, window_bounds = array<i64: 2, 8, 1>}, {transform_indices = @transform_2, window_bounds = array<i64: 1, 32, 96>}, {transform_indices = @transform_3, window_bounds = array<i64: 1, 1, 96>}, {transform_indices = @transform_4, window_bounds = array<i64: 1, 2, 4, 8>}, {transform_indices = @transform_5, window_bounds = array<i64: 1, 2, 4, 32>}, {transform_indices = @transform_6, window_bounds = array<i64: 1, 32, 32>}, {transform_indices = @transform_7, window_bounds = array<i64: 1, 1, 32>}, {transform_indices = @transform_8, window_bounds = array<i64: 1, 1, 32>}, {transform_indices = @transform_9, window_bounds = array<i64: 1, 1, 32>}, {transform_indices = @transform_10, window_bounds = array<i64: 1, 32, 128>}, {transform_indices = @transform_11, window_bounds = array<i64: 1, 1, 128>}, {transform_indices = @transform_12, window_bounds = array<i64: 1, 128, 32>}, {transform_indices = @transform_13, window_bounds = array<i64: 1, 1, 32>}, {transform_indices = @transform_14, window_bounds = array<i64: 1, 1, 32>}, {transform_indices = @transform_15, window_bounds = array<i64: 1, 1, 32>}, {transform_indices = @transform_16, window_bounds = array<i64: 16, 32>}, {transform_indices = @transform_17, window_bounds = array<i64: 2, 4, 8, 4>}]} {
    %c0_i32 = arith.constant 0 : i32
    %0 = arith.cmpi eq, %arg1, %c0_i32 : i32
    %1 = arith.extui %0 : i1 to i32
    %c0_i32_0 = arith.constant 0 : i32
    %2 = arith.cmpi ne, %1, %c0_i32_0 : i32
    scf.if %2 {
      %c0_108 = arith.constant 0 : index
      %c0_109 = arith.constant 0 : index
      %250 = vector.load %arg2[%c0_108, %c0_109] : memref<16x32xf32, #tpu.memory_space<vmem>>, vector<16x32xf32>
      %c0_110 = arith.constant 0 : index
      %c0_111 = arith.constant 0 : index
      %251 = vector.load %arg18[%c0_110, %c0_111] : memref<16x32xf32, #tpu.memory_space<vmem>>, vector<16x32xf32>
      tpu.vector_store %arg18[%c0_110, %c0_111], %250 {strides = array<i32>} : memref<16x32xf32, #tpu.memory_space<vmem>>, vector<16x32xf32>,
      %cst_112 = arith.constant 0.000000e+00 : f32
      %252 = vector.broadcast %cst_112 : f32 to vector<2x4x8x4xf32>
      %c0_113 = arith.constant 0 : index
      %c0_114 = arith.constant 0 : index
      %c0_115 = arith.constant 0 : index
      %c0_116 = arith.constant 0 : index
      %253 = vector.load %arg19[%c0_113, %c0_114, %c0_115, %c0_116] : memref<2x4x8x4xf32, #tpu.memory_space<vmem>>, vector<2x4x8x4xf32>
      tpu.vector_store %arg19[%c0_113, %c0_114, %c0_115, %c0_116], %252 {strides = array<i32>} : memref<2x4x8x4xf32, #tpu.memory_space<vmem>>, vector<2x4x8x4xf32>,
    } else {
    }
    %c0 = arith.constant 0 : index
    %c0_1 = arith.constant 0 : index
    %3 = vector.load %arg18[%c0, %c0_1] : memref<16x32xf32, #tpu.memory_space<vmem>>, vector<16x32xf32>
    %4 = arith.truncf %3 : vector<16x32xf32> to vector<16x32xbf16>
    %c0_2 = arith.constant 0 : index
    %c0_3 = arith.constant 0 : index
    %c0_4 = arith.constant 0 : index
    %5 = vector.load %arg4[%c0_2, %c0_3, %c0_4] : memref<1x32x96xbf16, #tpu.memory_space<vmem>>, vector<1x32x96xbf16>
    %6 = vector.shape_cast %5 : vector<1x32x96xbf16> to vector<32x96xbf16>
    %cst = arith.constant dense<0.000000e+00> : vector<16x96xf32>
    %7 = tpu.matmul %4, %6, %cst {dimension_numbers = #tpu.dot_dimension_numbers<[1], [0], [0], [1], [0, 0, 1, 1], [], []>} : vector<16x32xbf16>, vector<32x96xbf16>, vector<16x96xf32> -> vector<16x96xf32>
    %c0_5 = arith.constant 0 : index
    %c0_6 = arith.constant 0 : index
    %c0_7 = arith.constant 0 : index
    %8 = vector.load %arg5[%c0_5, %c0_6, %c0_7] : memref<1x1x96xf32, #tpu.memory_space<vmem>>, vector<1x1x96xf32>
    %9 = vector.shape_cast %8 : vector<1x1x96xf32> to vector<1x96xf32>
    %10 = vector.broadcast %9 : vector<1x96xf32> to vector<16x96xf32>
    %11 = arith.addf %7, %10 : vector<16x96xf32>
    %12 = vector.extract_strided_slice %11 {offsets = [0, 0], sizes = [16, 32], strides = [1, 1]} : vector<16x96xf32> to vector<16x32xf32>
    %13 = vector.extract_strided_slice %11 {offsets = [0, 32], sizes = [16, 32], strides = [1, 1]} : vector<16x96xf32> to vector<16x32xf32>
    %14 = vector.extract_strided_slice %11 {offsets = [0, 64], sizes = [16, 32], strides = [1, 1]} : vector<16x96xf32> to vector<16x32xf32>
    %c0_8 = arith.constant 0 : index
    %c0_9 = arith.constant 0 : index
    %c0_10 = arith.constant 0 : index
    %c0_11 = arith.constant 0 : index
    %15 = vector.load %arg6[%c0_8, %c0_9, %c0_10, %c0_11] : memref<1x2x4x8xbf16, #tpu.memory_space<vmem>>, vector<1x1x4x8xbf16>
    %16 = vector.shape_cast %15 : vector<1x1x4x8xbf16> to vector<4x8xbf16>
    %c0_12 = arith.constant 0 : index
    %c1 = arith.constant 1 : index
    %c0_13 = arith.constant 0 : index
    %c0_14 = arith.constant 0 : index
    %17 = vector.load %arg6[%c0_12, %c1, %c0_13, %c0_14] : memref<1x2x4x8xbf16, #tpu.memory_space<vmem>>, vector<1x1x4x8xbf16>
    %18 = vector.shape_cast %17 : vector<1x1x4x8xbf16> to vector<4x8xbf16>
    %c0_15 = arith.constant 0 : index
    %c0_16 = arith.constant 0 : index
    %c0_17 = arith.constant 0 : index
    %c0_18 = arith.constant 0 : index
    %19 = vector.load %arg7[%c0_15, %c0_16, %c0_17, %c0_18] : memref<1x2x4x32xf32, #tpu.memory_space<vmem>>, vector<1x1x4x32xf32>
    %20 = vector.shape_cast %19 : vector<1x1x4x32xf32> to vector<4x32xf32>
    %c0_19 = arith.constant 0 : index
    %c1_20 = arith.constant 1 : index
    %c0_21 = arith.constant 0 : index
    %c0_22 = arith.constant 0 : index
    %21 = vector.load %arg7[%c0_19, %c1_20, %c0_21, %c0_22] : memref<1x2x4x32xf32, #tpu.memory_space<vmem>>, vector<1x1x4x32xf32>
    %22 = vector.shape_cast %21 : vector<1x1x4x32xf32> to vector<4x32xf32>
    %23 = vector.extract_strided_slice %13 {offsets = [0, 0], sizes = [8, 32], strides = [1, 1]} : vector<16x32xf32> to vector<8x32xf32>
    %24 = arith.truncf %23 : vector<8x32xf32> to vector<8x32xbf16>
    %cst_23 = arith.constant dense<0.000000e+00> : vector<4x32xf32>
    %25 = tpu.matmul %16, %24, %cst_23 {dimension_numbers = #tpu.dot_dimension_numbers<[1], [0], [0], [1], [0, 0, 1, 1], [], []>} : vector<4x8xbf16>, vector<8x32xbf16>, vector<4x32xf32> -> vector<4x32xf32>
    %26 = arith.addf %25, %20 : vector<4x32xf32>
    %27 = vector.extract_strided_slice %14 {offsets = [0, 0], sizes = [8, 32], strides = [1, 1]} : vector<16x32xf32> to vector<8x32xf32>
    %28 = arith.truncf %27 : vector<8x32xf32> to vector<8x32xbf16>
    %cst_24 = arith.constant dense<0.000000e+00> : vector<4x32xf32>
    %29 = tpu.matmul %18, %28, %cst_24 {dimension_numbers = #tpu.dot_dimension_numbers<[1], [0], [0], [1], [0, 0, 1, 1], [], []>} : vector<4x8xbf16>, vector<8x32xbf16>, vector<4x32xf32> -> vector<4x32xf32>
    %30 = arith.addf %29, %22 : vector<4x32xf32>
    %31 = vector.extract_strided_slice %13 {offsets = [8, 0], sizes = [8, 32], strides = [1, 1]} : vector<16x32xf32> to vector<8x32xf32>
    %32 = arith.truncf %31 : vector<8x32xf32> to vector<8x32xbf16>
    %cst_25 = arith.constant dense<0.000000e+00> : vector<4x32xf32>
    %33 = tpu.matmul %16, %32, %cst_25 {dimension_numbers = #tpu.dot_dimension_numbers<[1], [0], [0], [1], [0, 0, 1, 1], [], []>} : vector<4x8xbf16>, vector<8x32xbf16>, vector<4x32xf32> -> vector<4x32xf32>
    %34 = arith.addf %33, %20 : vector<4x32xf32>
    %35 = vector.extract_strided_slice %14 {offsets = [8, 0], sizes = [8, 32], strides = [1, 1]} : vector<16x32xf32> to vector<8x32xf32>
    %36 = arith.truncf %35 : vector<8x32xf32> to vector<8x32xbf16>
    %cst_26 = arith.constant dense<0.000000e+00> : vector<4x32xf32>
    %37 = tpu.matmul %18, %36, %cst_26 {dimension_numbers = #tpu.dot_dimension_numbers<[1], [0], [0], [1], [0, 0, 1, 1], [], []>} : vector<4x8xbf16>, vector<8x32xbf16>, vector<4x32xf32> -> vector<4x32xf32>
    %38 = arith.addf %37, %22 : vector<4x32xf32>
    %39 = vector.shape_cast %26 : vector<4x32xf32> to vector<1x4x32xf32>
    %40 = vector.shape_cast %34 : vector<4x32xf32> to vector<1x4x32xf32>
    %41 = tpu.concatenate %39, %40 in 0 : vector<1x4x32xf32>, vector<1x4x32xf32> -> vector<2x4x32xf32>
    %42 = vector.shape_cast %30 : vector<4x32xf32> to vector<1x4x32xf32>
    %43 = vector.shape_cast %38 : vector<4x32xf32> to vector<1x4x32xf32>
    %44 = tpu.concatenate %42, %43 in 0 : vector<1x4x32xf32>, vector<1x4x32xf32> -> vector<2x4x32xf32>
    %45 = vector.shape_cast %12 : vector<16x32xf32> to vector<2x8x32xf32>
    %c0_27 = arith.constant 0 : index
    %c0_28 = arith.constant 0 : index
    %c0_29 = arith.constant 0 : index
    %46 = vector.load %arg3[%c0_27, %c0_28, %c0_29] : memref<2x8x1xf32, #tpu.memory_space<vmem>>, vector<2x8x1xf32>
    %cst_30 = arith.constant 0.000000e+00 : f32
    %47 = vector.broadcast %cst_30 : f32 to vector<2x8x1xf32>
    %48 = arith.cmpf oeq, %46, %47 : vector<2x8x1xf32>
    %c0_31 = arith.constant 0 : index
    %c0_32 = arith.constant 0 : index
    %c0_33 = arith.constant 0 : index
    %c0_34 = arith.constant 0 : index
    %49 = vector.load %arg19[%c0_31, %c0_32, %c0_33, %c0_34] : memref<2x4x8x4xf32, #tpu.memory_space<vmem>>, vector<2x4x8x4xf32>
    %50 = vector.extract_strided_slice %45 {offsets = [0, 0, 0], sizes = [2, 8, 8], strides = [1, 1, 1]} : vector<2x8x32xf32> to vector<2x8x8xf32>
    %51 = arith.truncf %50 : vector<2x8x8xf32> to vector<2x8x8xbf16>
    %52 = vector.extract_strided_slice %41 {offsets = [0, 0, 0], sizes = [2, 4, 8], strides = [1, 1, 1]} : vector<2x4x32xf32> to vector<2x4x8xf32>
    %53 = arith.truncf %52 : vector<2x4x8xf32> to vector<2x4x8xbf16>
    %54 = vector.extract_strided_slice %44 {offsets = [0, 0, 0], sizes = [2, 4, 8], strides = [1, 1, 1]} : vector<2x4x32xf32> to vector<2x4x8xf32>
    %55 = arith.truncf %54 : vector<2x4x8xf32> to vector<2x4x8xbf16>
    "tpu.trace_start"() <{level = 10 : i32, message = "bld,bpd->blp"}> : () -> ()
    %cst_35 = arith.constant dense<0.000000e+00> : vector<2x8x4xf32>
    %56 = tpu.matmul %51, %53, %cst_35 {dimension_numbers = #tpu.dot_dimension_numbers<[2], [2], [1], [1], [0, 0, 0, 1, 1, 1], [0], [0]>} : vector<2x8x8xbf16>, vector<2x4x8xbf16>, vector<2x8x4xf32> -> vector<2x8x4xf32>
    "tpu.trace_stop"() : () -> ()
    %57 = vector.extract_strided_slice %49 {offsets = [0, 0, 0, 0], sizes = [2, 1, 8, 4], strides = [1, 1, 1, 1]} : vector<2x4x8x4xf32> to vector<2x1x8x4xf32>
    %58 = vector.shape_cast %57 : vector<2x1x8x4xf32> to vector<2x8x4xf32>
    %59 = arith.addf %56, %58 : vector<2x8x4xf32>
    %cst_36 = arith.constant -3.276700e+04 : f32
    %60 = vector.shape_cast %48 : vector<2x8x1xi1> to vector<2x8x1xi1>
    %61 = vector.broadcast %60 : vector<2x8x1xi1> to vector<2x8x4xi1>
    %62 = vector.broadcast %cst_36 : f32 to vector<2x8x4xf32>
    %63 = arith.select %61, %62, %59 : vector<2x8x4xi1>, vector<2x8x4xf32>
    %cst_37 = arith.constant dense<0xFF800000> : vector<2x8xf32>
    %64 = vector.multi_reduction <maximumf>, %63, %cst_37 [2] : vector<2x8x4xf32> to vector<2x8xf32>
    %65 = vector.shape_cast %64 : vector<2x8xf32> to vector<2x8x1xf32>
    %66 = vector.broadcast %65 : vector<2x8x1xf32> to vector<2x8x4xf32>
    %67 = arith.subf %63, %66 : vector<2x8x4xf32>
    %68 = math.exp %67 : vector<2x8x4xf32>
    %cst_38 = arith.constant dense<0.000000e+00> : vector<2x8xf32>
    %69 = vector.multi_reduction <add>, %68, %cst_38 [2] : vector<2x8x4xf32> to vector<2x8xf32>
    %70 = vector.shape_cast %69 : vector<2x8xf32> to vector<2x8x1xf32>
    %71 = tpu.reciprocal %70 {approx = true} : vector<2x8x1xf32> -> vector<2x8x1xf32>
    %72 = vector.broadcast %71 : vector<2x8x1xf32> to vector<2x8x4xf32>
    %73 = arith.mulf %68, %72 : vector<2x8x4xf32>
    %74 = arith.truncf %73 : vector<2x8x4xf32> to vector<2x8x4xbf16>
    "tpu.trace_start"() <{level = 10 : i32, message = "blp,bpd->bld"}> : () -> ()
    %cst_39 = arith.constant dense<0.000000e+00> : vector<2x8x8xf32>
    %75 = tpu.matmul %74, %55, %cst_39 {dimension_numbers = #tpu.dot_dimension_numbers<[2], [1], [1], [2], [0, 0, 0, 1, 1, 2], [0], [0]>} : vector<2x8x4xbf16>, vector<2x4x8xbf16>, vector<2x8x8xf32> -> vector<2x8x8xf32>
    "tpu.trace_stop"() : () -> ()
    %76 = vector.extract_strided_slice %45 {offsets = [0, 0, 8], sizes = [2, 8, 8], strides = [1, 1, 1]} : vector<2x8x32xf32> to vector<2x8x8xf32>
    %77 = arith.truncf %76 : vector<2x8x8xf32> to vector<2x8x8xbf16>
    %78 = vector.extract_strided_slice %41 {offsets = [0, 0, 8], sizes = [2, 4, 8], strides = [1, 1, 1]} : vector<2x4x32xf32> to vector<2x4x8xf32>
    %79 = arith.truncf %78 : vector<2x4x8xf32> to vector<2x4x8xbf16>
    %80 = vector.extract_strided_slice %44 {offsets = [0, 0, 8], sizes = [2, 4, 8], strides = [1, 1, 1]} : vector<2x4x32xf32> to vector<2x4x8xf32>
    %81 = arith.truncf %80 : vector<2x4x8xf32> to vector<2x4x8xbf16>
    "tpu.trace_start"() <{level = 10 : i32, message = "bld,bpd->blp"}> : () -> ()
    %cst_40 = arith.constant dense<0.000000e+00> : vector<2x8x4xf32>
    %82 = tpu.matmul %77, %79, %cst_40 {dimension_numbers = #tpu.dot_dimension_numbers<[2], [2], [1], [1], [0, 0, 0, 1, 1, 1], [0], [0]>} : vector<2x8x8xbf16>, vector<2x4x8xbf16>, vector<2x8x4xf32> -> vector<2x8x4xf32>
    "tpu.trace_stop"() : () -> ()
    %83 = vector.extract_strided_slice %49 {offsets = [0, 1, 0, 0], sizes = [2, 1, 8, 4], strides = [1, 1, 1, 1]} : vector<2x4x8x4xf32> to vector<2x1x8x4xf32>
    %84 = vector.shape_cast %83 : vector<2x1x8x4xf32> to vector<2x8x4xf32>
    %85 = arith.addf %82, %84 : vector<2x8x4xf32>
    %cst_41 = arith.constant -3.276700e+04 : f32
    %86 = vector.shape_cast %48 : vector<2x8x1xi1> to vector<2x8x1xi1>
    %87 = vector.broadcast %86 : vector<2x8x1xi1> to vector<2x8x4xi1>
    %88 = vector.broadcast %cst_41 : f32 to vector<2x8x4xf32>
    %89 = arith.select %87, %88, %85 : vector<2x8x4xi1>, vector<2x8x4xf32>
    %cst_42 = arith.constant dense<0xFF800000> : vector<2x8xf32>
    %90 = vector.multi_reduction <maximumf>, %89, %cst_42 [2] : vector<2x8x4xf32> to vector<2x8xf32>
    %91 = vector.shape_cast %90 : vector<2x8xf32> to vector<2x8x1xf32>
    %92 = vector.broadcast %91 : vector<2x8x1xf32> to vector<2x8x4xf32>
    %93 = arith.subf %89, %92 : vector<2x8x4xf32>
    %94 = math.exp %93 : vector<2x8x4xf32>
    %cst_43 = arith.constant dense<0.000000e+00> : vector<2x8xf32>
    %95 = vector.multi_reduction <add>, %94, %cst_43 [2] : vector<2x8x4xf32> to vector<2x8xf32>
    %96 = vector.shape_cast %95 : vector<2x8xf32> to vector<2x8x1xf32>
    %97 = tpu.reciprocal %96 {approx = true} : vector<2x8x1xf32> -> vector<2x8x1xf32>
    %98 = vector.broadcast %97 : vector<2x8x1xf32> to vector<2x8x4xf32>
    %99 = arith.mulf %94, %98 : vector<2x8x4xf32>
    %100 = arith.truncf %99 : vector<2x8x4xf32> to vector<2x8x4xbf16>
    "tpu.trace_start"() <{level = 10 : i32, message = "blp,bpd->bld"}> : () -> ()
    %cst_44 = arith.constant dense<0.000000e+00> : vector<2x8x8xf32>
    %101 = tpu.matmul %100, %81, %cst_44 {dimension_numbers = #tpu.dot_dimension_numbers<[2], [1], [1], [2], [0, 0, 0, 1, 1, 2], [0], [0]>} : vector<2x8x4xbf16>, vector<2x4x8xbf16>, vector<2x8x8xf32> -> vector<2x8x8xf32>
    "tpu.trace_stop"() : () -> ()
    %102 = vector.extract_strided_slice %45 {offsets = [0, 0, 16], sizes = [2, 8, 8], strides = [1, 1, 1]} : vector<2x8x32xf32> to vector<2x8x8xf32>
    %103 = arith.truncf %102 : vector<2x8x8xf32> to vector<2x8x8xbf16>
    %104 = vector.extract_strided_slice %41 {offsets = [0, 0, 16], sizes = [2, 4, 8], strides = [1, 1, 1]} : vector<2x4x32xf32> to vector<2x4x8xf32>
    %105 = arith.truncf %104 : vector<2x4x8xf32> to vector<2x4x8xbf16>
    %106 = vector.extract_strided_slice %44 {offsets = [0, 0, 16], sizes = [2, 4, 8], strides = [1, 1, 1]} : vector<2x4x32xf32> to vector<2x4x8xf32>
    %107 = arith.truncf %106 : vector<2x4x8xf32> to vector<2x4x8xbf16>
    "tpu.trace_start"() <{level = 10 : i32, message = "bld,bpd->blp"}> : () -> ()
    %cst_45 = arith.constant dense<0.000000e+00> : vector<2x8x4xf32>
    %108 = tpu.matmul %103, %105, %cst_45 {dimension_numbers = #tpu.dot_dimension_numbers<[2], [2], [1], [1], [0, 0, 0, 1, 1, 1], [0], [0]>} : vector<2x8x8xbf16>, vector<2x4x8xbf16>, vector<2x8x4xf32> -> vector<2x8x4xf32>
    "tpu.trace_stop"() : () -> ()
    %109 = vector.extract_strided_slice %49 {offsets = [0, 2, 0, 0], sizes = [2, 1, 8, 4], strides = [1, 1, 1, 1]} : vector<2x4x8x4xf32> to vector<2x1x8x4xf32>
    %110 = vector.shape_cast %109 : vector<2x1x8x4xf32> to vector<2x8x4xf32>
    %111 = arith.addf %108, %110 : vector<2x8x4xf32>
    %cst_46 = arith.constant -3.276700e+04 : f32
    %112 = vector.shape_cast %48 : vector<2x8x1xi1> to vector<2x8x1xi1>
    %113 = vector.broadcast %112 : vector<2x8x1xi1> to vector<2x8x4xi1>
    %114 = vector.broadcast %cst_46 : f32 to vector<2x8x4xf32>
    %115 = arith.select %113, %114, %111 : vector<2x8x4xi1>, vector<2x8x4xf32>
    %cst_47 = arith.constant dense<0xFF800000> : vector<2x8xf32>
    %116 = vector.multi_reduction <maximumf>, %115, %cst_47 [2] : vector<2x8x4xf32> to vector<2x8xf32>
    %117 = vector.shape_cast %116 : vector<2x8xf32> to vector<2x8x1xf32>
    %118 = vector.broadcast %117 : vector<2x8x1xf32> to vector<2x8x4xf32>
    %119 = arith.subf %115, %118 : vector<2x8x4xf32>
    %120 = math.exp %119 : vector<2x8x4xf32>
    %cst_48 = arith.constant dense<0.000000e+00> : vector<2x8xf32>
    %121 = vector.multi_reduction <add>, %120, %cst_48 [2] : vector<2x8x4xf32> to vector<2x8xf32>
    %122 = vector.shape_cast %121 : vector<2x8xf32> to vector<2x8x1xf32>
    %123 = tpu.reciprocal %122 {approx = true} : vector<2x8x1xf32> -> vector<2x8x1xf32>
    %124 = vector.broadcast %123 : vector<2x8x1xf32> to vector<2x8x4xf32>
    %125 = arith.mulf %120, %124 : vector<2x8x4xf32>
    %126 = arith.truncf %125 : vector<2x8x4xf32> to vector<2x8x4xbf16>
    "tpu.trace_start"() <{level = 10 : i32, message = "blp,bpd->bld"}> : () -> ()
    %cst_49 = arith.constant dense<0.000000e+00> : vector<2x8x8xf32>
    %127 = tpu.matmul %126, %107, %cst_49 {dimension_numbers = #tpu.dot_dimension_numbers<[2], [1], [1], [2], [0, 0, 0, 1, 1, 2], [0], [0]>} : vector<2x8x4xbf16>, vector<2x4x8xbf16>, vector<2x8x8xf32> -> vector<2x8x8xf32>
    "tpu.trace_stop"() : () -> ()
    %128 = vector.extract_strided_slice %45 {offsets = [0, 0, 24], sizes = [2, 8, 8], strides = [1, 1, 1]} : vector<2x8x32xf32> to vector<2x8x8xf32>
    %129 = arith.truncf %128 : vector<2x8x8xf32> to vector<2x8x8xbf16>
    %130 = vector.extract_strided_slice %41 {offsets = [0, 0, 24], sizes = [2, 4, 8], strides = [1, 1, 1]} : vector<2x4x32xf32> to vector<2x4x8xf32>
    %131 = arith.truncf %130 : vector<2x4x8xf32> to vector<2x4x8xbf16>
    %132 = vector.extract_strided_slice %44 {offsets = [0, 0, 24], sizes = [2, 4, 8], strides = [1, 1, 1]} : vector<2x4x32xf32> to vector<2x4x8xf32>
    %133 = arith.truncf %132 : vector<2x4x8xf32> to vector<2x4x8xbf16>
    "tpu.trace_start"() <{level = 10 : i32, message = "bld,bpd->blp"}> : () -> ()
    %cst_50 = arith.constant dense<0.000000e+00> : vector<2x8x4xf32>
    %134 = tpu.matmul %129, %131, %cst_50 {dimension_numbers = #tpu.dot_dimension_numbers<[2], [2], [1], [1], [0, 0, 0, 1, 1, 1], [0], [0]>} : vector<2x8x8xbf16>, vector<2x4x8xbf16>, vector<2x8x4xf32> -> vector<2x8x4xf32>
    "tpu.trace_stop"() : () -> ()
    %135 = vector.extract_strided_slice %49 {offsets = [0, 3, 0, 0], sizes = [2, 1, 8, 4], strides = [1, 1, 1, 1]} : vector<2x4x8x4xf32> to vector<2x1x8x4xf32>
    %136 = vector.shape_cast %135 : vector<2x1x8x4xf32> to vector<2x8x4xf32>
    %137 = arith.addf %134, %136 : vector<2x8x4xf32>
    %cst_51 = arith.constant -3.276700e+04 : f32
    %138 = vector.shape_cast %48 : vector<2x8x1xi1> to vector<2x8x1xi1>
    %139 = vector.broadcast %138 : vector<2x8x1xi1> to vector<2x8x4xi1>
    %140 = vector.broadcast %cst_51 : f32 to vector<2x8x4xf32>
    %141 = arith.select %139, %140, %137 : vector<2x8x4xi1>, vector<2x8x4xf32>
    %cst_52 = arith.constant dense<0xFF800000> : vector<2x8xf32>
    %142 = vector.multi_reduction <maximumf>, %141, %cst_52 [2] : vector<2x8x4xf32> to vector<2x8xf32>
    %143 = vector.shape_cast %142 : vector<2x8xf32> to vector<2x8x1xf32>
    %144 = vector.broadcast %143 : vector<2x8x1xf32> to vector<2x8x4xf32>
    %145 = arith.subf %141, %144 : vector<2x8x4xf32>
    %146 = math.exp %145 : vector<2x8x4xf32>
    %cst_53 = arith.constant dense<0.000000e+00> : vector<2x8xf32>
    %147 = vector.multi_reduction <add>, %146, %cst_53 [2] : vector<2x8x4xf32> to vector<2x8xf32>
    %148 = vector.shape_cast %147 : vector<2x8xf32> to vector<2x8x1xf32>
    %149 = tpu.reciprocal %148 {approx = true} : vector<2x8x1xf32> -> vector<2x8x1xf32>
    %150 = vector.broadcast %149 : vector<2x8x1xf32> to vector<2x8x4xf32>
    %151 = arith.mulf %146, %150 : vector<2x8x4xf32>
    %152 = arith.truncf %151 : vector<2x8x4xf32> to vector<2x8x4xbf16>
    "tpu.trace_start"() <{level = 10 : i32, message = "blp,bpd->bld"}> : () -> ()
    %cst_54 = arith.constant dense<0.000000e+00> : vector<2x8x8xf32>
    %153 = tpu.matmul %152, %133, %cst_54 {dimension_numbers = #tpu.dot_dimension_numbers<[2], [1], [1], [2], [0, 0, 0, 1, 1, 2], [0], [0]>} : vector<2x8x4xbf16>, vector<2x4x8xbf16>, vector<2x8x8xf32> -> vector<2x8x8xf32>
    "tpu.trace_stop"() : () -> ()
    %154 = vector.shape_cast %63 : vector<2x8x4xf32> to vector<2x1x8x4xf32>
    %155 = vector.shape_cast %89 : vector<2x8x4xf32> to vector<2x1x8x4xf32>
    %156 = vector.shape_cast %115 : vector<2x8x4xf32> to vector<2x1x8x4xf32>
    %157 = vector.shape_cast %141 : vector<2x8x4xf32> to vector<2x1x8x4xf32>
    %158 = tpu.concatenate %154, %155, %156, %157 in 1 : vector<2x1x8x4xf32>, vector<2x1x8x4xf32>, vector<2x1x8x4xf32>, vector<2x1x8x4xf32> -> vector<2x4x8x4xf32>
    %c0_55 = arith.constant 0 : index
    %c0_56 = arith.constant 0 : index
    %c0_57 = arith.constant 0 : index
    %c0_58 = arith.constant 0 : index
    %159 = vector.load %arg19[%c0_55, %c0_56, %c0_57, %c0_58] : memref<2x4x8x4xf32, #tpu.memory_space<vmem>>, vector<2x4x8x4xf32>
    tpu.vector_store %arg19[%c0_55, %c0_56, %c0_57, %c0_58], %158 {strides = array<i32>} : memref<2x4x8x4xf32, #tpu.memory_space<vmem>>, vector<2x4x8x4xf32>,
    %160 = tpu.concatenate %75, %101, %127, %153 in 2 : vector<2x8x8xf32>, vector<2x8x8xf32>, vector<2x8x8xf32>, vector<2x8x8xf32> -> vector<2x8x32xf32>
    %161 = vector.shape_cast %160 : vector<2x8x32xf32> to vector<16x32xf32>
    %162 = arith.truncf %161 : vector<16x32xf32> to vector<16x32xbf16>
    %c0_59 = arith.constant 0 : index
    %c0_60 = arith.constant 0 : index
    %c0_61 = arith.constant 0 : index
    %163 = vector.load %arg8[%c0_59, %c0_60, %c0_61] : memref<1x32x32xbf16, #tpu.memory_space<vmem>>, vector<1x32x32xbf16>
    %164 = vector.shape_cast %163 : vector<1x32x32xbf16> to vector<32x32xbf16>
    %cst_62 = arith.constant dense<0.000000e+00> : vector<16x32xf32>
    %165 = tpu.matmul %162, %164, %cst_62 {dimension_numbers = #tpu.dot_dimension_numbers<[1], [0], [0], [1], [0, 0, 1, 1], [], []>} : vector<16x32xbf16>, vector<32x32xbf16>, vector<16x32xf32> -> vector<16x32xf32>
    %c0_63 = arith.constant 0 : index
    %c0_64 = arith.constant 0 : index
    %c0_65 = arith.constant 0 : index
    %166 = vector.load %arg9[%c0_63, %c0_64, %c0_65] : memref<1x1x32xf32, #tpu.memory_space<vmem>>, vector<1x1x32xf32>
    %167 = vector.shape_cast %166 : vector<1x1x32xf32> to vector<1x32xf32>
    %168 = vector.broadcast %167 : vector<1x32xf32> to vector<16x32xf32>
    %169 = arith.addf %165, %168 : vector<16x32xf32>
    %170 = arith.addf %3, %169 : vector<16x32xf32>
    %c0_66 = arith.constant 0 : index
    %c0_67 = arith.constant 0 : index
    %c0_68 = arith.constant 0 : index
    %171 = vector.load %arg10[%c0_66, %c0_67, %c0_68] : memref<1x1x32xf32, #tpu.memory_space<vmem>>, vector<1x1x32xf32>
    %172 = vector.shape_cast %171 : vector<1x1x32xf32> to vector<1x32xf32>
    %c0_69 = arith.constant 0 : index
    %c0_70 = arith.constant 0 : index
    %c0_71 = arith.constant 0 : index
    %173 = vector.load %arg11[%c0_69, %c0_70, %c0_71] : memref<1x1x32xf32, #tpu.memory_space<vmem>>, vector<1x1x32xf32>
    %174 = vector.shape_cast %173 : vector<1x1x32xf32> to vector<1x32xf32>
    %cst_72 = arith.constant dense<0.000000e+00> : vector<16xf32>
    %175 = vector.multi_reduction <add>, %170, %cst_72 [1] : vector<16x32xf32> to vector<16xf32>
    %176 = vector.shape_cast %175 : vector<16xf32> to vector<16x1xf32>
    %cst_73 = arith.constant 3.200000e+01 : f32
    %177 = vector.broadcast %cst_73 : f32 to vector<16x1xf32>
    %178 = arith.divf %176, %177 : vector<16x1xf32>
    %179 = vector.broadcast %178 : vector<16x1xf32> to vector<16x32xf32>
    %180 = arith.subf %170, %179 : vector<16x32xf32>
    %181 = arith.mulf %180, %180 : vector<16x32xf32>
    %cst_74 = arith.constant dense<0.000000e+00> : vector<16xf32>
    %182 = vector.multi_reduction <add>, %181, %cst_74 [1] : vector<16x32xf32> to vector<16xf32>
    %183 = vector.shape_cast %182 : vector<16xf32> to vector<16x1xf32>
    %cst_75 = arith.constant 3.200000e+01 : f32
    %184 = vector.broadcast %cst_75 : f32 to vector<16x1xf32>
    %185 = arith.divf %183, %184 : vector<16x1xf32>
    %cst_76 = arith.constant 9.99999974E-6 : f32
    %186 = vector.broadcast %cst_76 : f32 to vector<16x1xf32>
    %187 = arith.addf %185, %186 : vector<16x1xf32>
    %188 = math.rsqrt %187 : vector<16x1xf32>
    %189 = vector.broadcast %188 : vector<16x1xf32> to vector<16x32xf32>
    %190 = arith.mulf %180, %189 : vector<16x32xf32>
    %191 = vector.broadcast %172 : vector<1x32xf32> to vector<16x32xf32>
    %192 = arith.mulf %190, %191 : vector<16x32xf32>
    %193 = vector.broadcast %174 : vector<1x32xf32> to vector<16x32xf32>
    %194 = arith.addf %192, %193 : vector<16x32xf32>
    %195 = arith.truncf %194 : vector<16x32xf32> to vector<16x32xbf16>
    %c0_77 = arith.constant 0 : index
    %c0_78 = arith.constant 0 : index
    %c0_79 = arith.constant 0 : index
    %196 = vector.load %arg12[%c0_77, %c0_78, %c0_79] : memref<1x32x128xbf16, #tpu.memory_space<vmem>>, vector<1x32x128xbf16>
    %197 = vector.shape_cast %196 : vector<1x32x128xbf16> to vector<32x128xbf16>
    %cst_80 = arith.constant dense<0.000000e+00> : vector<16x128xf32>
    %198 = tpu.matmul %195, %197, %cst_80 {dimension_numbers = #tpu.dot_dimension_numbers<[1], [0], [0], [1], [0, 0, 1, 1], [], []>} : vector<16x32xbf16>, vector<32x128xbf16>, vector<16x128xf32> -> vector<16x128xf32>
    %c0_81 = arith.constant 0 : index
    %c0_82 = arith.constant 0 : index
    %c0_83 = arith.constant 0 : index
    %199 = vector.load %arg13[%c0_81, %c0_82, %c0_83] : memref<1x1x128xf32, #tpu.memory_space<vmem>>, vector<1x1x128xf32>
    %200 = vector.shape_cast %199 : vector<1x1x128xf32> to vector<1x128xf32>
    %201 = vector.broadcast %200 : vector<1x128xf32> to vector<16x128xf32>
    %202 = arith.addf %198, %201 : vector<16x128xf32>
    %cst_84 = arith.constant 5.000000e-01 : f32
    %203 = vector.broadcast %cst_84 : f32 to vector<16x128xf32>
    %204 = arith.mulf %203, %202 : vector<16x128xf32>
    %cst_85 = arith.constant 4.471500e-02 : f32
    %205 = vector.broadcast %cst_85 : f32 to vector<16x128xf32>
    %206 = arith.mulf %205, %202 : vector<16x128xf32>
    %207 = arith.mulf %206, %202 : vector<16x128xf32>
    %208 = arith.mulf %207, %202 : vector<16x128xf32>
    %209 = arith.addf %202, %208 : vector<16x128xf32>
    %cst_86 = arith.constant 0.797884583 : f32
    %210 = vector.broadcast %cst_86 : f32 to vector<16x128xf32>
    %211 = arith.mulf %210, %209 : vector<16x128xf32>
    %212 = math.tanh %211 : vector<16x128xf32>
    %cst_87 = arith.constant 1.000000e+00 : f32
    %213 = vector.broadcast %cst_87 : f32 to vector<16x128xf32>
    %214 = arith.addf %213, %212 : vector<16x128xf32>
    %215 = arith.mulf %204, %214 : vector<16x128xf32>
    %216 = arith.truncf %215 : vector<16x128xf32> to vector<16x128xbf16>
    %c0_88 = arith.constant 0 : index
    %c0_89 = arith.constant 0 : index
    %c0_90 = arith.constant 0 : index
    %217 = vector.load %arg14[%c0_88, %c0_89, %c0_90] : memref<1x128x32xbf16, #tpu.memory_space<vmem>>, vector<1x128x32xbf16>
    %218 = vector.shape_cast %217 : vector<1x128x32xbf16> to vector<128x32xbf16>
    %cst_91 = arith.constant dense<0.000000e+00> : vector<16x32xf32>
    %219 = tpu.matmul %216, %218, %cst_91 {dimension_numbers = #tpu.dot_dimension_numbers<[1], [0], [0], [1], [0, 0, 1, 1], [], []>} : vector<16x128xbf16>, vector<128x32xbf16>, vector<16x32xf32> -> vector<16x32xf32>
    %c0_92 = arith.constant 0 : index
    %c0_93 = arith.constant 0 : index
    %c0_94 = arith.constant 0 : index
    %220 = vector.load %arg15[%c0_92, %c0_93, %c0_94] : memref<1x1x32xf32, #tpu.memory_space<vmem>>, vector<1x1x32xf32>
    %221 = vector.shape_cast %220 : vector<1x1x32xf32> to vector<1x32xf32>
    %222 = vector.broadcast %221 : vector<1x32xf32> to vector<16x32xf32>
    %223 = arith.addf %219, %222 : vector<16x32xf32>
    %224 = arith.addf %194, %223 : vector<16x32xf32>
    %c0_95 = arith.constant 0 : index
    %c0_96 = arith.constant 0 : index
    %c0_97 = arith.constant 0 : index
    %225 = vector.load %arg16[%c0_95, %c0_96, %c0_97] : memref<1x1x32xf32, #tpu.memory_space<vmem>>, vector<1x1x32xf32>
    %226 = vector.shape_cast %225 : vector<1x1x32xf32> to vector<1x32xf32>
    %c0_98 = arith.constant 0 : index
    %c0_99 = arith.constant 0 : index
    %c0_100 = arith.constant 0 : index
    %227 = vector.load %arg17[%c0_98, %c0_99, %c0_100] : memref<1x1x32xf32, #tpu.memory_space<vmem>>, vector<1x1x32xf32>
    %228 = vector.shape_cast %227 : vector<1x1x32xf32> to vector<1x32xf32>
    %cst_101 = arith.constant dense<0.000000e+00> : vector<16xf32>
    %229 = vector.multi_reduction <add>, %224, %cst_101 [1] : vector<16x32xf32> to vector<16xf32>
    %230 = vector.shape_cast %229 : vector<16xf32> to vector<16x1xf32>
    %cst_102 = arith.constant 3.200000e+01 : f32
    %231 = vector.broadcast %cst_102 : f32 to vector<16x1xf32>
    %232 = arith.divf %230, %231 : vector<16x1xf32>
    %233 = vector.broadcast %232 : vector<16x1xf32> to vector<16x32xf32>
    %234 = arith.subf %224, %233 : vector<16x32xf32>
    %235 = arith.mulf %234, %234 : vector<16x32xf32>
    %cst_103 = arith.constant dense<0.000000e+00> : vector<16xf32>
    %236 = vector.multi_reduction <add>, %235, %cst_103 [1] : vector<16x32xf32> to vector<16xf32>
    %237 = vector.shape_cast %236 : vector<16xf32> to vector<16x1xf32>
    %cst_104 = arith.constant 3.200000e+01 : f32
    %238 = vector.broadcast %cst_104 : f32 to vector<16x1xf32>
    %239 = arith.divf %237, %238 : vector<16x1xf32>
    %cst_105 = arith.constant 9.99999974E-6 : f32
    %240 = vector.broadcast %cst_105 : f32 to vector<16x1xf32>
    %241 = arith.addf %239, %240 : vector<16x1xf32>
    %242 = math.rsqrt %241 : vector<16x1xf32>
    %243 = vector.broadcast %242 : vector<16x1xf32> to vector<16x32xf32>
    %244 = arith.mulf %234, %243 : vector<16x32xf32>
    %245 = vector.broadcast %226 : vector<1x32xf32> to vector<16x32xf32>
    %246 = arith.mulf %244, %245 : vector<16x32xf32>
    %247 = vector.broadcast %228 : vector<1x32xf32> to vector<16x32xf32>
    %248 = arith.addf %246, %247 : vector<16x32xf32>
    %c0_106 = arith.constant 0 : index
    %c0_107 = arith.constant 0 : index
    %249 = vector.load %arg18[%c0_106, %c0_107] : memref<16x32xf32, #tpu.memory_space<vmem>>, vector<16x32xf32>
    tpu.vector_store %arg18[%c0_106, %c0_107], %248 {strides = array<i32>} : memref<16x32xf32, #tpu.memory_space<vmem>>, vector<16x32xf32>,
    return
  }
  func.func @transform_0(%arg0: i32, %arg1: i32) -> (i32, i32) {
    %c0_i32 = arith.constant 0 : i32
    %c0_i32_0 = arith.constant 0 : i32
    return %arg0, %c0_i32 : i32, i32
  }
  func.func @transform_1(%arg0: i32, %arg1: i32) -> (i32, i32, i32) {
    %c0_i32 = arith.constant 0 : i32
    %c0_i32_0 = arith.constant 0 : i32
    %c0_i32_1 = arith.constant 0 : i32
    return %arg0, %c0_i32, %c0_i32_0 : i32, i32, i32
  }
  func.func @transform_2(%arg0: i32, %arg1: i32) -> (i32, i32, i32) {
    %c0_i32 = arith.constant 0 : i32
    %c0_i32_0 = arith.constant 0 : i32
    %c0_i32_1 = arith.constant 0 : i32
    return %arg1, %c0_i32, %c0_i32_0 : i32, i32, i32
  }
  func.func @transform_3(%arg0: i32, %arg1: i32) -> (i32, i32, i32) {
    %c0_i32 = arith.constant 0 : i32
    %c0_i32_0 = arith.constant 0 : i32
    %c0_i32_1 = arith.constant 0 : i32
    return %arg1, %c0_i32, %c0_i32_0 : i32, i32, i32
  }
  func.func @transform_4(%arg0: i32, %arg1: i32) -> (i32, i32, i32, i32) {
    %c0_i32 = arith.constant 0 : i32
    %c0_i32_0 = arith.constant 0 : i32
    %c0_i32_1 = arith.constant 0 : i32
    %c0_i32_2 = arith.constant 0 : i32
    return %arg1, %c0_i32, %c0_i32_0, %c0_i32_1 : i32, i32, i32, i32
  }
  func.func @transform_5(%arg0: i32, %arg1: i32) -> (i32, i32, i32, i32) {
    %c0_i32 = arith.constant 0 : i32
    %c0_i32_0 = arith.constant 0 : i32
    %c0_i32_1 = arith.constant 0 : i32
    %c0_i32_2 = arith.constant 0 : i32
    return %arg1, %c0_i32, %c0_i32_0, %c0_i32_1 : i32, i32, i32, i32
  }
  func.func @transform_6(%arg0: i32, %arg1: i32) -> (i32, i32, i32) {
    %c0_i32 = arith.constant 0 : i32
    %c0_i32_0 = arith.constant 0 : i32
    %c0_i32_1 = arith.constant 0 : i32
    return %arg1, %c0_i32, %c0_i32_0 : i32, i32, i32
  }
  func.func @transform_7(%arg0: i32, %arg1: i32) -> (i32, i32, i32) {
    %c0_i32 = arith.constant 0 : i32
    %c0_i32_0 = arith.constant 0 : i32
    %c0_i32_1 = arith.constant 0 : i32
    return %arg1, %c0_i32, %c0_i32_0 : i32, i32, i32
  }
  func.func @transform_8(%arg0: i32, %arg1: i32) -> (i32, i32, i32) {
    %c0_i32 = arith.constant 0 : i32
    %c0_i32_0 = arith.constant 0 : i32
    %c0_i32_1 = arith.constant 0 : i32
    return %arg1, %c0_i32, %c0_i32_0 : i32, i32, i32
  }
  func.func @transform_9(%arg0: i32, %arg1: i32) -> (i32, i32, i32) {
    %c0_i32 = arith.constant 0 : i32
    %c0_i32_0 = arith.constant 0 : i32
    %c0_i32_1 = arith.constant 0 : i32
    return %arg1, %c0_i32, %c0_i32_0 : i32, i32, i32
  }
  func.func @transform_10(%arg0: i32, %arg1: i32) -> (i32, i32, i32) {
    %c0_i32 = arith.constant 0 : i32
    %c0_i32_0 = arith.constant 0 : i32
    %c0_i32_1 = arith.constant 0 : i32
    return %arg1, %c0_i32, %c0_i32_0 : i32, i32, i32
  }
  func.func @transform_11(%arg0: i32, %arg1: i32) -> (i32, i32, i32) {
    %c0_i32 = arith.constant 0 : i32
    %c0_i32_0 = arith.constant 0 : i32
    %c0_i32_1 = arith.constant 0 : i32
    return %arg1, %c0_i32, %c0_i32_0 : i32, i32, i32
  }
  func.func @transform_12(%arg0: i32, %arg1: i32) -> (i32, i32, i32) {
    %c0_i32 = arith.constant 0 : i32
    %c0_i32_0 = arith.constant 0 : i32
    %c0_i32_1 = arith.constant 0 : i32
    return %arg1, %c0_i32, %c0_i32_0 : i32, i32, i32
  }
  func.func @transform_13(%arg0: i32, %arg1: i32) -> (i32, i32, i32) {
    %c0_i32 = arith.constant 0 : i32
    %c0_i32_0 = arith.constant 0 : i32
    %c0_i32_1 = arith.constant 0 : i32
    return %arg1, %c0_i32, %c0_i32_0 : i32, i32, i32
  }
  func.func @transform_14(%arg0: i32, %arg1: i32) -> (i32, i32, i32) {
    %c0_i32 = arith.constant 0 : i32
    %c0_i32_0 = arith.constant 0 : i32
    %c0_i32_1 = arith.constant 0 : i32
    return %arg1, %c0_i32, %c0_i32_0 : i32, i32, i32
  }
  func.func @transform_15(%arg0: i32, %arg1: i32) -> (i32, i32, i32) {
    %c0_i32 = arith.constant 0 : i32
    %c0_i32_0 = arith.constant 0 : i32
    %c0_i32_1 = arith.constant 0 : i32
    return %arg1, %c0_i32, %c0_i32_0 : i32, i32, i32
  }
  func.func @transform_16(%arg0: i32, %arg1: i32) -> (i32, i32) {
    %c0_i32 = arith.constant 0 : i32
    %c0_i32_0 = arith.constant 0 : i32
    return %arg0, %c0_i32 : i32, i32
  }
  func.func @transform_17(%arg0: i32, %arg1: i32) -> (i32, i32, i32, i32) {
    %c0_i32 = arith.constant 0 : i32
    %c0_i32_0 = arith.constant 0 : i32
    %c0_i32_1 = arith.constant 0 : i32
    %c0_i32_2 = arith.constant 0 : i32
    return %arg0, %c0_i32, %c0_i32_0, %c0_i32_1 : i32, i32, i32, i32
  }
}

</mosaic_0001>

<llo_original>
// kernel: tpu_custom_call.1
$region0: #{tpu_custom_call.1}
  #allocation0 [shape = 'u32[]', space=smem, size = 0x4, offset = 0x4, fixed_abs, tag = 'smem constant byte address 0x4 - core index']
  #allocation1 [shape = 'u32[144,128]{1,0:T(1,128)}', space=vmem, size = 0x12000, scoped, tag = 'internal scratch']
  %s0 = inlined_call_operand.vmem [shape: f32[16,32], index: 0, kind: input, shape index: {}]
  %s1 = inlined_call_operand.vmem [shape: f32[2,8,1], index: 1, kind: input, shape index: {}]
  %s2 = inlined_call_operand.vmem [shape: bf16[2,32,96], index: 2, kind: input, shape index: {}]
  %s3 = inlined_call_operand.vmem [shape: f32[2,1,96], index: 3, kind: input, shape index: {}]
  %s4 = inlined_call_operand.vmem [shape: bf16[2,2,4,8], index: 4, kind: input, shape index: {}]
  %s5 = inlined_call_operand.vmem [shape: f32[2,2,4,32], index: 5, kind: input, shape index: {}]
  %s6 = inlined_call_operand.vmem [shape: bf16[2,32,32], index: 6, kind: input, shape index: {}]
  %s7 = inlined_call_operand.vmem [shape: f32[2,1,32], index: 7, kind: input, shape index: {}]
  %s8 = inlined_call_operand.vmem [shape: f32[2,1,32], index: 8, kind: input, shape index: {}]
  %s9 = inlined_call_operand.vmem [shape: f32[2,1,32], index: 9, kind: input, shape index: {}]
  %s10 = inlined_call_operand.vmem [shape: bf16[2,32,128], index: 10, kind: input, shape index: {}]
  %s11 = inlined_call_operand.vmem [shape: f32[2,1,128], index: 11, kind: input, shape index: {}]
  %s12 = inlined_call_operand.vmem [shape: bf16[2,128,32], index: 12, kind: input, shape index: {}]
  %s13 = inlined_call_operand.vmem [shape: f32[2,1,32], index: 13, kind: input, shape index: {}]
  %s14 = inlined_call_operand.vmem [shape: f32[2,1,32], index: 14, kind: input, shape index: {}]
  %s15 = inlined_call_operand.vmem [shape: f32[2,1,32], index: 15, kind: input, shape index: {}]
  %s16 = inlined_call_operand.hbm [shape: f32[16,32], index: 16, kind: output, shape index: {0}]
  %s17 = inlined_call_operand.vmem [shape: f32[2,4,8,4], index: 17, kind: output, shape index: {1}]
  %18 = xla_tuple %s16, %s17
  %s19 = sld [smem:[#allocation0]]
  $region109: #{tpu_custom_call.1} parent=0
    _
  %s21 = ssub.s32 1, %s19
  %s22 = scalar_select 0, %s21, %s19
  $region1: #{tpu_custom_call.1} parent=0
    #allocation2 [shape = 'u8[8192]{0}', space=vmem, size = 0x2000, scoped, tag = 'output window, operand 0, single buffered']
    #allocation3 [shape = 's32[2]{0}', space=sflag, size = 0x8, scoped, tag = 'scoped memory for tpu_custom_call.1']
    %23 = vsyncpa [#allocation3], 0
    loop: start=0, step=1, limit=4
    $region2: #{tpu_custom_call.1} parent=1 // loop_pre_header
      _
    $region3: #{tpu_custom_call.1} parent=1 // loop_header
      %s25 = sphi 0, %s29
      %p26 = scmp.ge.s32.totalorder %s25, 4
      %s32 = sphi 0, %s44
      %s33 = sphi 0, %s40
      %s34 = sphi 0, %s32
      %s35 = sphi 0, %s33
      %s36 = sphi 0, %s34
      %s37 = sphi 0, %s35
      %s47 = sphi 0, %s49
      %s50 = sphi 0, %s47
      %s51 = sphi 0, %s50
      %s67 = sphi 0, %s51
      %s73 = sphi 0, %s75
      %s76 = sphi 0, %s73
      %s77 = sphi 0, %s76
      %s93 = sphi 0, %s77
      %s99 = sphi 0, %s101
      %s102 = sphi 0, %s99
      %s103 = sphi 0, %s102
      %s119 = sphi 0, %s103
      %s125 = sphi 0, %s127
      %s128 = sphi 0, %s125
      %s129 = sphi 0, %s128
      %s145 = sphi 0, %s129
      %s151 = sphi 0, %s153
      %s154 = sphi 0, %s151
      %s155 = sphi 0, %s154
      %s171 = sphi 0, %s155
      %s177 = sphi 0, %s179
      %s180 = sphi 0, %s177
      %s181 = sphi 0, %s180
      %s197 = sphi 0, %s181
      %s203 = sphi 0, %s205
      %s206 = sphi 0, %s203
      %s207 = sphi 0, %s206
      %s223 = sphi 0, %s207
      %s229 = sphi 0, %s231
      %s232 = sphi 0, %s229
      %s233 = sphi 0, %s232
      %s249 = sphi 0, %s233
      %s255 = sphi 0, %s257
      %s258 = sphi 0, %s255
      %s259 = sphi 0, %s258
      %s275 = sphi 0, %s259
      %s281 = sphi 0, %s283
      %s284 = sphi 0, %s281
      %s285 = sphi 0, %s284
      %s301 = sphi 0, %s285
      %s307 = sphi 0, %s309
      %s310 = sphi 0, %s307
      %s311 = sphi 0, %s310
      %s327 = sphi 0, %s311
      %s333 = sphi 0, %s335
      %s336 = sphi 0, %s333
      %s337 = sphi 0, %s336
      %s353 = sphi 0, %s337
      %s359 = sphi 0, %s361
      %s362 = sphi 0, %s359
      %s363 = sphi 0, %s362
      %s379 = sphi 0, %s363
      %s385 = sphi 0, %s387
      %s388 = sphi 0, %s385
      %s389 = sphi 0, %s388
      %s405 = sphi 0, %s389
      %s411 = sphi 0, %s413
      %s414 = sphi 0, %s411
      %s415 = sphi 0, %s414
      %s431 = sphi 0, %s415
      %s437 = sphi 0, %s439
      %s440 = sphi 0, %s437
      %s441 = sphi 0, %s440
      %s457 = sphi 0, %s441
      %s463 = sphi 0, %s465
      %s466 = sphi 0, %s463
      %s467 = sphi 0, %s466
      %s483 = sphi 0, %s467
      %s489 = sphi 0, %s491
      %s492 = sphi 0, %s489
      %s493 = sphi 0, %s492
      %s509 = sphi 0, %s493
    $region4: #{tpu_custom_call.1} parent=1 // loop_header_branch
      %28 = sbr.rel (%p26) target = $region8
    $region5: #{tpu_custom_call.1} parent=1 // loop_body
      %s30 = ssub.s32 %s25, 1
      %s31 = ssub.s32 %s25, 2
      %s38 = sadd.s32 1, %s33
      %p39 = scmp.ge.s32.totalorder %s38, 2
      %s40 = scalar_select %p39, 0, %s38
      %s41 = sadd.s32 1, %s32
      %s42 = scalar_select %p39, %s41, %s32
      %p43 = scmp.ge.s32.totalorder %s42, 1
      %s44 = scalar_select %p43, 0, %s42
      %s45 = ssub.s32 %s32, %s44
      %p46 = scmp.eq.s32.totalorder %s45, 0
      %s48 = sadd.s32 %s47, 1
      %s49 = scalar_select %p46, %s47, %s48
      %p52 = pneg %p46
      %p53 = scmp.eq.s32.totalorder %s25, 1
      %p54 = por %p52, %p53
      %p55 = scmp.ne.s32.totalorder %s47, %s50
      %p56 = scmp.eq.s32.totalorder %s25, 0
      %p57 = por %p55, %p56
      %p58 = scmp.ne.s32.totalorder %s47, %s50
      %p59 = scmp.eq.s32.totalorder %s30, 1
      %p60 = por %p58, %p59
      %p61 = scmp.ne.s32.totalorder %s50, %s51
      %p62 = scmp.eq.s32.totalorder %s30, 0
      %p63 = por %p61, %p62
      %p64 = scmp.ne.s32.totalorder %s50, %s51
      %p65 = scmp.eq.s32.totalorder %s31, 1
      %p66 = por %p64, %p65
      %p68 = scmp.ne.s32.totalorder %s51, %s67
      %p69 = scmp.eq.s32.totalorder %s31, 0
      %p70 = por %p68, %p69
      %s71 = ssub.s32 %s32, %s44
      %p72 = scmp.eq.s32.totalorder %s71, 0
      %s74 = sadd.s32 %s73, 1
      %s75 = scalar_select %p72, %s73, %s74
      %p78 = pneg %p72
      %p79 = scmp.eq.s32.totalorder %s25, 1
      %p80 = por %p78, %p79
      %p81 = scmp.ne.s32.totalorder %s73, %s76
      %p82 = scmp.eq.s32.totalorder %s25, 0
      %p83 = por %p81, %p82
      %p84 = scmp.ne.s32.totalorder %s73, %s76
      %p85 = scmp.eq.s32.totalorder %s30, 1
      %p86 = por %p84, %p85
      %p87 = scmp.ne.s32.totalorder %s76, %s77
      %p88 = scmp.eq.s32.totalorder %s30, 0
      %p89 = por %p87, %p88
      %p90 = scmp.ne.s32.totalorder %s76, %s77
      %p91 = scmp.eq.s32.totalorder %s31, 1
      %p92 = por %p90, %p91
      %p94 = scmp.ne.s32.totalorder %s77, %s93
      %p95 = scmp.eq.s32.totalorder %s31, 0
      %p96 = por %p94, %p95
      %s97 = ssub.s32 %s33, %s40
      %p98 = scmp.eq.s32.totalorder %s97, 0
      %s100 = sadd.s32 %s99, 1
      %s101 = scalar_select %p98, %s99, %s100
      %p104 = pneg %p98
      %p105 = scmp.eq.s32.totalorder %s25, 1
      %p106 = por %p104, %p105
      %p107 = scmp.ne.s32.totalorder %s99, %s102
      %p108 = scmp.eq.s32.totalorder %s25, 0
      %p109 = por %p107, %p108
      %p110 = scmp.ne.s32.totalorder %s99, %s102
      %p111 = scmp.eq.s32.totalorder %s30, 1
      %p112 = por %p110, %p111
      %p113 = scmp.ne.s32.totalorder %s102, %s103
      %p114 = scmp.eq.s32.totalorder %s30, 0
      %p115 = por %p113, %p114
      %p116 = scmp.ne.s32.totalorder %s102, %s103
      %p117 = scmp.eq.s32.totalorder %s31, 1
      %p118 = por %p116, %p117
      %p120 = scmp.ne.s32.totalorder %s103, %s119
      %p121 = scmp.eq.s32.totalorder %s31, 0
      %p122 = por %p120, %p121
      %s123 = ssub.s32 %s33, %s40
      %p124 = scmp.eq.s32.totalorder %s123, 0
      %s126 = sadd.s32 %s125, 1
      %s127 = scalar_select %p124, %s125, %s126
      %p130 = pneg %p124
      %p131 = scmp.eq.s32.totalorder %s25, 1
      %p132 = por %p130, %p131
      %p133 = scmp.ne.s32.totalorder %s125, %s128
      %p134 = scmp.eq.s32.totalorder %s25, 0
      %p135 = por %p133, %p134
      %p136 = scmp.ne.s32.totalorder %s125, %s128
      %p137 = scmp.eq.s32.totalorder %s30, 1
      %p138 = por %p136, %p137
      %p139 = scmp.ne.s32.totalorder %s128, %s129
      %p140 = scmp.eq.s32.totalorder %s30, 0
      %p141 = por %p139, %p140
      %p142 = scmp.ne.s32.totalorder %s128, %s129
      %p143 = scmp.eq.s32.totalorder %s31, 1
      %p144 = por %p142, %p143
      %p146 = scmp.ne.s32.totalorder %s129, %s145
      %p147 = scmp.eq.s32.totalorder %s31, 0
      %p148 = por %p146, %p147
      %s149 = ssub.s32 %s33, %s40
      %p150 = scmp.eq.s32.totalorder %s149, 0
      %s152 = sadd.s32 %s151, 1
      %s153 = scalar_select %p150, %s151, %s152
      %p156 = pneg %p150
      %p157 = scmp.eq.s32.totalorder %s25, 1
      %p158 = por %p156, %p157
      %p159 = scmp.ne.s32.totalorder %s151, %s154
      %p160 = scmp.eq.s32.totalorder %s25, 0
      %p161 = por %p159, %p160
      %p162 = scmp.ne.s32.totalorder %s151, %s154
      %p163 = scmp.eq.s32.totalorder %s30, 1
      %p164 = por %p162, %p163
      %p165 = scmp.ne.s32.totalorder %s154, %s155
      %p166 = scmp.eq.s32.totalorder %s30, 0
      %p167 = por %p165, %p166
      %p168 = scmp.ne.s32.totalorder %s154, %s155
      %p169 = scmp.eq.s32.totalorder %s31, 1
      %p170 = por %p168, %p169
      %p172 = scmp.ne.s32.totalorder %s155, %s171
      %p173 = scmp.eq.s32.totalorder %s31, 0
      %p174 = por %p172, %p173
      %s175 = ssub.s32 %s33, %s40
      %p176 = scmp.eq.s32.totalorder %s175, 0
      %s178 = sadd.s32 %s177, 1
      %s179 = scalar_select %p176, %s177, %s178
      %p182 = pneg %p176
      %p183 = scmp.eq.s32.totalorder %s25, 1
      %p184 = por %p182, %p183
      %p185 = scmp.ne.s32.totalorder %s177, %s180
      %p186 = scmp.eq.s32.totalorder %s25, 0
      %p187 = por %p185, %p186
      %p188 = scmp.ne.s32.totalorder %s177, %s180
      %p189 = scmp.eq.s32.totalorder %s30, 1
      %p190 = por %p188, %p189
      %p191 = scmp.ne.s32.totalorder %s180, %s181
      %p192 = scmp.eq.s32.totalorder %s30, 0
      %p193 = por %p191, %p192
      %p194 = scmp.ne.s32.totalorder %s180, %s181
      %p195 = scmp.eq.s32.totalorder %s31, 1
      %p196 = por %p194, %p195
      %p198 = scmp.ne.s32.totalorder %s181, %s197
      %p199 = scmp.eq.s32.totalorder %s31, 0
      %p200 = por %p198, %p199
      %s201 = ssub.s32 %s33, %s40
      %p202 = scmp.eq.s32.totalorder %s201, 0
      %s204 = sadd.s32 %s203, 1
      %s205 = scalar_select %p202, %s203, %s204
      %p208 = pneg %p202
      %p209 = scmp.eq.s32.totalorder %s25, 1
      %p210 = por %p208, %p209
      %p211 = scmp.ne.s32.totalorder %s203, %s206
      %p212 = scmp.eq.s32.totalorder %s25, 0
      %p213 = por %p211, %p212
      %p214 = scmp.ne.s32.totalorder %s203, %s206
      %p215 = scmp.eq.s32.totalorder %s30, 1
      %p216 = por %p214, %p215
      %p217 = scmp.ne.s32.totalorder %s206, %s207
      %p218 = scmp.eq.s32.totalorder %s30, 0
      %p219 = por %p217, %p218
      %p220 = scmp.ne.s32.totalorder %s206, %s207
      %p221 = scmp.eq.s32.totalorder %s31, 1
      %p222 = por %p220, %p221
      %p224 = scmp.ne.s32.totalorder %s207, %s223
      %p225 = scmp.eq.s32.totalorder %s31, 0
      %p226 = por %p224, %p225
      %s227 = ssub.s32 %s33, %s40
      %p228 = scmp.eq.s32.totalorder %s227, 0
      %s230 = sadd.s32 %s229, 1
      %s231 = scalar_select %p228, %s229, %s230
      %p234 = pneg %p228
      %p235 = scmp.eq.s32.totalorder %s25, 1
      %p236 = por %p234, %p235
      %p237 = scmp.ne.s32.totalorder %s229, %s232
      %p238 = scmp.eq.s32.totalorder %s25, 0
      %p239 = por %p237, %p238
      %p240 = scmp.ne.s32.totalorder %s229, %s232
      %p241 = scmp.eq.s32.totalorder %s30, 1
      %p242 = por %p240, %p241
      %p243 = scmp.ne.s32.totalorder %s232, %s233
      %p244 = scmp.eq.s32.totalorder %s30, 0
      %p245 = por %p243, %p244
      %p246 = scmp.ne.s32.totalorder %s232, %s233
      %p247 = scmp.eq.s32.totalorder %s31, 1
      %p248 = por %p246, %p247
      %p250 = scmp.ne.s32.totalorder %s233, %s249
      %p251 = scmp.eq.s32.totalorder %s31, 0
      %p252 = por %p250, %p251
      %s253 = ssub.s32 %s33, %s40
      %p254 = scmp.eq.s32.totalorder %s253, 0
      %s256 = sadd.s32 %s255, 1
      %s257 = scalar_select %p254, %s255, %s256
      %p260 = pneg %p254
      %p261 = scmp.eq.s32.totalorder %s25, 1
      %p262 = por %p260, %p261
      %p263 = scmp.ne.s32.totalorder %s255, %s258
      %p264 = scmp.eq.s32.totalorder %s25, 0
      %p265 = por %p263, %p264
      %p266 = scmp.ne.s32.totalorder %s255, %s258
      %p267 = scmp.eq.s32.totalorder %s30, 1
      %p268 = por %p266, %p267
      %p269 = scmp.ne.s32.totalorder %s258, %s259
      %p270 = scmp.eq.s32.totalorder %s30, 0
      %p271 = por %p269, %p270
      %p272 = scmp.ne.s32.totalorder %s258, %s259
      %p273 = scmp.eq.s32.totalorder %s31, 1
      %p274 = por %p272, %p273
      %p276 = scmp.ne.s32.totalorder %s259, %s275
      %p277 = scmp.eq.s32.totalorder %s31, 0
      %p278 = por %p276, %p277
      %s279 = ssub.s32 %s33, %s40
      %p280 = scmp.eq.s32.totalorder %s279, 0
      %s282 = sadd.s32 %s281, 1
      %s283 = scalar_select %p280, %s281, %s282
      %p286 = pneg %p280
      %p287 = scmp.eq.s32.totalorder %s25, 1
      %p288 = por %p286, %p287
      %p289 = scmp.ne.s32.totalorder %s281, %s284
      %p290 = scmp.eq.s32.totalorder %s25, 0
      %p291 = por %p289, %p290
      %p292 = scmp.ne.s32.totalorder %s281, %s284
      %p293 = scmp.eq.s32.totalorder %s30, 1
      %p294 = por %p292, %p293
      %p295 = scmp.ne.s32.totalorder %s284, %s285
      %p296 = scmp.eq.s32.totalorder %s30, 0
      %p297 = por %p295, %p296
      %p298 = scmp.ne.s32.totalorder %s284, %s285
      %p299 = scmp.eq.s32.totalorder %s31, 1
      %p300 = por %p298, %p299
      %p302 = scmp.ne.s32.totalorder %s285, %s301
      %p303 = scmp.eq.s32.totalorder %s31, 0
      %p304 = por %p302, %p303
      %s305 = ssub.s32 %s33, %s40
      %p306 = scmp.eq.s32.totalorder %s305, 0
      %s308 = sadd.s32 %s307, 1
      %s309 = scalar_select %p306, %s307, %s308
      %p312 = pneg %p306
      %p313 = scmp.eq.s32.totalorder %s25, 1
      %p314 = por %p312, %p313
      %p315 = scmp.ne.s32.totalorder %s307, %s310
      %p316 = scmp.eq.s32.totalorder %s25, 0
      %p317 = por %p315, %p316
      %p318 = scmp.ne.s32.totalorder %s307, %s310
      %p319 = scmp.eq.s32.totalorder %s30, 1
      %p320 = por %p318, %p319
      %p321 = scmp.ne.s32.totalorder %s310, %s311
      %p322 = scmp.eq.s32.totalorder %s30, 0
      %p323 = por %p321, %p322
      %p324 = scmp.ne.s32.totalorder %s310, %s311
      %p325 = scmp.eq.s32.totalorder %s31, 1
      %p326 = por %p324, %p325
      %p328 = scmp.ne.s32.totalorder %s311, %s327
      %p329 = scmp.eq.s32.totalorder %s31, 0
      %p330 = por %p328, %p329
      %s331 = ssub.s32 %s33, %s40
      %p332 = scmp.eq.s32.totalorder %s331, 0
      %s334 = sadd.s32 %s333, 1
      %s335 = scalar_select %p332, %s333, %s334
      %p338 = pneg %p332
      %p339 = scmp.eq.s32.totalorder %s25, 1
      %p340 = por %p338, %p339
      %p341 = scmp.ne.s32.totalorder %s333, %s336
      %p342 = scmp.eq.s32.totalorder %s25, 0
      %p343 = por %p341, %p342
      %p344 = scmp.ne.s32.totalorder %s333, %s336
      %p345 = scmp.eq.s32.totalorder %s30, 1
      %p346 = por %p344, %p345
      %p347 = scmp.ne.s32.totalorder %s336, %s337
      %p348 = scmp.eq.s32.totalorder %s30, 0
      %p349 = por %p347, %p348
      %p350 = scmp.ne.s32.totalorder %s336, %s337
      %p351 = scmp.eq.s32.totalorder %s31, 1
      %p352 = por %p350, %p351
      %p354 = scmp.ne.s32.totalorder %s337, %s353
      %p355 = scmp.eq.s32.totalorder %s31, 0
      %p356 = por %p354, %p355
      %s357 = ssub.s32 %s33, %s40
      %p358 = scmp.eq.s32.totalorder %s357, 0
      %s360 = sadd.s32 %s359, 1
      %s361 = scalar_select %p358, %s359, %s360
      %p364 = pneg %p358
      %p365 = scmp.eq.s32.totalorder %s25, 1
      %p366 = por %p364, %p365
      %p367 = scmp.ne.s32.totalorder %s359, %s362
      %p368 = scmp.eq.s32.totalorder %s25, 0
      %p369 = por %p367, %p368
      %p370 = scmp.ne.s32.totalorder %s359, %s362
      %p371 = scmp.eq.s32.totalorder %s30, 1
      %p372 = por %p370, %p371
      %p373 = scmp.ne.s32.totalorder %s362, %s363
      %p374 = scmp.eq.s32.totalorder %s30, 0
      %p375 = por %p373, %p374
      %p376 = scmp.ne.s32.totalorder %s362, %s363
      %p377 = scmp.eq.s32.totalorder %s31, 1
      %p378 = por %p376, %p377
      %p380 = scmp.ne.s32.totalorder %s363, %s379
      %p381 = scmp.eq.s32.totalorder %s31, 0
      %p382 = por %p380, %p381
      %s383 = ssub.s32 %s33, %s40
      %p384 = scmp.eq.s32.totalorder %s383, 0
      %s386 = sadd.s32 %s385, 1
      %s387 = scalar_select %p384, %s385, %s386
      %p390 = pneg %p384
      %p391 = scmp.eq.s32.totalorder %s25, 1
      %p392 = por %p390, %p391
      %p393 = scmp.ne.s32.totalorder %s385, %s388
      %p394 = scmp.eq.s32.totalorder %s25, 0
      %p395 = por %p393, %p394
      %p396 = scmp.ne.s32.totalorder %s385, %s388
      %p397 = scmp.eq.s32.totalorder %s30, 1
      %p398 = por %p396, %p397
      %p399 = scmp.ne.s32.totalorder %s388, %s389
      %p400 = scmp.eq.s32.totalorder %s30, 0
      %p401 = por %p399, %p400
      %p402 = scmp.ne.s32.totalorder %s388, %s389
      %p403 = scmp.eq.s32.totalorder %s31, 1
      %p404 = por %p402, %p403
      %p406 = scmp.ne.s32.totalorder %s389, %s405
      %p407 = scmp.eq.s32.totalorder %s31, 0
      %p408 = por %p406, %p407
      %s409 = ssub.s32 %s33, %s40
      %p410 = scmp.eq.s32.totalorder %s409, 0
      %s412 = sadd.s32 %s411, 1
      %s413 = scalar_select %p410, %s411, %s412
      %p416 = pneg %p410
      %p417 = scmp.eq.s32.totalorder %s25, 1
      %p418 = por %p416, %p417
      %p419 = scmp.ne.s32.totalorder %s411, %s414
      %p420 = scmp.eq.s32.totalorder %s25, 0
      %p421 = por %p419, %p420
      %p422 = scmp.ne.s32.totalorder %s411, %s414
      %p423 = scmp.eq.s32.totalorder %s30, 1
      %p424 = por %p422, %p423
      %p425 = scmp.ne.s32.totalorder %s414, %s415
      %p426 = scmp.eq.s32.totalorder %s30, 0
      %p427 = por %p425, %p426
      %p428 = scmp.ne.s32.totalorder %s414, %s415
      %p429 = scmp.eq.s32.totalorder %s31, 1
      %p430 = por %p428, %p429
      %p432 = scmp.ne.s32.totalorder %s415, %s431
      %p433 = scmp.eq.s32.totalorder %s31, 0
      %p434 = por %p432, %p433
      %s435 = ssub.s32 %s33, %s40
      %p436 = scmp.eq.s32.totalorder %s435, 0
      %s438 = sadd.s32 %s437, 1
      %s439 = scalar_select %p436, %s437, %s438
      %p442 = pneg %p436
      %p443 = scmp.eq.s32.totalorder %s25, 1
      %p444 = por %p442, %p443
      %p445 = scmp.ne.s32.totalorder %s437, %s440
      %p446 = scmp.eq.s32.totalorder %s25, 0
      %p447 = por %p445, %p446
      %p448 = scmp.ne.s32.totalorder %s437, %s440
      %p449 = scmp.eq.s32.totalorder %s30, 1
      %p450 = por %p448, %p449
      %p451 = scmp.ne.s32.totalorder %s440, %s441
      %p452 = scmp.eq.s32.totalorder %s30, 0
      %p453 = por %p451, %p452
      %p454 = scmp.ne.s32.totalorder %s440, %s441
      %p455 = scmp.eq.s32.totalorder %s31, 1
      %p456 = por %p454, %p455
      %p458 = scmp.ne.s32.totalorder %s441, %s457
      %p459 = scmp.eq.s32.totalorder %s31, 0
      %p460 = por %p458, %p459
      %s461 = ssub.s32 %s32, %s44
      %p462 = scmp.eq.s32.totalorder %s461, 0
      %s464 = sadd.s32 %s463, 1
      %s465 = scalar_select %p462, %s463, %s464
      %p468 = pneg %p462
      %p469 = scmp.eq.s32.totalorder %s25, 1
      %p470 = por %p468, %p469
      %p471 = scmp.ne.s32.totalorder %s463, %s466
      %p472 = scmp.eq.s32.totalorder %s25, 0
      %p473 = por %p471, %p472
      %p474 = scmp.ne.s32.totalorder %s463, %s466
      %p475 = scmp.eq.s32.totalorder %s30, 1
      %p476 = por %p474, %p475
      %p477 = scmp.ne.s32.totalorder %s466, %s467
      %p478 = scmp.eq.s32.totalorder %s30, 0
      %p479 = por %p477, %p478
      %p480 = scmp.ne.s32.totalorder %s466, %s467
      %p481 = scmp.eq.s32.totalorder %s31, 1
      %p482 = por %p480, %p481
      %p484 = scmp.ne.s32.totalorder %s467, %s483
      %p485 = scmp.eq.s32.totalorder %s31, 0
      %p486 = por %p484, %p485
      %s487 = ssub.s32 %s32, %s44
      %p488 = scmp.eq.s32.totalorder %s487, 0
      %s490 = sadd.s32 %s489, 1
      %s491 = scalar_select %p488, %s489, %s490
      %p494 = pneg %p488
      %p495 = scmp.eq.s32.totalorder %s25, 1
      %p496 = por %p494, %p495
      %p497 = scmp.ne.s32.totalorder %s489, %s492
      %p498 = scmp.eq.s32.totalorder %s25, 0
      %p499 = por %p497, %p498
      %p500 = scmp.ne.s32.totalorder %s489, %s492
      %p501 = scmp.eq.s32.totalorder %s30, 1
      %p502 = por %p500, %p501
      %p503 = scmp.ne.s32.totalorder %s492, %s493
      %p504 = scmp.eq.s32.totalorder %s30, 0
      %p505 = por %p503, %p504
      %p506 = scmp.ne.s32.totalorder %s492, %s493
      %p507 = scmp.eq.s32.totalorder %s31, 1
      %p508 = por %p506, %p507
      %p510 = scmp.ne.s32.totalorder %s493, %s509
      %p511 = scmp.eq.s32.totalorder %s31, 0
      %p512 = por %p510, %p511
      %p513 = scmp.le.s32.totalorder 1, %s25
      %p514 = scmp.lt.s32.totalorder %s25, 3
      %p515 = pnand %p513, %p514
      %p516 = pneg %p515
      // Predicated region
      $region9: #{tpu_custom_call.1} parent=5 // pred_check
        _
      $region10: #{tpu_custom_call.1} parent=5 // pred_check_branch
        %518 = sbr.rel (%p515) target = $region12
      $region11: #{tpu_custom_call.1} parent=5 // pred_region
        %s519 = ssub.s32 %s25, 1
        // Predicated region
        $region13: #{tpu_custom_call.1} parent=11 // pred_check
          %p520 = pneg %p63
        $region14: #{tpu_custom_call.1} parent=11 // pred_check_branch
          %522 = sbr.rel (%p520) target = $region16
        $region15: #{tpu_custom_call.1} parent=11 // pred_region
          %s523 = smul.u32 2, %s34
          %p524 = scmp.lt.s32.totalorder %s523, 1
          %s525 = scalar_select %p524, %s523, 1
          %s526 = smul.addr %s525, 8
          %s527 = scalar_lea.vmem %s0, %s526
          %s528 = smul.u32 2, %s34
        $region16: #{tpu_custom_call.1} parent=11 // pred_fallthru
          _
        // Predicated region
        $region17: #{tpu_custom_call.1} parent=11 // pred_check
          %p529 = pneg %p89
        $region18: #{tpu_custom_call.1} parent=11 // pred_check_branch
          %531 = sbr.rel (%p529) target = $region20
        $region19: #{tpu_custom_call.1} parent=11 // pred_region
          %s532 = smul.u32 2, %s34
          %p533 = scmp.lt.s32.totalorder %s532, 1
          %s534 = scalar_select %p533, %s532, 1
          %s535 = smul.addr %s534, 8
          %s536 = scalar_lea.vmem %s1, %s535
          %s537 = smul.u32 2, %s34
        $region20: #{tpu_custom_call.1} parent=11 // pred_fallthru
          _
      $region12: #{tpu_custom_call.1} parent=5 // pred_fallthru
        _
      %p538 = scmp.lt.s32.totalorder %s25, 2
      // Predicated region
      $region21: #{tpu_custom_call.1} parent=5 // pred_check
        %p539 = pneg %p538
      $region22: #{tpu_custom_call.1} parent=5 // pred_check_branch
        %541 = sbr.rel (%p539) target = $region24
      $region23: #{tpu_custom_call.1} parent=5 // pred_region
        // Predicated region
        $region25: #{tpu_custom_call.1} parent=23 // pred_check
          %p542 = pneg %p109
        $region26: #{tpu_custom_call.1} parent=23 // pred_check_branch
          %544 = sbr.rel (%p542) target = $region28
        $region27: #{tpu_custom_call.1} parent=23 // pred_region
          %p545 = scmp.lt.s32.totalorder %s33, 1
          %s546 = scalar_select %p545, %s33, 1
          %s547 = smul.addr %s546, 4
          %s548 = smul.addr %s547, 4
          %s549 = scalar_lea.vmem %s2, %s548
        $region28: #{tpu_custom_call.1} parent=23 // pred_fallthru
          _
        // Predicated region
        $region29: #{tpu_custom_call.1} parent=23 // pred_check
          %p550 = pneg %p135
        $region30: #{tpu_custom_call.1} parent=23 // pred_check_branch
          %552 = sbr.rel (%p550) target = $region32
        $region31: #{tpu_custom_call.1} parent=23 // pred_region
          %p553 = scmp.lt.s32.totalorder %s33, 1
          %s554 = scalar_select %p553, %s33, 1
          %s555 = scalar_lea.vmem %s3, %s554
        $region32: #{tpu_custom_call.1} parent=23 // pred_fallthru
          _
        // Predicated region
        $region33: #{tpu_custom_call.1} parent=23 // pred_check
          %p556 = pneg %p161
        $region34: #{tpu_custom_call.1} parent=23 // pred_check_branch
          %558 = sbr.rel (%p556) target = $region36
        $region35: #{tpu_custom_call.1} parent=23 // pred_region
          %p559 = scmp.lt.s32.totalorder %s33, 1
          %s560 = scalar_select %p559, %s33, 1
          %s561 = smul.addr %s560, 2
          %s562 = smul.addr %s561, 2
          %s563 = scalar_lea.vmem %s4, %s562
        $region36: #{tpu_custom_call.1} parent=23 // pred_fallthru
          _
        // Predicated region
        $region37: #{tpu_custom_call.1} parent=23 // pred_check
          %p564 = pneg %p187
        $region38: #{tpu_custom_call.1} parent=23 // pred_check_branch
          %566 = sbr.rel (%p564) target = $region40
        $region39: #{tpu_custom_call.1} parent=23 // pred_region
          %p567 = scmp.lt.s32.totalorder %s33, 1
          %s568 = scalar_select %p567, %s33, 1
          %s569 = smul.addr %s568, 2
          %s570 = smul.addr %s569, 4
          %s571 = scalar_lea.vmem %s5, %s570
        $region40: #{tpu_custom_call.1} parent=23 // pred_fallthru
          _
        // Predicated region
        $region41: #{tpu_custom_call.1} parent=23 // pred_check
          %p572 = pneg %p213
        $region42: #{tpu_custom_call.1} parent=23 // pred_check_branch
          %574 = sbr.rel (%p572) target = $region44
        $region43: #{tpu_custom_call.1} parent=23 // pred_region
          %p575 = scmp.lt.s32.totalorder %s33, 1
          %s576 = scalar_select %p575, %s33, 1
          %s577 = smul.addr %s576, 4
          %s578 = smul.addr %s577, 4
          %s579 = scalar_lea.vmem %s6, %s578
        $region44: #{tpu_custom_call.1} parent=23 // pred_fallthru
          _
        // Predicated region
        $region45: #{tpu_custom_call.1} parent=23 // pred_check
          %p580 = pneg %p239
        $region46: #{tpu_custom_call.1} parent=23 // pred_check_branch
          %582 = sbr.rel (%p580) target = $region48
        $region47: #{tpu_custom_call.1} parent=23 // pred_region
          %p583 = scmp.lt.s32.totalorder %s33, 1
          %s584 = scalar_select %p583, %s33, 1
          %s585 = scalar_lea.vmem %s7, %s584
        $region48: #{tpu_custom_call.1} parent=23 // pred_fallthru
          _
        // Predicated region
        $region49: #{tpu_custom_call.1} parent=23 // pred_check
          %p586 = pneg %p265
        $region50: #{tpu_custom_call.1} parent=23 // pred_check_branch
          %588 = sbr.rel (%p586) target = $region52
        $region51: #{tpu_custom_call.1} parent=23 // pred_region
          %p589 = scmp.lt.s32.totalorder %s33, 1
          %s590 = scalar_select %p589, %s33, 1
          %s591 = scalar_lea.vmem %s8, %s590
        $region52: #{tpu_custom_call.1} parent=23 // pred_fallthru
          _
        // Predicated region
        $region53: #{tpu_custom_call.1} parent=23 // pred_check
          %p592 = pneg %p291
        $region54: #{tpu_custom_call.1} parent=23 // pred_check_branch
          %594 = sbr.rel (%p592) target = $region56
        $region55: #{tpu_custom_call.1} parent=23 // pred_region
          %p595 = scmp.lt.s32.totalorder %s33, 1
          %s596 = scalar_select %p595, %s33, 1
          %s597 = scalar_lea.vmem %s9, %s596
        $region56: #{tpu_custom_call.1} parent=23 // pred_fallthru
          _
        // Predicated region
        $region57: #{tpu_custom_call.1} parent=23 // pred_check
          %p598 = pneg %p317
        $region58: #{tpu_custom_call.1} parent=23 // pred_check_branch
          %600 = sbr.rel (%p598) target = $region60
        $region59: #{tpu_custom_call.1} parent=23 // pred_region
          %p601 = scmp.lt.s32.totalorder %s33, 1
          %s602 = scalar_select %p601, %s33, 1
          %s603 = smul.addr %s602, 4
          %s604 = smul.addr %s603, 4
          %s605 = scalar_lea.vmem %s10, %s604
        $region60: #{tpu_custom_call.1} parent=23 // pred_fallthru
          _
        // Predicated region
        $region61: #{tpu_custom_call.1} parent=23 // pred_check
          %p606 = pneg %p343
        $region62: #{tpu_custom_call.1} parent=23 // pred_check_branch
          %608 = sbr.rel (%p606) target = $region64
        $region63: #{tpu_custom_call.1} parent=23 // pred_region
          %p609 = scmp.lt.s32.totalorder %s33, 1
          %s610 = scalar_select %p609, %s33, 1
          %s611 = scalar_lea.vmem %s11, %s610
        $region64: #{tpu_custom_call.1} parent=23 // pred_fallthru
          _
        // Predicated region
        $region65: #{tpu_custom_call.1} parent=23 // pred_check
          %p612 = pneg %p369
        $region66: #{tpu_custom_call.1} parent=23 // pred_check_branch
          %614 = sbr.rel (%p612) target = $region68
        $region67: #{tpu_custom_call.1} parent=23 // pred_region
          %p615 = scmp.lt.s32.totalorder %s33, 1
          %s616 = scalar_select %p615, %s33, 1
          %s617 = smul.addr %s616, 16
          %s618 = smul.addr %s617, 4
          %s619 = scalar_lea.vmem %s12, %s618
        $region68: #{tpu_custom_call.1} parent=23 // pred_fallthru
          _
        // Predicated region
        $region69: #{tpu_custom_call.1} parent=23 // pred_check
          %p620 = pneg %p395
        $region70: #{tpu_custom_call.1} parent=23 // pred_check_branch
          %622 = sbr.rel (%p620) target = $region72
        $region71: #{tpu_custom_call.1} parent=23 // pred_region
          %p623 = scmp.lt.s32.totalorder %s33, 1
          %s624 = scalar_select %p623, %s33, 1
          %s625 = scalar_lea.vmem %s13, %s624
        $region72: #{tpu_custom_call.1} parent=23 // pred_fallthru
          _
        // Predicated region
        $region73: #{tpu_custom_call.1} parent=23 // pred_check
          %p626 = pneg %p421
        $region74: #{tpu_custom_call.1} parent=23 // pred_check_branch
          %628 = sbr.rel (%p626) target = $region76
        $region75: #{tpu_custom_call.1} parent=23 // pred_region
          %p629 = scmp.lt.s32.totalorder %s33, 1
          %s630 = scalar_select %p629, %s33, 1
          %s631 = scalar_lea.vmem %s14, %s630
        $region76: #{tpu_custom_call.1} parent=23 // pred_fallthru
          _
        // Predicated region
        $region77: #{tpu_custom_call.1} parent=23 // pred_check
          %p632 = pneg %p447
        $region78: #{tpu_custom_call.1} parent=23 // pred_check_branch
          %634 = sbr.rel (%p632) target = $region80
        $region79: #{tpu_custom_call.1} parent=23 // pred_region
          %p635 = scmp.lt.s32.totalorder %s33, 1
          %s636 = scalar_select %p635, %s33, 1
          %s637 = scalar_lea.vmem %s15, %s636
        $region80: #{tpu_custom_call.1} parent=23 // pred_fallthru
          _
      $region24: #{tpu_custom_call.1} parent=5 // pred_fallthru
        _
      %p638 = scmp.le.s32.totalorder 1, %s25
      %p639 = scmp.lt.s32.totalorder %s25, 3
      %p640 = pnand %p638, %p639
      %p641 = pneg %p640
      // Predicated region
      $region81: #{tpu_custom_call.1} parent=5 // pred_check
        _
      $region82: #{tpu_custom_call.1} parent=5 // pred_check_branch
        %643 = sbr.rel (%p640) target = $region84
      $region83: #{tpu_custom_call.1} parent=5 // pred_region
        %s644 = ssub.s32 %s25, 1
        %s645 = smul.u32 2, %s34
        %p646 = scmp.lt.s32.totalorder %s645, 1
        %s647 = scalar_select %p646, %s645, 1
        %s648 = smul.addr %s647, 8
        %s649 = scalar_lea.vmem %s0, %s648
        %p650 = pneg %p63
        %p651 = pneg %p60
        %s652 = smul.u32 2, %s34
        %p653 = scmp.lt.s32.totalorder %s652, 1
        %s654 = scalar_select %p653, %s652, 1
        %s655 = smul.addr %s654, 8
        %s656 = scalar_lea.vmem %s1, %s655
        %p657 = pneg %p89
        %p658 = pneg %p86
        %p659 = scmp.lt.s32.totalorder %s35, 1
        %s660 = scalar_select %p659, %s35, 1
        %s661 = smul.addr %s660, 4
        %s662 = smul.addr %s661, 4
        %s663 = scalar_lea.vmem %s2, %s662
        %p664 = pneg %p115
        %p665 = pneg %p112
        %p666 = scmp.lt.s32.totalorder %s35, 1
        %s667 = scalar_select %p666, %s35, 1
        %s668 = scalar_lea.vmem %s3, %s667
        %p669 = pneg %p141
        %p670 = pneg %p138
        %p671 = scmp.lt.s32.totalorder %s35, 1
        %s672 = scalar_select %p671, %s35, 1
        %s673 = smul.addr %s672, 2
        %s674 = smul.addr %s673, 2
        %s675 = scalar_lea.vmem %s4, %s674
        %p676 = pneg %p167
        %p677 = pneg %p164
        %p678 = scmp.lt.s32.totalorder %s35, 1
        %s679 = scalar_select %p678, %s35, 1
        %s680 = smul.addr %s679, 2
        %s681 = smul.addr %s680, 4
        %s682 = scalar_lea.vmem %s5, %s681
        %p683 = pneg %p193
        %p684 = pneg %p190
        %p685 = scmp.lt.s32.totalorder %s35, 1
        %s686 = scalar_select %p685, %s35, 1
        %s687 = smul.addr %s686, 4
        %s688 = smul.addr %s687, 4
        %s689 = scalar_lea.vmem %s6, %s688
        %p690 = pneg %p219
        %p691 = pneg %p216
        %p692 = scmp.lt.s32.totalorder %s35, 1
        %s693 = scalar_select %p692, %s35, 1
        %s694 = scalar_lea.vmem %s7, %s693
        %p695 = pneg %p245
        %p696 = pneg %p242
        %p697 = scmp.lt.s32.totalorder %s35, 1
        %s698 = scalar_select %p697, %s35, 1
        %s699 = scalar_lea.vmem %s8, %s698
        %p700 = pneg %p271
        %p701 = pneg %p268
        %p702 = scmp.lt.s32.totalorder %s35, 1
        %s703 = scalar_select %p702, %s35, 1
        %s704 = scalar_lea.vmem %s9, %s703
        %p705 = pneg %p297
        %p706 = pneg %p294
        %p707 = scmp.lt.s32.totalorder %s35, 1
        %s708 = scalar_select %p707, %s35, 1
        %s709 = smul.addr %s708, 4
        %s710 = smul.addr %s709, 4
        %s711 = scalar_lea.vmem %s10, %s710
        %p712 = pneg %p323
        %p713 = pneg %p320
        %p714 = scmp.lt.s32.totalorder %s35, 1
        %s715 = scalar_select %p714, %s35, 1
        %s716 = scalar_lea.vmem %s11, %s715
        %p717 = pneg %p349
        %p718 = pneg %p346
        %p719 = scmp.lt.s32.totalorder %s35, 1
        %s720 = scalar_select %p719, %s35, 1
        %s721 = smul.addr %s720, 16
        %s722 = smul.addr %s721, 4
        %s723 = scalar_lea.vmem %s12, %s722
        %p724 = pneg %p375
        %p725 = pneg %p372
        %p726 = scmp.lt.s32.totalorder %s35, 1
        %s727 = scalar_select %p726, %s35, 1
        %s728 = scalar_lea.vmem %s13, %s727
        %p729 = pneg %p401
        %p730 = pneg %p398
        %p731 = scmp.lt.s32.totalorder %s35, 1
        %s732 = scalar_select %p731, %s35, 1
        %s733 = scalar_lea.vmem %s14, %s732
        %p734 = pneg %p427
        %p735 = pneg %p424
        %p736 = scmp.lt.s32.totalorder %s35, 1
        %s737 = scalar_select %p736, %s35, 1
        %s738 = scalar_lea.vmem %s15, %s737
        %p739 = pneg %p453
        %p740 = pneg %p450
        %p741 = pneg %p479
        %p742 = pneg %p476
        %p743 = pneg %p505
        %p744 = pneg %p502
        %s745 = smul.u32 2, %s34
        %p746 = scmp.lt.s32.totalorder %s745, 1
        %s747 = scalar_select %p746, %s745, 1
        %s748 = smul.addr %s747, 4
        %s749 = smul.addr %s748, 8
        %s750 = scalar_lea.vmem %s17, %s749
        %s751 = smul.u32 2, %s34
        %p752 = scmp.lt.s32.totalorder %s751, 1
        %s753 = scalar_select %p752, %s751, 1
        %s754 = smul.addr %s753, 8
        %s755 = scalar_lea.vmem %s0, %s754
        %s756 = smul.u32 2, %s34
        %s757 = smul.u32 2, %s34
        %p758 = scmp.lt.s32.totalorder %s757, 1
        %s759 = scalar_select %p758, %s757, 1
        %s760 = smul.addr %s759, 8
        %s761 = scalar_lea.vmem %s1, %s760
        %s762 = smul.u32 2, %s34
        %p763 = scmp.lt.s32.totalorder %s35, 1
        %s764 = scalar_select %p763, %s35, 1
        %s765 = smul.addr %s764, 4
        %s766 = smul.addr %s765, 4
        %s767 = scalar_lea.vmem %s2, %s766
        %p768 = scmp.lt.s32.totalorder %s35, 1
        %s769 = scalar_select %p768, %s35, 1
        %s770 = scalar_lea.vmem %s3, %s769
        %p771 = scmp.lt.s32.totalorder %s35, 1
        %s772 = scalar_select %p771, %s35, 1
        %s773 = smul.addr %s772, 2
        %s774 = smul.addr %s773, 2
        %s775 = scalar_lea.vmem %s4, %s774
        %p776 = scmp.lt.s32.totalorder %s35, 1
        %s777 = scalar_select %p776, %s35, 1
        %s778 = smul.addr %s777, 2
        %s779 = smul.addr %s778, 4
        %s780 = scalar_lea.vmem %s5, %s779
        %p781 = scmp.lt.s32.totalorder %s35, 1
        %s782 = scalar_select %p781, %s35, 1
        %s783 = smul.addr %s782, 4
        %s784 = smul.addr %s783, 4
        %s785 = scalar_lea.vmem %s6, %s784
        %p786 = scmp.lt.s32.totalorder %s35, 1
        %s787 = scalar_select %p786, %s35, 1
        %s788 = scalar_lea.vmem %s7, %s787
        %p789 = scmp.lt.s32.totalorder %s35, 1
        %s790 = scalar_select %p789, %s35, 1
        %s791 = scalar_lea.vmem %s8, %s790
        %p792 = scmp.lt.s32.totalorder %s35, 1
        %s793 = scalar_select %p792, %s35, 1
        %s794 = scalar_lea.vmem %s9, %s793
        %p795 = scmp.lt.s32.totalorder %s35, 1
        %s796 = scalar_select %p795, %s35, 1
        %s797 = smul.addr %s796, 4
        %s798 = smul.addr %s797, 4
        %s799 = scalar_lea.vmem %s10, %s798
        %p800 = scmp.lt.s32.totalorder %s35, 1
        %s801 = scalar_select %p800, %s35, 1
        %s802 = scalar_lea.vmem %s11, %s801
        %p803 = scmp.lt.s32.totalorder %s35, 1
        %s804 = scalar_select %p803, %s35, 1
        %s805 = smul.addr %s804, 16
        %s806 = smul.addr %s805, 4
        %s807 = scalar_lea.vmem %s12, %s806
        %p808 = scmp.lt.s32.totalorder %s35, 1
        %s809 = scalar_select %p808, %s35, 1
        %s810 = scalar_lea.vmem %s13, %s809
        %p811 = scmp.lt.s32.totalorder %s35, 1
        %s812 = scalar_select %p811, %s35, 1
        %s813 = scalar_lea.vmem %s14, %s812
        %p814 = scmp.lt.s32.totalorder %s35, 1
        %s815 = scalar_select %p814, %s35, 1
        %s816 = scalar_lea.vmem %s15, %s815
        %s817 = smul.u32 2, %s34
        %s818 = smul.u32 2, %s34
        %p819 = scmp.lt.s32.totalorder %s818, 1
        %s820 = scalar_select %p819, %s818, 1
        %s821 = smul.addr %s820, 4
        %s822 = smul.addr %s821, 8
        %s823 = scalar_lea.vmem %s17, %s822
        %s824 = smul.u32 2, %s34
        %p826 = scmp.eq.s32.totalorder %s35, 0
        // Predicated region
        $region85: #{tpu_custom_call.1} parent=83 // pred_check
          %p827 = pneg %p826
        $region86: #{tpu_custom_call.1} parent=83 // pred_check_branch
          %829 = sbr.rel (%p827) target = $region88
        $region87: #{tpu_custom_call.1} parent=83 // pred_region
          %v830 = vld [vmem:[%s755] sm:$0xff]
          %v831 = vld [vmem:[%s755 + $0x8] sm:$0xff]
          %vm832 = vcmask 261120
          %833 = vst.msk [vmem:[#allocation2] sm:$0xff] %vm832, %v830
          %834 = vst.msk [vmem:[#allocation2 + $0x8] sm:$0xff] %vm832, %v831
          %vm835 = vcmask 31744
          %836 = vst.msk [vmem:[%s823] sm:$0xff] %vm835, 0.0
          %837 = vst.msk [vmem:[%s823 + $0x8] sm:$0xff] %vm835, 0.0
          %838 = vst.msk [vmem:[%s823 + $0x10] sm:$0xff] %vm835, 0.0
          %839 = vst.msk [vmem:[%s823 + $0x18] sm:$0xff] %vm835, 0.0
          %840 = vst.msk [vmem:[%s823 + $0x20] sm:$0xff] %vm835, 0.0
          %841 = vst.msk [vmem:[%s823 + $0x28] sm:$0xff] %vm835, 0.0
          %842 = vst.msk [vmem:[%s823 + $0x30] sm:$0xff] %vm835, 0.0
          %843 = vst.msk [vmem:[%s823 + $0x38] sm:$0xff] %vm835, 0.0
        $region88: #{tpu_custom_call.1} parent=83 // pred_fallthru
          _
        %v844 = vld [vmem:[#allocation2] sm:$0xff]
        %v845 = vld [vmem:[#allocation2 + $0x8] sm:$0xff]
        %v846 = vpack.c.bf16 %v845, %v844
        %v847 = vld [vmem:[%s767] sm:$0xf]
        %v848 = vld [vmem:[%s767 + $0x4] sm:$0xf]
        %v849 = vld [vmem:[%s767 + $0x8] sm:$0xf]
        %v850 = vld [vmem:[%s767 + $0xc] sm:$0xf]
        %v851 = vld [vmem:[%s770] sm:$0x1]
        %v853 = vlaneseq
        %v854 = vshrl.u32 %v853, 7
        %v855 = vsub.s32 0, %v854
        %v856 = vrot.slane %v851, %v855
        %v862 = vunpack.c.l.b16 %v847
        %v863 = vunpack.c.l.b16 %v848
        %v864 = vunpack.c.l.b16 %v849
        %v865 = vunpack.c.l.b16 %v850
        %v866 = vpack.c.b16 %v863, %v862
        %v867 = vpack.c.b16 %v865, %v864
        %vm870 = vcmask 261120
        %v872 = vsel %vm870, %v846, 0
        %874 = vmatprep.subr.bf16.mxu0 0
        %875 = vmatpush1.bf16.msra.mxu0 %v866
        %876 = vmatprep.subr.bf16.mxu0 0
        %877 = vmatpush1.bf16.msra.mxu0 %v867
        %878 = vmatprep.subr.bf16.mxu0 0
        %879 = vmatpush1.bf16.msra.mxu0 0
        %880 = vmatprep.subr.bf16.mxu0 0
        %881 = vmatpush1.bf16.msra.mxu0 0
        %882 = vmatprep.subr.bf16.mxu0 0
        %883 = vmatpush1.bf16.msra.mxu0 0
        %884 = vmatprep.subr.bf16.mxu0 0
        %885 = vmatpush1.bf16.msra.mxu0 0
        %886 = vmatprep.subr.bf16.mxu0 0
        %887 = vmatpush1.bf16.msra.mxu0 0
        %888 = vmatprep.subr.bf16.mxu0 0
        %889 = vmatpush1.bf16.msra.mxu0 0
        %890 = vmatprep.subr.bf16.mxu0 0
        %891 = vmatpush1.bf16.msra.mxu0 0
        %892 = vmatprep.subr.bf16.mxu0 0
        %893 = vmatpush1.bf16.msra.mxu0 0
        %894 = vmatprep.subr.bf16.mxu0 0
        %895 = vmatpush1.bf16.msra.mxu0 0
        %896 = vmatprep.subr.bf16.mxu0 0
        %897 = vmatpush1.bf16.msra.mxu0 0
        %898 = vmatprep.subr.bf16.mxu0 0
        %899 = vmatpush1.bf16.msra.mxu0 0
        %900 = vmatprep.subr.bf16.mxu0 0
        %901 = vmatpush1.bf16.msra.mxu0 0
        %902 = vmatprep.subr.bf16.mxu0 0
        %903 = vmatpush1.bf16.msra.mxu0 0
        %904 = vmatprep.subr.bf16.mxu0 0
        %905 = vmatpush1.bf16.msra.mxu0 0
        %906 = vmatprep.mubr.bf16.mxu0 0
        %907 = vmatmul.mubr.bf16.gmra.mrb[0].mxu0 %v872
        %v908 = vpop.f32.mrb[0].mxu0
        %v909 = vadd.f32 %v856, %v908
        %v910 = vpop.f32.mrb[0].mxu0
        %v911 = vpop.f32.mrb[0].mxu0
        %v912 = vadd.f32 %v856, %v911
        %v913 = vpop.f32.mrb[0].mxu0
        %914 = vdwg.mxu0
        %v915 = vld [vmem:[%s775] sm:$0x3]
        %s916 = scalar_lea.vmem %s775, 2
        %v917 = vld [vmem:[%s916] sm:$0x3]
        %v918 = vld [vmem:[%s780] sm:$0xf]
        %s919 = scalar_lea.vmem %s780, 4
        %v920 = vld [vmem:[%s919] sm:$0xf]
        %v921 = vpack.c.bf16 %v909, %v909
        %923 = vrot.lane.b32.xlu0 %v921, 96
        %v924 = vpop.permute.xlu0 %923
        %vm925 = vcmask 64512
        %v927 = vsel %vm925, %v915, 0
        %vm929 = vcmask 1043456
        %v931 = vsel %vm929, %v924, 0
        %933 = vmatprep.subr.bf16.mxu0 0
        %934 = vmatpush1.bf16.msra.mxu0 %v931
        %935 = vmatprep.subr.bf16.mxu0 0
        %936 = vmatpush1.bf16.msra.mxu0 0
        %937 = vmatprep.subr.bf16.mxu0 0
        %938 = vmatpush1.bf16.msra.mxu0 0
        %939 = vmatprep.subr.bf16.mxu0 0
        %940 = vmatpush1.bf16.msra.mxu0 0
        %941 = vmatprep.subr.bf16.mxu0 0
        %942 = vmatpush1.bf16.msra.mxu0 0
        %943 = vmatprep.subr.bf16.mxu0 0
        %944 = vmatpush1.bf16.msra.mxu0 0
        %945 = vmatprep.subr.bf16.mxu0 0
        %946 = vmatpush1.bf16.msra.mxu0 0
        %947 = vmatprep.subr.bf16.mxu0 0
        %948 = vmatpush1.bf16.msra.mxu0 0
        %949 = vmatprep.subr.bf16.mxu0 0
        %950 = vmatpush1.bf16.msra.mxu0 0
        %951 = vmatprep.subr.bf16.mxu0 0
        %952 = vmatpush1.bf16.msra.mxu0 0
        %953 = vmatprep.subr.bf16.mxu0 0
        %954 = vmatpush1.bf16.msra.mxu0 0
        %955 = vmatprep.subr.bf16.mxu0 0
        %956 = vmatpush1.bf16.msra.mxu0 0
        %957 = vmatprep.subr.bf16.mxu0 0
        %958 = vmatpush1.bf16.msra.mxu0 0
        %959 = vmatprep.subr.bf16.mxu0 0
        %960 = vmatpush1.bf16.msra.mxu0 0
        %961 = vmatprep.subr.bf16.mxu0 0
        %962 = vmatpush1.bf16.msra.mxu0 0
        %963 = vmatprep.subr.bf16.mxu0 0
        %964 = vmatpush1.bf16.msra.mxu0 0
        %965 = vmatprep.mubr.bf16.mxu0 0
        %966 = vmatmul.mubr.bf16.gmra.mrb[0].mxu0 %v927
        %v967 = vpop.f32.mrb[0].mxu0
        %v968 = vadd.f32 %v918, %v967
        %v969 = vpop.f32.mrb[0].mxu0
        %v970 = vpop.f32.mrb[0].mxu0
        %v971 = vpop.f32.mrb[0].mxu0
        %972 = vdwg.mxu0
        %973 = vrot.lane.b32.xlu0 %v921, 64
        %v974 = vpop.permute.xlu0 %973
        %v976 = vsel %vm925, %v917, 0
        %v979 = vsel %vm929, %v974, 0
        %981 = vmatprep.subr.bf16.mxu0 0
        %982 = vmatpush1.bf16.msra.mxu0 %v979
        %983 = vmatprep.subr.bf16.mxu0 0
        %984 = vmatpush1.bf16.msra.mxu0 0
        %985 = vmatprep.subr.bf16.mxu0 0
        %986 = vmatpush1.bf16.msra.mxu0 0
        %987 = vmatprep.subr.bf16.mxu0 0
        %988 = vmatpush1.bf16.msra.mxu0 0
        %989 = vmatprep.subr.bf16.mxu0 0
        %990 = vmatpush1.bf16.msra.mxu0 0
        %991 = vmatprep.subr.bf16.mxu0 0
        %992 = vmatpush1.bf16.msra.mxu0 0
        %993 = vmatprep.subr.bf16.mxu0 0
        %994 = vmatpush1.bf16.msra.mxu0 0
        %995 = vmatprep.subr.bf16.mxu0 0
        %996 = vmatpush1.bf16.msra.mxu0 0
        %997 = vmatprep.subr.bf16.mxu0 0
        %998 = vmatpush1.bf16.msra.mxu0 0
        %999 = vmatprep.subr.bf16.mxu0 0
        %1000 = vmatpush1.bf16.msra.mxu0 0
        %1001 = vmatprep.subr.bf16.mxu0 0
        %1002 = vmatpush1.bf16.msra.mxu0 0
        %1003 = vmatprep.subr.bf16.mxu0 0
        %1004 = vmatpush1.bf16.msra.mxu0 0
        %1005 = vmatprep.subr.bf16.mxu0 0
        %1006 = vmatpush1.bf16.msra.mxu0 0
        %1007 = vmatprep.subr.bf16.mxu0 0
        %1008 = vmatpush1.bf16.msra.mxu0 0
        %1009 = vmatprep.subr.bf16.mxu0 0
        %1010 = vmatpush1.bf16.msra.mxu0 0
        %1011 = vmatprep.subr.bf16.mxu0 0
        %1012 = vmatpush1.bf16.msra.mxu0 0
        %1013 = vmatprep.mubr.bf16.mxu0 0
        %1014 = vmatmul.mubr.bf16.gmra.mrb[0].mxu0 %v976
        %v1015 = vpop.f32.mrb[0].mxu0
        %v1016 = vadd.f32 %v920, %v1015
        %v1017 = vpop.f32.mrb[0].mxu0
        %v1018 = vpop.f32.mrb[0].mxu0
        %v1019 = vpop.f32.mrb[0].mxu0
        %1020 = vdwg.mxu0
        %v1021 = vpack.c.bf16 %v912, %v912
        %1023 = vrot.lane.b32.xlu0 %v1021, 96
        %v1024 = vpop.permute.xlu0 %1023
        %v1026 = vsel %vm929, %v1024, 0
        %1028 = vmatprep.subr.bf16.mxu0 0
        %1029 = vmatpush1.bf16.msra.mxu0 %v1026
        %1030 = vmatprep.subr.bf16.mxu0 0
        %1031 = vmatpush1.bf16.msra.mxu0 0
        %1032 = vmatprep.subr.bf16.mxu0 0
        %1033 = vmatpush1.bf16.msra.mxu0 0
        %1034 = vmatprep.subr.bf16.mxu0 0
        %1035 = vmatpush1.bf16.msra.mxu0 0
        %1036 = vmatprep.subr.bf16.mxu0 0
        %1037 = vmatpush1.bf16.msra.mxu0 0
        %1038 = vmatprep.subr.bf16.mxu0 0
        %1039 = vmatpush1.bf16.msra.mxu0 0
        %1040 = vmatprep.subr.bf16.mxu0 0
        %1041 = vmatpush1.bf16.msra.mxu0 0
        %1042 = vmatprep.subr.bf16.mxu0 0
        %1043 = vmatpush1.bf16.msra.mxu0 0
        %1044 = vmatprep.subr.bf16.mxu0 0
        %1045 = vmatpush1.bf16.msra.mxu0 0
        %1046 = vmatprep.subr.bf16.mxu0 0
        %1047 = vmatpush1.bf16.msra.mxu0 0
        %1048 = vmatprep.subr.bf16.mxu0 0
        %1049 = vmatpush1.bf16.msra.mxu0 0
        %1050 = vmatprep.subr.bf16.mxu0 0
        %1051 = vmatpush1.bf16.msra.mxu0 0
        %1052 = vmatprep.subr.bf16.mxu0 0
        %1053 = vmatpush1.bf16.msra.mxu0 0
        %1054 = vmatprep.subr.bf16.mxu0 0
        %1055 = vmatpush1.bf16.msra.mxu0 0
        %1056 = vmatprep.subr.bf16.mxu0 0
        %1057 = vmatpush1.bf16.msra.mxu0 0
        %1058 = vmatprep.subr.bf16.mxu0 0
        %1059 = vmatpush1.bf16.msra.mxu0 0
        %1060 = vmatprep.mubr.bf16.mxu0 0
        %1061 = vmatmul.mubr.bf16.gmra.mrb[0].mxu0 %v927
        %v1062 = vpop.f32.mrb[0].mxu0
        %v1063 = vadd.f32 %v918, %v1062
        %v1064 = vpop.f32.mrb[0].mxu0
        %v1065 = vpop.f32.mrb[0].mxu0
        %v1066 = vpop.f32.mrb[0].mxu0
        %1067 = vdwg.mxu0
        %1068 = vrot.lane.b32.xlu0 %v1021, 64
        %v1069 = vpop.permute.xlu0 %1068
        %v1071 = vsel %vm929, %v1069, 0
        %1073 = vmatprep.subr.bf16.mxu0 0
        %1074 = vmatpush1.bf16.msra.mxu0 %v1071
        %1075 = vmatprep.subr.bf16.mxu0 0
        %1076 = vmatpush1.bf16.msra.mxu0 0
        %1077 = vmatprep.subr.bf16.mxu0 0
        %1078 = vmatpush1.bf16.msra.mxu0 0
        %1079 = vmatprep.subr.bf16.mxu0 0
        %1080 = vmatpush1.bf16.msra.mxu0 0
        %1081 = vmatprep.subr.bf16.mxu0 0
        %1082 = vmatpush1.bf16.msra.mxu0 0
        %1083 = vmatprep.subr.bf16.mxu0 0
        %1084 = vmatpush1.bf16.msra.mxu0 0
        %1085 = vmatprep.subr.bf16.mxu0 0
        %1086 = vmatpush1.bf16.msra.mxu0 0
        %1087 = vmatprep.subr.bf16.mxu0 0
        %1088 = vmatpush1.bf16.msra.mxu0 0
        %1089 = vmatprep.subr.bf16.mxu0 0
        %1090 = vmatpush1.bf16.msra.mxu0 0
        %1091 = vmatprep.subr.bf16.mxu0 0
        %1092 = vmatpush1.bf16.msra.mxu0 0
        %1093 = vmatprep.subr.bf16.mxu0 0
        %1094 = vmatpush1.bf16.msra.mxu0 0
        %1095 = vmatprep.subr.bf16.mxu0 0
        %1096 = vmatpush1.bf16.msra.mxu0 0
        %1097 = vmatprep.subr.bf16.mxu0 0
        %1098 = vmatpush1.bf16.msra.mxu0 0
        %1099 = vmatprep.subr.bf16.mxu0 0
        %1100 = vmatpush1.bf16.msra.mxu0 0
        %1101 = vmatprep.subr.bf16.mxu0 0
        %1102 = vmatpush1.bf16.msra.mxu0 0
        %1103 = vmatprep.subr.bf16.mxu0 0
        %1104 = vmatpush1.bf16.msra.mxu0 0
        %1105 = vmatprep.mubr.bf16.mxu0 0
        %1106 = vmatmul.mubr.bf16.gmra.mrb[0].mxu0 %v976
        %v1107 = vpop.f32.mrb[0].mxu0
        %v1108 = vadd.f32 %v920, %v1107
        %v1109 = vpop.f32.mrb[0].mxu0
        %v1110 = vpop.f32.mrb[0].mxu0
        %v1111 = vpop.f32.mrb[0].mxu0
        %1112 = vdwg.mxu0
        %v1113 = vld [vmem:[%s761] sm:$0xff]
        %v1114 = vld [vmem:[%s761 + $0x8] sm:$0xff]
        %vm1115 = vcmp.eq.f32.partialorder %v1113, 0.0
        %vm1116 = vcmp.eq.f32.partialorder %v1114, 0.0
        %v1117 = vld [vmem:[%s823] sm:$0xff]
        %v1118 = vld [vmem:[%s823 + $0x8] sm:$0xff]
        %v1119 = vld [vmem:[%s823 + $0x10] sm:$0xff]
        %v1120 = vld [vmem:[%s823 + $0x18] sm:$0xff]
        %v1121 = vld [vmem:[%s823 + $0x20] sm:$0xff]
        %v1122 = vld [vmem:[%s823 + $0x28] sm:$0xff]
        %v1123 = vld [vmem:[%s823 + $0x30] sm:$0xff]
        %v1124 = vld [vmem:[%s823 + $0x38] sm:$0xff]
        %v1125 = vpack.c.bf16 %v968, %v968
        %v1126 = vpack.c.bf16 %v1063, %v1063
        %v1127 = vpack.c.bf16 %v1016, %v1016
        %v1128 = vpack.c.bf16 %v1108, %v1108
        %v1130 = vsel %vm925, %v921, 0
        %v1133 = vsel %vm925, %v1125, 0
        %1135 = vmatprep.subr.bf16.mxu0 0
        %1136 = vmatpush1.bf16.xpose.msra.mxu0 %v1133
        %1137 = vmatprep.subr.bf16.mxu0 0
        %1138 = vmatpush1.bf16.xpose.msra.mxu0 0
        %1139 = vmatprep.subr.bf16.mxu0 0
        %1140 = vmatpush1.bf16.xpose.msra.mxu0 0
        %1141 = vmatprep.subr.bf16.mxu0 0
        %1142 = vmatpush1.bf16.xpose.msra.mxu0 0
        %1143 = vmatprep.subr.bf16.mxu0 0
        %1144 = vmatpush1.bf16.xpose.msra.mxu0 0
        %1145 = vmatprep.subr.bf16.mxu0 0
        %1146 = vmatpush1.bf16.xpose.msra.mxu0 0
        %1147 = vmatprep.subr.bf16.mxu0 0
        %1148 = vmatpush1.bf16.xpose.msra.mxu0 0
        %1149 = vmatprep.subr.bf16.mxu0 0
        %1150 = vmatpush1.bf16.xpose.msra.mxu0 0
        %1151 = vmatprep.subr.bf16.mxu0 0
        %1152 = vmatpush1.bf16.xpose.msra.mxu0 0
        %1153 = vmatprep.subr.bf16.mxu0 0
        %1154 = vmatpush1.bf16.xpose.msra.mxu0 0
        %1155 = vmatprep.subr.bf16.mxu0 0
        %1156 = vmatpush1.bf16.xpose.msra.mxu0 0
        %1157 = vmatprep.subr.bf16.mxu0 0
        %1158 = vmatpush1.bf16.xpose.msra.mxu0 0
        %1159 = vmatprep.subr.bf16.mxu0 0
        %1160 = vmatpush1.bf16.xpose.msra.mxu0 0
        %1161 = vmatprep.subr.bf16.mxu0 0
        %1162 = vmatpush1.bf16.xpose.msra.mxu0 0
        %1163 = vmatprep.subr.bf16.mxu0 0
        %1164 = vmatpush1.bf16.xpose.msra.mxu0 0
        %1165 = vmatprep.subr.bf16.mxu0 0
        %1166 = vmatpush1.bf16.xpose.msra.mxu0 0
        %1167 = vmatprep.mubr.bf16.mxu0 0
        %1168 = vmatmul.mubr.bf16.gmra.mrb[0].mxu0 %v1130
        %v1169 = vpop.f32.mrb[0].mxu0
        %v1170 = vadd.f32 %v1117, %v1169
        %v1171 = vpop.f32.mrb[0].mxu0
        %v1172 = vpop.f32.mrb[0].mxu0
        %v1173 = vpop.f32.mrb[0].mxu0
        %1174 = vdwg.mxu0
        %v1176 = vsel %vm925, %v1021, 0
        %v1179 = vsel %vm925, %v1126, 0
        %1181 = vmatprep.subr.bf16.mxu0 0
        %1182 = vmatpush1.bf16.xpose.msra.mxu0 %v1179
        %1183 = vmatprep.subr.bf16.mxu0 0
        %1184 = vmatpush1.bf16.xpose.msra.mxu0 0
        %1185 = vmatprep.subr.bf16.mxu0 0
        %1186 = vmatpush1.bf16.xpose.msra.mxu0 0
        %1187 = vmatprep.subr.bf16.mxu0 0
        %1188 = vmatpush1.bf16.xpose.msra.mxu0 0
        %1189 = vmatprep.subr.bf16.mxu0 0
        %1190 = vmatpush1.bf16.xpose.msra.mxu0 0
        %1191 = vmatprep.subr.bf16.mxu0 0
        %1192 = vmatpush1.bf16.xpose.msra.mxu0 0
        %1193 = vmatprep.subr.bf16.mxu0 0
        %1194 = vmatpush1.bf16.xpose.msra.mxu0 0
        %1195 = vmatprep.subr.bf16.mxu0 0
        %1196 = vmatpush1.bf16.xpose.msra.mxu0 0
        %1197 = vmatprep.subr.bf16.mxu0 0
        %1198 = vmatpush1.bf16.xpose.msra.mxu0 0
        %1199 = vmatprep.subr.bf16.mxu0 0
        %1200 = vmatpush1.bf16.xpose.msra.mxu0 0
        %1201 = vmatprep.subr.bf16.mxu0 0
        %1202 = vmatpush1.bf16.xpose.msra.mxu0 0
        %1203 = vmatprep.subr.bf16.mxu0 0
        %1204 = vmatpush1.bf16.xpose.msra.mxu0 0
        %1205 = vmatprep.subr.bf16.mxu0 0
        %1206 = vmatpush1.bf16.xpose.msra.mxu0 0
        %1207 = vmatprep.subr.bf16.mxu0 0
        %1208 = vmatpush1.bf16.xpose.msra.mxu0 0
        %1209 = vmatprep.subr.bf16.mxu0 0
        %1210 = vmatpush1.bf16.xpose.msra.mxu0 0
        %1211 = vmatprep.subr.bf16.mxu0 0
        %1212 = vmatpush1.bf16.xpose.msra.mxu0 0
        %1213 = vmatprep.mubr.bf16.mxu0 0
        %1214 = vmatmul.mubr.bf16.gmra.mrb[0].mxu0 %v1176
        %v1215 = vpop.f32.mrb[0].mxu0
        %v1216 = vadd.f32 %v1121, %v1215
        %v1217 = vpop.f32.mrb[0].mxu0
        %v1218 = vpop.f32.mrb[0].mxu0
        %v1219 = vpop.f32.mrb[0].mxu0
        %1220 = vdwg.mxu0
        %v1221 = vsel %vm1115, 1, 0
        %v1222 = vsel %vm1116, 1, 0
        %1223 = vset.pattern.permute.xlu0 0
        %1224 = vperm.xlu0 %1223, %v1221
        %v1225 = vpop.permute.xlu0 %1224
        %1226 = vset.pattern.permute.xlu0 0
        %1227 = vperm.xlu0 %1226, %v1222
        %v1228 = vpop.permute.xlu0 %1227
        %vm1229 = vcmp.eq.s32.totalorder %v1225, 1
        %vm1230 = vcmp.eq.s32.totalorder %v1228, 1
        %v1231 = vsel %vm1229, -32767.0, %v1170
        %v1232 = vsel %vm1230, -32767.0, %v1216
        %vm1233 = vcmask 31744
        %v1234 = vsel %vm1233, %v1231, -inf
        %1235 = vmax.xlane.f32.xlu0 %v1234
        %v1236 = vpop.xlane.xlu0 %1235
        %v1237 = vsel %vm1233, %v1232, -inf
        %1238 = vmax.xlane.f32.xlu0 %v1237
        %v1239 = vpop.xlane.xlu0 %1238
        %v1240 = vsub.f32 %v1231, %v1236
        %v1241 = vsub.f32 %v1232, %v1239
        %v1242 = vmul.f32 %v1240, 1.442695
        %v1243 = vpow.pop %v1242
        %v1244 = vmul.f32 %v1241, 1.442695
        %v1245 = vpow.pop %v1244
        %v1246 = vsel %vm1233, %v1243, 0.0
        %1247 = vadd.xlane.f32.xlu0 %v1246
        %v1248 = vpop.xlane.xlu0 %1247
        %v1249 = vsel %vm1233, %v1245, 0.0
        %1250 = vadd.xlane.f32.xlu0 %v1249
        %v1251 = vpop.xlane.xlu0 %1250
        %v1252 = vrcp.pop %v1248
        %v1253 = vrcp.pop %v1251
        %v1254 = vmul.f32 %v1243, %v1252
        %v1255 = vmul.f32 %v1245, %v1253
        %v1256 = vpack.c.bf16 %v1254, %v1254
        %v1257 = vpack.c.bf16 %v1255, %v1255
        %v1259 = vsel %vm1233, %v1256, 0
        %vm1261 = vcmask 1041408
        %v1263 = vsel %vm1261, %v1127, 0
        %1265 = vmatprep.subr.bf16.mxu0 0
        %1266 = vmatpush1.bf16.msra.mxu0 %v1263
        %1267 = vmatprep.subr.bf16.mxu0 0
        %1268 = vmatpush1.bf16.msra.mxu0 0
        %1269 = vmatprep.subr.bf16.mxu0 0
        %1270 = vmatpush1.bf16.msra.mxu0 0
        %1271 = vmatprep.subr.bf16.mxu0 0
        %1272 = vmatpush1.bf16.msra.mxu0 0
        %1273 = vmatprep.subr.bf16.mxu0 0
        %1274 = vmatpush1.bf16.msra.mxu0 0
        %1275 = vmatprep.subr.bf16.mxu0 0
        %1276 = vmatpush1.bf16.msra.mxu0 0
        %1277 = vmatprep.subr.bf16.mxu0 0
        %1278 = vmatpush1.bf16.msra.mxu0 0
        %1279 = vmatprep.subr.bf16.mxu0 0
        %1280 = vmatpush1.bf16.msra.mxu0 0
        %1281 = vmatprep.subr.bf16.mxu0 0
        %1282 = vmatpush1.bf16.msra.mxu0 0
        %1283 = vmatprep.subr.bf16.mxu0 0
        %1284 = vmatpush1.bf16.msra.mxu0 0
        %1285 = vmatprep.subr.bf16.mxu0 0
        %1286 = vmatpush1.bf16.msra.mxu0 0
        %1287 = vmatprep.subr.bf16.mxu0 0
        %1288 = vmatpush1.bf16.msra.mxu0 0
        %1289 = vmatprep.subr.bf16.mxu0 0
        %1290 = vmatpush1.bf16.msra.mxu0 0
        %1291 = vmatprep.subr.bf16.mxu0 0
        %1292 = vmatpush1.bf16.msra.mxu0 0
        %1293 = vmatprep.subr.bf16.mxu0 0
        %1294 = vmatpush1.bf16.msra.mxu0 0
        %1295 = vmatprep.subr.bf16.mxu0 0
        %1296 = vmatpush1.bf16.msra.mxu0 0
        %1297 = vmatprep.mubr.bf16.mxu0 0
        %1298 = vmatmul.mubr.bf16.gmra.mrb[0].mxu0 %v1259
        %v1299 = vpop.f32.mrb[0].mxu0
        %v1300 = vadd.f32 0.0, %v1299
        %v1301 = vpop.f32.mrb[0].mxu0
        %v1302 = vpop.f32.mrb[0].mxu0
        %v1303 = vpop.f32.mrb[0].mxu0
        %1304 = vdwg.mxu0
        %v1306 = vsel %vm1233, %v1257, 0
        %v1309 = vsel %vm1261, %v1128, 0
        %1311 = vmatprep.subr.bf16.mxu0 0
        %1312 = vmatpush1.bf16.msra.mxu0 %v1309
        %1313 = vmatprep.subr.bf16.mxu0 0
        %1314 = vmatpush1.bf16.msra.mxu0 0
        %1315 = vmatprep.subr.bf16.mxu0 0
        %1316 = vmatpush1.bf16.msra.mxu0 0
        %1317 = vmatprep.subr.bf16.mxu0 0
        %1318 = vmatpush1.bf16.msra.mxu0 0
        %1319 = vmatprep.subr.bf16.mxu0 0
        %1320 = vmatpush1.bf16.msra.mxu0 0
        %1321 = vmatprep.subr.bf16.mxu0 0
        %1322 = vmatpush1.bf16.msra.mxu0 0
        %1323 = vmatprep.subr.bf16.mxu0 0
        %1324 = vmatpush1.bf16.msra.mxu0 0
        %1325 = vmatprep.subr.bf16.mxu0 0
        %1326 = vmatpush1.bf16.msra.mxu0 0
        %1327 = vmatprep.subr.bf16.mxu0 0
        %1328 = vmatpush1.bf16.msra.mxu0 0
        %1329 = vmatprep.subr.bf16.mxu0 0
        %1330 = vmatpush1.bf16.msra.mxu0 0
        %1331 = vmatprep.subr.bf16.mxu0 0
        %1332 = vmatpush1.bf16.msra.mxu0 0
        %1333 = vmatprep.subr.bf16.mxu0 0
        %1334 = vmatpush1.bf16.msra.mxu0 0
        %1335 = vmatprep.subr.bf16.mxu0 0
        %1336 = vmatpush1.bf16.msra.mxu0 0
        %1337 = vmatprep.subr.bf16.mxu0 0
        %1338 = vmatpush1.bf16.msra.mxu0 0
        %1339 = vmatprep.subr.bf16.mxu0 0
        %1340 = vmatpush1.bf16.msra.mxu0 0
        %1341 = vmatprep.subr.bf16.mxu0 0
        %1342 = vmatpush1.bf16.msra.mxu0 0
        %1343 = vmatprep.mubr.bf16.mxu0 0
        %1344 = vmatmul.mubr.bf16.gmra.mrb[0].mxu0 %v1306
        %v1345 = vpop.f32.mrb[0].mxu0
        %v1346 = vadd.f32 0.0, %v1345
        %v1347 = vpop.f32.mrb[0].mxu0
        %v1348 = vpop.f32.mrb[0].mxu0
        %v1349 = vpop.f32.mrb[0].mxu0
        %1350 = vdwg.mxu0
        %1351 = vrot.lane.b32.xlu0 %v921, 120
        %v1352 = vpop.permute.xlu0 %1351
        %1354 = vrot.lane.b32.xlu0 %v1125, 120
        %v1355 = vpop.permute.xlu0 %1354
        %v1357 = vsel %vm925, %v1352, 0
        %v1360 = vsel %vm925, %v1355, 0
        %1362 = vmatprep.subr.bf16.mxu0 0
        %1363 = vmatpush1.bf16.xpose.msra.mxu0 %v1360
        %1364 = vmatprep.subr.bf16.mxu0 0
        %1365 = vmatpush1.bf16.xpose.msra.mxu0 0
        %1366 = vmatprep.subr.bf16.mxu0 0
        %1367 = vmatpush1.bf16.xpose.msra.mxu0 0
        %1368 = vmatprep.subr.bf16.mxu0 0
        %1369 = vmatpush1.bf16.xpose.msra.mxu0 0
        %1370 = vmatprep.subr.bf16.mxu0 0
        %1371 = vmatpush1.bf16.xpose.msra.mxu0 0
        %1372 = vmatprep.subr.bf16.mxu0 0
        %1373 = vmatpush1.bf16.xpose.msra.mxu0 0
        %1374 = vmatprep.subr.bf16.mxu0 0
        %1375 = vmatpush1.bf16.xpose.msra.mxu0 0
        %1376 = vmatprep.subr.bf16.mxu0 0
        %1377 = vmatpush1.bf16.xpose.msra.mxu0 0
        %1378 = vmatprep.subr.bf16.mxu0 0
        %1379 = vmatpush1.bf16.xpose.msra.mxu0 0
        %1380 = vmatprep.subr.bf16.mxu0 0
        %1381 = vmatpush1.bf16.xpose.msra.mxu0 0
        %1382 = vmatprep.subr.bf16.mxu0 0
        %1383 = vmatpush1.bf16.xpose.msra.mxu0 0
        %1384 = vmatprep.subr.bf16.mxu0 0
        %1385 = vmatpush1.bf16.xpose.msra.mxu0 0
        %1386 = vmatprep.subr.bf16.mxu0 0
        %1387 = vmatpush1.bf16.xpose.msra.mxu0 0
        %1388 = vmatprep.subr.bf16.mxu0 0
        %1389 = vmatpush1.bf16.xpose.msra.mxu0 0
        %1390 = vmatprep.subr.bf16.mxu0 0
        %1391 = vmatpush1.bf16.xpose.msra.mxu0 0
        %1392 = vmatprep.subr.bf16.mxu0 0
        %1393 = vmatpush1.bf16.xpose.msra.mxu0 0
        %1394 = vmatprep.mubr.bf16.mxu0 0
        %1395 = vmatmul.mubr.bf16.gmra.mrb[0].mxu0 %v1357
        %v1396 = vpop.f32.mrb[0].mxu0
        %v1397 = vadd.f32 %v1118, %v1396
        %v1398 = vpop.f32.mrb[0].mxu0
        %v1399 = vpop.f32.mrb[0].mxu0
        %v1400 = vpop.f32.mrb[0].mxu0
        %1401 = vdwg.mxu0
        %1402 = vrot.lane.b32.xlu0 %v1021, 120
        %v1403 = vpop.permute.xlu0 %1402
        %1405 = vrot.lane.b32.xlu0 %v1126, 120
        %v1406 = vpop.permute.xlu0 %1405
        %v1408 = vsel %vm925, %v1403, 0
        %v1411 = vsel %vm925, %v1406, 0
        %1413 = vmatprep.subr.bf16.mxu0 0
        %1414 = vmatpush1.bf16.xpose.msra.mxu0 %v1411
        %1415 = vmatprep.subr.bf16.mxu0 0
        %1416 = vmatpush1.bf16.xpose.msra.mxu0 0
        %1417 = vmatprep.subr.bf16.mxu0 0
        %1418 = vmatpush1.bf16.xpose.msra.mxu0 0
        %1419 = vmatprep.subr.bf16.mxu0 0
        %1420 = vmatpush1.bf16.xpose.msra.mxu0 0
        %1421 = vmatprep.subr.bf16.mxu0 0
        %1422 = vmatpush1.bf16.xpose.msra.mxu0 0
        %1423 = vmatprep.subr.bf16.mxu0 0
        %1424 = vmatpush1.bf16.xpose.msra.mxu0 0
        %1425 = vmatprep.subr.bf16.mxu0 0
        %1426 = vmatpush1.bf16.xpose.msra.mxu0 0
        %1427 = vmatprep.subr.bf16.mxu0 0
        %1428 = vmatpush1.bf16.xpose.msra.mxu0 0
        %1429 = vmatprep.subr.bf16.mxu0 0
        %1430 = vmatpush1.bf16.xpose.msra.mxu0 0
        %1431 = vmatprep.subr.bf16.mxu0 0
        %1432 = vmatpush1.bf16.xpose.msra.mxu0 0
        %1433 = vmatprep.subr.bf16.mxu0 0
        %1434 = vmatpush1.bf16.xpose.msra.mxu0 0
        %1435 = vmatprep.subr.bf16.mxu0 0
        %1436 = vmatpush1.bf16.xpose.msra.mxu0 0
        %1437 = vmatprep.subr.bf16.mxu0 0
        %1438 = vmatpush1.bf16.xpose.msra.mxu0 0
        %1439 = vmatprep.subr.bf16.mxu0 0
        %1440 = vmatpush1.bf16.xpose.msra.mxu0 0
        %1441 = vmatprep.subr.bf16.mxu0 0
        %1442 = vmatpush1.bf16.xpose.msra.mxu0 0
        %1443 = vmatprep.subr.bf16.mxu0 0
        %1444 = vmatpush1.bf16.xpose.msra.mxu0 0
        %1445 = vmatprep.mubr.bf16.mxu0 0
        %1446 = vmatmul.mubr.bf16.gmra.mrb[0].mxu0 %v1408
        %v1447 = vpop.f32.mrb[0].mxu0
        %v1448 = vadd.f32 %v1122, %v1447
        %v1449 = vpop.f32.mrb[0].mxu0
        %v1450 = vpop.f32.mrb[0].mxu0
        %v1451 = vpop.f32.mrb[0].mxu0
        %1452 = vdwg.mxu0
        %v1453 = vsel %vm1229, -32767.0, %v1397
        %v1454 = vsel %vm1230, -32767.0, %v1448
        %v1455 = vsel %vm1233, %v1453, -inf
        %1456 = vmax.xlane.f32.xlu0 %v1455
        %v1457 = vpop.xlane.xlu0 %1456
        %v1458 = vsel %vm1233, %v1454, -inf
        %1459 = vmax.xlane.f32.xlu0 %v1458
        %v1460 = vpop.xlane.xlu0 %1459
        %v1461 = vsub.f32 %v1453, %v1457
        %v1462 = vsub.f32 %v1454, %v1460
        %v1463 = vmul.f32 %v1461, 1.442695
        %v1464 = vpow.pop %v1463
        %v1465 = vmul.f32 %v1462, 1.442695
        %v1466 = vpow.pop %v1465
        %v1467 = vsel %vm1233, %v1464, 0.0
        %1468 = vadd.xlane.f32.xlu0 %v1467
        %v1469 = vpop.xlane.xlu0 %1468
        %v1470 = vsel %vm1233, %v1466, 0.0
        %1471 = vadd.xlane.f32.xlu0 %v1470
        %v1472 = vpop.xlane.xlu0 %1471
        %v1473 = vrcp.pop %v1469
        %v1474 = vrcp.pop %v1472
        %v1475 = vmul.f32 %v1464, %v1473
        %v1476 = vmul.f32 %v1466, %v1474
        %v1477 = vpack.c.bf16 %v1475, %v1475
        %v1478 = vpack.c.bf16 %v1476, %v1476
        %1480 = vrot.lane.b32.xlu0 %v1127, 120
        %v1481 = vpop.permute.xlu0 %1480
        %v1483 = vsel %vm1233, %v1477, 0
        %v1486 = vsel %vm1261, %v1481, 0
        %1488 = vmatprep.subr.bf16.mxu0 0
        %1489 = vmatpush1.bf16.msra.mxu0 %v1486
        %1490 = vmatprep.subr.bf16.mxu0 0
        %1491 = vmatpush1.bf16.msra.mxu0 0
        %1492 = vmatprep.subr.bf16.mxu0 0
        %1493 = vmatpush1.bf16.msra.mxu0 0
        %1494 = vmatprep.subr.bf16.mxu0 0
        %1495 = vmatpush1.bf16.msra.mxu0 0
        %1496 = vmatprep.subr.bf16.mxu0 0
        %1497 = vmatpush1.bf16.msra.mxu0 0
        %1498 = vmatprep.subr.bf16.mxu0 0
        %1499 = vmatpush1.bf16.msra.mxu0 0
        %1500 = vmatprep.subr.bf16.mxu0 0
        %1501 = vmatpush1.bf16.msra.mxu0 0
        %1502 = vmatprep.subr.bf16.mxu0 0
        %1503 = vmatpush1.bf16.msra.mxu0 0
        %1504 = vmatprep.subr.bf16.mxu0 0
        %1505 = vmatpush1.bf16.msra.mxu0 0
        %1506 = vmatprep.subr.bf16.mxu0 0
        %1507 = vmatpush1.bf16.msra.mxu0 0
        %1508 = vmatprep.subr.bf16.mxu0 0
        %1509 = vmatpush1.bf16.msra.mxu0 0
        %1510 = vmatprep.subr.bf16.mxu0 0
        %1511 = vmatpush1.bf16.msra.mxu0 0
        %1512 = vmatprep.subr.bf16.mxu0 0
        %1513 = vmatpush1.bf16.msra.mxu0 0
        %1514 = vmatprep.subr.bf16.mxu0 0
        %1515 = vmatpush1.bf16.msra.mxu0 0
        %1516 = vmatprep.subr.bf16.mxu0 0
        %1517 = vmatpush1.bf16.msra.mxu0 0
        %1518 = vmatprep.subr.bf16.mxu0 0
        %1519 = vmatpush1.bf16.msra.mxu0 0
        %1520 = vmatprep.mubr.bf16.mxu0 0
        %1521 = vmatmul.mubr.bf16.gmra.mrb[0].mxu0 %v1483
        %v1522 = vpop.f32.mrb[0].mxu0
        %v1523 = vadd.f32 0.0, %v1522
        %v1524 = vpop.f32.mrb[0].mxu0
        %v1525 = vpop.f32.mrb[0].mxu0
        %v1526 = vpop.f32.mrb[0].mxu0
        %1527 = vdwg.mxu0
        %1529 = vrot.lane.b32.xlu0 %v1128, 120
        %v1530 = vpop.permute.xlu0 %1529
        %v1532 = vsel %vm1233, %v1478, 0
        %v1535 = vsel %vm1261, %v1530, 0
        %1537 = vmatprep.subr.bf16.mxu0 0
        %1538 = vmatpush1.bf16.msra.mxu0 %v1535
        %1539 = vmatprep.subr.bf16.mxu0 0
        %1540 = vmatpush1.bf16.msra.mxu0 0
        %1541 = vmatprep.subr.bf16.mxu0 0
        %1542 = vmatpush1.bf16.msra.mxu0 0
        %1543 = vmatprep.subr.bf16.mxu0 0
        %1544 = vmatpush1.bf16.msra.mxu0 0
        %1545 = vmatprep.subr.bf16.mxu0 0
        %1546 = vmatpush1.bf16.msra.mxu0 0
        %1547 = vmatprep.subr.bf16.mxu0 0
        %1548 = vmatpush1.bf16.msra.mxu0 0
        %1549 = vmatprep.subr.bf16.mxu0 0
        %1550 = vmatpush1.bf16.msra.mxu0 0
        %1551 = vmatprep.subr.bf16.mxu0 0
        %1552 = vmatpush1.bf16.msra.mxu0 0
        %1553 = vmatprep.subr.bf16.mxu0 0
        %1554 = vmatpush1.bf16.msra.mxu0 0
        %1555 = vmatprep.subr.bf16.mxu0 0
        %1556 = vmatpush1.bf16.msra.mxu0 0
        %1557 = vmatprep.subr.bf16.mxu0 0
        %1558 = vmatpush1.bf16.msra.mxu0 0
        %1559 = vmatprep.subr.bf16.mxu0 0
        %1560 = vmatpush1.bf16.msra.mxu0 0
        %1561 = vmatprep.subr.bf16.mxu0 0
        %1562 = vmatpush1.bf16.msra.mxu0 0
        %1563 = vmatprep.subr.bf16.mxu0 0
        %1564 = vmatpush1.bf16.msra.mxu0 0
        %1565 = vmatprep.subr.bf16.mxu0 0
        %1566 = vmatpush1.bf16.msra.mxu0 0
        %1567 = vmatprep.subr.bf16.mxu0 0
        %1568 = vmatpush1.bf16.msra.mxu0 0
        %1569 = vmatprep.mubr.bf16.mxu0 0
        %1570 = vmatmul.mubr.bf16.gmra.mrb[0].mxu0 %v1532
        %v1571 = vpop.f32.mrb[0].mxu0
        %v1572 = vadd.f32 0.0, %v1571
        %v1573 = vpop.f32.mrb[0].mxu0
        %v1574 = vpop.f32.mrb[0].mxu0
        %v1575 = vpop.f32.mrb[0].mxu0
        %1576 = vdwg.mxu0
        %1577 = vrot.lane.b32.xlu0 %v921, 112
        %v1578 = vpop.permute.xlu0 %1577
        %1579 = vrot.lane.b32.xlu0 %v1125, 112
        %v1580 = vpop.permute.xlu0 %1579
        %v1582 = vsel %vm925, %v1578, 0
        %v1585 = vsel %vm925, %v1580, 0
        %1587 = vmatprep.subr.bf16.mxu0 0
        %1588 = vmatpush1.bf16.xpose.msra.mxu0 %v1585
        %1589 = vmatprep.subr.bf16.mxu0 0
        %1590 = vmatpush1.bf16.xpose.msra.mxu0 0
        %1591 = vmatprep.subr.bf16.mxu0 0
        %1592 = vmatpush1.bf16.xpose.msra.mxu0 0
        %1593 = vmatprep.subr.bf16.mxu0 0
        %1594 = vmatpush1.bf16.xpose.msra.mxu0 0
        %1595 = vmatprep.subr.bf16.mxu0 0
        %1596 = vmatpush1.bf16.xpose.msra.mxu0 0
        %1597 = vmatprep.subr.bf16.mxu0 0
        %1598 = vmatpush1.bf16.xpose.msra.mxu0 0
        %1599 = vmatprep.subr.bf16.mxu0 0
        %1600 = vmatpush1.bf16.xpose.msra.mxu0 0
        %1601 = vmatprep.subr.bf16.mxu0 0
        %1602 = vmatpush1.bf16.xpose.msra.mxu0 0
        %1603 = vmatprep.subr.bf16.mxu0 0
        %1604 = vmatpush1.bf16.xpose.msra.mxu0 0
        %1605 = vmatprep.subr.bf16.mxu0 0
        %1606 = vmatpush1.bf16.xpose.msra.mxu0 0
        %1607 = vmatprep.subr.bf16.mxu0 0
        %1608 = vmatpush1.bf16.xpose.msra.mxu0 0
        %1609 = vmatprep.subr.bf16.mxu0 0
        %1610 = vmatpush1.bf16.xpose.msra.mxu0 0
        %1611 = vmatprep.subr.bf16.mxu0 0
        %1612 = vmatpush1.bf16.xpose.msra.mxu0 0
        %1613 = vmatprep.subr.bf16.mxu0 0
        %1614 = vmatpush1.bf16.xpose.msra.mxu0 0
        %1615 = vmatprep.subr.bf16.mxu0 0
        %1616 = vmatpush1.bf16.xpose.msra.mxu0 0
        %1617 = vmatprep.subr.bf16.mxu0 0
        %1618 = vmatpush1.bf16.xpose.msra.mxu0 0
        %1619 = vmatprep.mubr.bf16.mxu0 0
        %1620 = vmatmul.mubr.bf16.gmra.mrb[0].mxu0 %v1582
        %v1621 = vpop.f32.mrb[0].mxu0
        %v1622 = vadd.f32 %v1119, %v1621
        %v1623 = vpop.f32.mrb[0].mxu0
        %v1624 = vpop.f32.mrb[0].mxu0
        %v1625 = vpop.f32.mrb[0].mxu0
        %1626 = vdwg.mxu0
        %1627 = vrot.lane.b32.xlu0 %v1021, 112
        %v1628 = vpop.permute.xlu0 %1627
        %1629 = vrot.lane.b32.xlu0 %v1126, 112
        %v1630 = vpop.permute.xlu0 %1629
        %v1632 = vsel %vm925, %v1628, 0
        %v1635 = vsel %vm925, %v1630, 0
        %1637 = vmatprep.subr.bf16.mxu0 0
        %1638 = vmatpush1.bf16.xpose.msra.mxu0 %v1635
        %1639 = vmatprep.subr.bf16.mxu0 0
        %1640 = vmatpush1.bf16.xpose.msra.mxu0 0
        %1641 = vmatprep.subr.bf16.mxu0 0
        %1642 = vmatpush1.bf16.xpose.msra.mxu0 0
        %1643 = vmatprep.subr.bf16.mxu0 0
        %1644 = vmatpush1.bf16.xpose.msra.mxu0 0
        %1645 = vmatprep.subr.bf16.mxu0 0
        %1646 = vmatpush1.bf16.xpose.msra.mxu0 0
        %1647 = vmatprep.subr.bf16.mxu0 0
        %1648 = vmatpush1.bf16.xpose.msra.mxu0 0
        %1649 = vmatprep.subr.bf16.mxu0 0
        %1650 = vmatpush1.bf16.xpose.msra.mxu0 0
        %1651 = vmatprep.subr.bf16.mxu0 0
        %1652 = vmatpush1.bf16.xpose.msra.mxu0 0
        %1653 = vmatprep.subr.bf16.mxu0 0
        %1654 = vmatpush1.bf16.xpose.msra.mxu0 0
        %1655 = vmatprep.subr.bf16.mxu0 0
        %1656 = vmatpush1.bf16.xpose.msra.mxu0 0
        %1657 = vmatprep.subr.bf16.mxu0 0
        %1658 = vmatpush1.bf16.xpose.msra.mxu0 0
        %1659 = vmatprep.subr.bf16.mxu0 0
        %1660 = vmatpush1.bf16.xpose.msra.mxu0 0
        %1661 = vmatprep.subr.bf16.mxu0 0
        %1662 = vmatpush1.bf16.xpose.msra.mxu0 0
        %1663 = vmatprep.subr.bf16.mxu0 0
        %1664 = vmatpush1.bf16.xpose.msra.mxu0 0
        %1665 = vmatprep.subr.bf16.mxu0 0
        %1666 = vmatpush1.bf16.xpose.msra.mxu0 0
        %1667 = vmatprep.subr.bf16.mxu0 0
        %1668 = vmatpush1.bf16.xpose.msra.mxu0 0
        %1669 = vmatprep.mubr.bf16.mxu0 0
        %1670 = vmatmul.mubr.bf16.gmra.mrb[0].mxu0 %v1632
        %v1671 = vpop.f32.mrb[0].mxu0
        %v1672 = vadd.f32 %v1123, %v1671
        %v1673 = vpop.f32.mrb[0].mxu0
        %v1674 = vpop.f32.mrb[0].mxu0
        %v1675 = vpop.f32.mrb[0].mxu0
        %1676 = vdwg.mxu0
        %v1677 = vsel %vm1229, -32767.0, %v1622
        %v1678 = vsel %vm1230, -32767.0, %v1672
        %v1679 = vsel %vm1233, %v1677, -inf
        %1680 = vmax.xlane.f32.xlu0 %v1679
        %v1681 = vpop.xlane.xlu0 %1680
        %v1682 = vsel %vm1233, %v1678, -inf
        %1683 = vmax.xlane.f32.xlu0 %v1682
        %v1684 = vpop.xlane.xlu0 %1683
        %v1685 = vsub.f32 %v1677, %v1681
        %v1686 = vsub.f32 %v1678, %v1684
        %v1687 = vmul.f32 %v1685, 1.442695
        %v1688 = vpow.pop %v1687
        %v1689 = vmul.f32 %v1686, 1.442695
        %v1690 = vpow.pop %v1689
        %v1691 = vsel %vm1233, %v1688, 0.0
        %1692 = vadd.xlane.f32.xlu0 %v1691
        %v1693 = vpop.xlane.xlu0 %1692
        %v1694 = vsel %vm1233, %v1690, 0.0
        %1695 = vadd.xlane.f32.xlu0 %v1694
        %v1696 = vpop.xlane.xlu0 %1695
        %v1697 = vrcp.pop %v1693
        %v1698 = vrcp.pop %v1696
        %v1699 = vmul.f32 %v1688, %v1697
        %v1700 = vmul.f32 %v1690, %v1698
        %v1701 = vpack.c.bf16 %v1699, %v1699
        %v1702 = vpack.c.bf16 %v1700, %v1700
        %1703 = vrot.lane.b32.xlu0 %v1127, 112
        %v1704 = vpop.permute.xlu0 %1703
        %v1706 = vsel %vm1233, %v1701, 0
        %v1709 = vsel %vm1261, %v1704, 0
        %1711 = vmatprep.subr.bf16.mxu0 0
        %1712 = vmatpush1.bf16.msra.mxu0 %v1709
        %1713 = vmatprep.subr.bf16.mxu0 0
        %1714 = vmatpush1.bf16.msra.mxu0 0
        %1715 = vmatprep.subr.bf16.mxu0 0
        %1716 = vmatpush1.bf16.msra.mxu0 0
        %1717 = vmatprep.subr.bf16.mxu0 0
        %1718 = vmatpush1.bf16.msra.mxu0 0
        %1719 = vmatprep.subr.bf16.mxu0 0
        %1720 = vmatpush1.bf16.msra.mxu0 0
        %1721 = vmatprep.subr.bf16.mxu0 0
        %1722 = vmatpush1.bf16.msra.mxu0 0
        %1723 = vmatprep.subr.bf16.mxu0 0
        %1724 = vmatpush1.bf16.msra.mxu0 0
        %1725 = vmatprep.subr.bf16.mxu0 0
        %1726 = vmatpush1.bf16.msra.mxu0 0
        %1727 = vmatprep.subr.bf16.mxu0 0
        %1728 = vmatpush1.bf16.msra.mxu0 0
        %1729 = vmatprep.subr.bf16.mxu0 0
        %1730 = vmatpush1.bf16.msra.mxu0 0
        %1731 = vmatprep.subr.bf16.mxu0 0
        %1732 = vmatpush1.bf16.msra.mxu0 0
        %1733 = vmatprep.subr.bf16.mxu0 0
        %1734 = vmatpush1.bf16.msra.mxu0 0
        %1735 = vmatprep.subr.bf16.mxu0 0
        %1736 = vmatpush1.bf16.msra.mxu0 0
        %1737 = vmatprep.subr.bf16.mxu0 0
        %1738 = vmatpush1.bf16.msra.mxu0 0
        %1739 = vmatprep.subr.bf16.mxu0 0
        %1740 = vmatpush1.bf16.msra.mxu0 0
        %1741 = vmatprep.subr.bf16.mxu0 0
        %1742 = vmatpush1.bf16.msra.mxu0 0
        %1743 = vmatprep.mubr.bf16.mxu0 0
        %1744 = vmatmul.mubr.bf16.gmra.mrb[0].mxu0 %v1706
        %v1745 = vpop.f32.mrb[0].mxu0
        %v1746 = vadd.f32 0.0, %v1745
        %v1747 = vpop.f32.mrb[0].mxu0
        %v1748 = vpop.f32.mrb[0].mxu0
        %v1749 = vpop.f32.mrb[0].mxu0
        %1750 = vdwg.mxu0
        %1751 = vrot.lane.b32.xlu0 %v1128, 112
        %v1752 = vpop.permute.xlu0 %1751
        %v1754 = vsel %vm1233, %v1702, 0
        %v1757 = vsel %vm1261, %v1752, 0
        %1759 = vmatprep.subr.bf16.mxu0 0
        %1760 = vmatpush1.bf16.msra.mxu0 %v1757
        %1761 = vmatprep.subr.bf16.mxu0 0
        %1762 = vmatpush1.bf16.msra.mxu0 0
        %1763 = vmatprep.subr.bf16.mxu0 0
        %1764 = vmatpush1.bf16.msra.mxu0 0
        %1765 = vmatprep.subr.bf16.mxu0 0
        %1766 = vmatpush1.bf16.msra.mxu0 0
        %1767 = vmatprep.subr.bf16.mxu0 0
        %1768 = vmatpush1.bf16.msra.mxu0 0
        %1769 = vmatprep.subr.bf16.mxu0 0
        %1770 = vmatpush1.bf16.msra.mxu0 0
        %1771 = vmatprep.subr.bf16.mxu0 0
        %1772 = vmatpush1.bf16.msra.mxu0 0
        %1773 = vmatprep.subr.bf16.mxu0 0
        %1774 = vmatpush1.bf16.msra.mxu0 0
        %1775 = vmatprep.subr.bf16.mxu0 0
        %1776 = vmatpush1.bf16.msra.mxu0 0
        %1777 = vmatprep.subr.bf16.mxu0 0
        %1778 = vmatpush1.bf16.msra.mxu0 0
        %1779 = vmatprep.subr.bf16.mxu0 0
        %1780 = vmatpush1.bf16.msra.mxu0 0
        %1781 = vmatprep.subr.bf16.mxu0 0
        %1782 = vmatpush1.bf16.msra.mxu0 0
        %1783 = vmatprep.subr.bf16.mxu0 0
        %1784 = vmatpush1.bf16.msra.mxu0 0
        %1785 = vmatprep.subr.bf16.mxu0 0
        %1786 = vmatpush1.bf16.msra.mxu0 0
        %1787 = vmatprep.subr.bf16.mxu0 0
        %1788 = vmatpush1.bf16.msra.mxu0 0
        %1789 = vmatprep.subr.bf16.mxu0 0
        %1790 = vmatpush1.bf16.msra.mxu0 0
        %1791 = vmatprep.mubr.bf16.mxu0 0
        %1792 = vmatmul.mubr.bf16.gmra.mrb[0].mxu0 %v1754
        %v1793 = vpop.f32.mrb[0].mxu0
        %v1794 = vadd.f32 0.0, %v1793
        %v1795 = vpop.f32.mrb[0].mxu0
        %v1796 = vpop.f32.mrb[0].mxu0
        %v1797 = vpop.f32.mrb[0].mxu0
        %1798 = vdwg.mxu0
        %1799 = vrot.lane.b32.xlu0 %v921, 104
        %v1800 = vpop.permute.xlu0 %1799
        %1801 = vrot.lane.b32.xlu0 %v1125, 104
        %v1802 = vpop.permute.xlu0 %1801
        %v1804 = vsel %vm925, %v1800, 0
        %v1807 = vsel %vm925, %v1802, 0
        %1809 = vmatprep.subr.bf16.mxu0 0
        %1810 = vmatpush1.bf16.xpose.msra.mxu0 %v1807
        %1811 = vmatprep.subr.bf16.mxu0 0
        %1812 = vmatpush1.bf16.xpose.msra.mxu0 0
        %1813 = vmatprep.subr.bf16.mxu0 0
        %1814 = vmatpush1.bf16.xpose.msra.mxu0 0
        %1815 = vmatprep.subr.bf16.mxu0 0
        %1816 = vmatpush1.bf16.xpose.msra.mxu0 0
        %1817 = vmatprep.subr.bf16.mxu0 0
        %1818 = vmatpush1.bf16.xpose.msra.mxu0 0
        %1819 = vmatprep.subr.bf16.mxu0 0
        %1820 = vmatpush1.bf16.xpose.msra.mxu0 0
        %1821 = vmatprep.subr.bf16.mxu0 0
        %1822 = vmatpush1.bf16.xpose.msra.mxu0 0
        %1823 = vmatprep.subr.bf16.mxu0 0
        %1824 = vmatpush1.bf16.xpose.msra.mxu0 0
        %1825 = vmatprep.subr.bf16.mxu0 0
        %1826 = vmatpush1.bf16.xpose.msra.mxu0 0
        %1827 = vmatprep.subr.bf16.mxu0 0
        %1828 = vmatpush1.bf16.xpose.msra.mxu0 0
        %1829 = vmatprep.subr.bf16.mxu0 0
        %1830 = vmatpush1.bf16.xpose.msra.mxu0 0
        %1831 = vmatprep.subr.bf16.mxu0 0
        %1832 = vmatpush1.bf16.xpose.msra.mxu0 0
        %1833 = vmatprep.subr.bf16.mxu0 0
        %1834 = vmatpush1.bf16.xpose.msra.mxu0 0
        %1835 = vmatprep.subr.bf16.mxu0 0
        %1836 = vmatpush1.bf16.xpose.msra.mxu0 0
        %1837 = vmatprep.subr.bf16.mxu0 0
        %1838 = vmatpush1.bf16.xpose.msra.mxu0 0
        %1839 = vmatprep.subr.bf16.mxu0 0
        %1840 = vmatpush1.bf16.xpose.msra.mxu0 0
        %1841 = vmatprep.mubr.bf16.mxu0 0
        %1842 = vmatmul.mubr.bf16.gmra.mrb[0].mxu0 %v1804
        %v1843 = vpop.f32.mrb[0].mxu0
        %v1844 = vadd.f32 %v1120, %v1843
        %v1845 = vpop.f32.mrb[0].mxu0
        %v1846 = vpop.f32.mrb[0].mxu0
        %v1847 = vpop.f32.mrb[0].mxu0
        %1848 = vdwg.mxu0
        %1849 = vrot.lane.b32.xlu0 %v1021, 104
        %v1850 = vpop.permute.xlu0 %1849
        %1851 = vrot.lane.b32.xlu0 %v1126, 104
        %v1852 = vpop.permute.xlu0 %1851
        %v1854 = vsel %vm925, %v1850, 0
        %v1857 = vsel %vm925, %v1852, 0
        %1859 = vmatprep.subr.bf16.mxu0 0
        %1860 = vmatpush1.bf16.xpose.msra.mxu0 %v1857
        %1861 = vmatprep.subr.bf16.mxu0 0
        %1862 = vmatpush1.bf16.xpose.msra.mxu0 0
        %1863 = vmatprep.subr.bf16.mxu0 0
        %1864 = vmatpush1.bf16.xpose.msra.mxu0 0
        %1865 = vmatprep.subr.bf16.mxu0 0
        %1866 = vmatpush1.bf16.xpose.msra.mxu0 0
        %1867 = vmatprep.subr.bf16.mxu0 0
        %1868 = vmatpush1.bf16.xpose.msra.mxu0 0
        %1869 = vmatprep.subr.bf16.mxu0 0
        %1870 = vmatpush1.bf16.xpose.msra.mxu0 0
        %1871 = vmatprep.subr.bf16.mxu0 0
        %1872 = vmatpush1.bf16.xpose.msra.mxu0 0
        %1873 = vmatprep.subr.bf16.mxu0 0
        %1874 = vmatpush1.bf16.xpose.msra.mxu0 0
        %1875 = vmatprep.subr.bf16.mxu0 0
        %1876 = vmatpush1.bf16.xpose.msra.mxu0 0
        %1877 = vmatprep.subr.bf16.mxu0 0
        %1878 = vmatpush1.bf16.xpose.msra.mxu0 0
        %1879 = vmatprep.subr.bf16.mxu0 0
        %1880 = vmatpush1.bf16.xpose.msra.mxu0 0
        %1881 = vmatprep.subr.bf16.mxu0 0
        %1882 = vmatpush1.bf16.xpose.msra.mxu0 0
        %1883 = vmatprep.subr.bf16.mxu0 0
        %1884 = vmatpush1.bf16.xpose.msra.mxu0 0
        %1885 = vmatprep.subr.bf16.mxu0 0
        %1886 = vmatpush1.bf16.xpose.msra.mxu0 0
        %1887 = vmatprep.subr.bf16.mxu0 0
        %1888 = vmatpush1.bf16.xpose.msra.mxu0 0
        %1889 = vmatprep.subr.bf16.mxu0 0
        %1890 = vmatpush1.bf16.xpose.msra.mxu0 0
        %1891 = vmatprep.mubr.bf16.mxu0 0
        %1892 = vmatmul.mubr.bf16.gmra.mrb[0].mxu0 %v1854
        %v1893 = vpop.f32.mrb[0].mxu0
        %v1894 = vadd.f32 %v1124, %v1893
        %v1895 = vpop.f32.mrb[0].mxu0
        %v1896 = vpop.f32.mrb[0].mxu0
        %v1897 = vpop.f32.mrb[0].mxu0
        %1898 = vdwg.mxu0
        %v1899 = vsel %vm1229, -32767.0, %v1844
        %v1900 = vsel %vm1230, -32767.0, %v1894
        %v1901 = vsel %vm1233, %v1899, -inf
        %1902 = vmax.xlane.f32.xlu0 %v1901
        %v1903 = vpop.xlane.xlu0 %1902
        %v1904 = vsel %vm1233, %v1900, -inf
        %1905 = vmax.xlane.f32.xlu0 %v1904
        %v1906 = vpop.xlane.xlu0 %1905
        %v1907 = vsub.f32 %v1899, %v1903
        %v1908 = vsub.f32 %v1900, %v1906
        %v1909 = vmul.f32 %v1907, 1.442695
        %v1910 = vpow.pop %v1909
        %v1911 = vmul.f32 %v1908, 1.442695
        %v1912 = vpow.pop %v1911
        %v1913 = vsel %vm1233, %v1910, 0.0
        %1914 = vadd.xlane.f32.xlu0 %v1913
        %v1915 = vpop.xlane.xlu0 %1914
        %v1916 = vsel %vm1233, %v1912, 0.0
        %1917 = vadd.xlane.f32.xlu0 %v1916
        %v1918 = vpop.xlane.xlu0 %1917
        %v1919 = vrcp.pop %v1915
        %v1920 = vrcp.pop %v1918
        %v1921 = vmul.f32 %v1910, %v1919
        %v1922 = vmul.f32 %v1912, %v1920
        %v1923 = vpack.c.bf16 %v1921, %v1921
        %v1924 = vpack.c.bf16 %v1922, %v1922
        %1925 = vrot.lane.b32.xlu0 %v1127, 104
        %v1926 = vpop.permute.xlu0 %1925
        %v1928 = vsel %vm1233, %v1923, 0
        %v1931 = vsel %vm1261, %v1926, 0
        %1933 = vmatprep.subr.bf16.mxu0 0
        %1934 = vmatpush1.bf16.msra.mxu0 %v1931
        %1935 = vmatprep.subr.bf16.mxu0 0
        %1936 = vmatpush1.bf16.msra.mxu0 0
        %1937 = vmatprep.subr.bf16.mxu0 0
        %1938 = vmatpush1.bf16.msra.mxu0 0
        %1939 = vmatprep.subr.bf16.mxu0 0
        %1940 = vmatpush1.bf16.msra.mxu0 0
        %1941 = vmatprep.subr.bf16.mxu0 0
        %1942 = vmatpush1.bf16.msra.mxu0 0
        %1943 = vmatprep.subr.bf16.mxu0 0
        %1944 = vmatpush1.bf16.msra.mxu0 0
        %1945 = vmatprep.subr.bf16.mxu0 0
        %1946 = vmatpush1.bf16.msra.mxu0 0
        %1947 = vmatprep.subr.bf16.mxu0 0
        %1948 = vmatpush1.bf16.msra.mxu0 0
        %1949 = vmatprep.subr.bf16.mxu0 0
        %1950 = vmatpush1.bf16.msra.mxu0 0
        %1951 = vmatprep.subr.bf16.mxu0 0
        %1952 = vmatpush1.bf16.msra.mxu0 0
        %1953 = vmatprep.subr.bf16.mxu0 0
        %1954 = vmatpush1.bf16.msra.mxu0 0
        %1955 = vmatprep.subr.bf16.mxu0 0
        %1956 = vmatpush1.bf16.msra.mxu0 0
        %1957 = vmatprep.subr.bf16.mxu0 0
        %1958 = vmatpush1.bf16.msra.mxu0 0
        %1959 = vmatprep.subr.bf16.mxu0 0
        %1960 = vmatpush1.bf16.msra.mxu0 0
        %1961 = vmatprep.subr.bf16.mxu0 0
        %1962 = vmatpush1.bf16.msra.mxu0 0
        %1963 = vmatprep.subr.bf16.mxu0 0
        %1964 = vmatpush1.bf16.msra.mxu0 0
        %1965 = vmatprep.mubr.bf16.mxu0 0
        %1966 = vmatmul.mubr.bf16.gmra.mrb[0].mxu0 %v1928
        %v1967 = vpop.f32.mrb[0].mxu0
        %v1968 = vadd.f32 0.0, %v1967
        %v1969 = vpop.f32.mrb[0].mxu0
        %v1970 = vpop.f32.mrb[0].mxu0
        %v1971 = vpop.f32.mrb[0].mxu0
        %1972 = vdwg.mxu0
        %1973 = vrot.lane.b32.xlu0 %v1128, 104
        %v1974 = vpop.permute.xlu0 %1973
        %v1976 = vsel %vm1233, %v1924, 0
        %v1979 = vsel %vm1261, %v1974, 0
        %1981 = vmatprep.subr.bf16.mxu0 0
        %1982 = vmatpush1.bf16.msra.mxu0 %v1979
        %1983 = vmatprep.subr.bf16.mxu0 0
        %1984 = vmatpush1.bf16.msra.mxu0 0
        %1985 = vmatprep.subr.bf16.mxu0 0
        %1986 = vmatpush1.bf16.msra.mxu0 0
        %1987 = vmatprep.subr.bf16.mxu0 0
        %1988 = vmatpush1.bf16.msra.mxu0 0
        %1989 = vmatprep.subr.bf16.mxu0 0
        %1990 = vmatpush1.bf16.msra.mxu0 0
        %1991 = vmatprep.subr.bf16.mxu0 0
        %1992 = vmatpush1.bf16.msra.mxu0 0
        %1993 = vmatprep.subr.bf16.mxu0 0
        %1994 = vmatpush1.bf16.msra.mxu0 0
        %1995 = vmatprep.subr.bf16.mxu0 0
        %1996 = vmatpush1.bf16.msra.mxu0 0
        %1997 = vmatprep.subr.bf16.mxu0 0
        %1998 = vmatpush1.bf16.msra.mxu0 0
        %1999 = vmatprep.subr.bf16.mxu0 0
        %2000 = vmatpush1.bf16.msra.mxu0 0
        %2001 = vmatprep.subr.bf16.mxu0 0
        %2002 = vmatpush1.bf16.msra.mxu0 0
        %2003 = vmatprep.subr.bf16.mxu0 0
        %2004 = vmatpush1.bf16.msra.mxu0 0
        %2005 = vmatprep.subr.bf16.mxu0 0
        %2006 = vmatpush1.bf16.msra.mxu0 0
        %2007 = vmatprep.subr.bf16.mxu0 0
        %2008 = vmatpush1.bf16.msra.mxu0 0
        %2009 = vmatprep.subr.bf16.mxu0 0
        %2010 = vmatpush1.bf16.msra.mxu0 0
        %2011 = vmatprep.subr.bf16.mxu0 0
        %2012 = vmatpush1.bf16.msra.mxu0 0
        %2013 = vmatprep.mubr.bf16.mxu0 0
        %2014 = vmatmul.mubr.bf16.gmra.mrb[0].mxu0 %v1976
        %v2015 = vpop.f32.mrb[0].mxu0
        %v2016 = vadd.f32 0.0, %v2015
        %v2017 = vpop.f32.mrb[0].mxu0
        %v2018 = vpop.f32.mrb[0].mxu0
        %v2019 = vpop.f32.mrb[0].mxu0
        %2020 = vdwg.mxu0
        %2021 = vst.msk [vmem:[%s823] sm:$0xff] %vm1233, %v1231
        %2022 = vst.msk [vmem:[%s823 + $0x8] sm:$0xff] %vm1233, %v1453
        %2023 = vst.msk [vmem:[%s823 + $0x10] sm:$0xff] %vm1233, %v1677
        %2024 = vst.msk [vmem:[%s823 + $0x18] sm:$0xff] %vm1233, %v1899
        %2025 = vst.msk [vmem:[%s823 + $0x20] sm:$0xff] %vm1233, %v1232
        %2026 = vst.msk [vmem:[%s823 + $0x28] sm:$0xff] %vm1233, %v1454
        %2027 = vst.msk [vmem:[%s823 + $0x30] sm:$0xff] %vm1233, %v1678
        %2028 = vst.msk [vmem:[%s823 + $0x38] sm:$0xff] %vm1233, %v1900
        %2031 = vrot.lane.b32.xlu0 %v1523, 8
        %v2032 = vpop.permute.xlu0 %2031
        %2033 = vrot.lane.b32.xlu0 %v1572, 8
        %v2034 = vpop.permute.xlu0 %2033
        %2039 = vrot.lane.b32.xlu0 %v1746, 16
        %v2040 = vpop.permute.xlu0 %2039
        %2041 = vrot.lane.b32.xlu0 %v1794, 16
        %v2042 = vpop.permute.xlu0 %2041
        %2047 = vrot.lane.b32.xlu0 %v1968, 24
        %v2048 = vpop.permute.xlu0 %2047
        %2049 = vrot.lane.b32.xlu0 %v2016, 24
        %v2050 = vpop.permute.xlu0 %2049
        %v2053 = vsel %vm925, %v1300, %v2032
        %v2054 = vsel %vm925, %v1346, %v2034
        %vm2055 = vcmask 130048
        %v2056 = vsel %vm2055, %v2053, %v2040
        %v2057 = vsel %vm2055, %v2054, %v2042
        %vm2058 = vcmask 195584
        %v2059 = vsel %vm2058, %v2056, %v2048
        %v2060 = vsel %vm2058, %v2057, %v2050
        %v2061 = vpack.c.bf16 %v2060, %v2059
        %v2062 = vld [vmem:[%s785] sm:$0xf]
        %v2063 = vld [vmem:[%s785 + $0x4] sm:$0xf]
        %v2064 = vld [vmem:[%s785 + $0x8] sm:$0xf]
        %v2065 = vld [vmem:[%s785 + $0xc] sm:$0xf]
        %v2066 = vld [vmem:[%s788] sm:$0x1]
        %v2068 = vlaneseq
        %v2069 = vshrl.u32 %v2068, 7
        %v2070 = vsub.s32 0, %v2069
        %v2071 = vrot.slane %v2066, %v2070
        %v2077 = vunpack.c.l.b16 %v2062
        %v2078 = vunpack.c.l.b16 %v2063
        %v2079 = vunpack.c.l.b16 %v2064
        %v2080 = vunpack.c.l.b16 %v2065
        %v2081 = vpack.c.b16 %v2078, %v2077
        %v2082 = vpack.c.b16 %v2080, %v2079
        %v2086 = vsel %vm870, %v2061, 0
        %2088 = vmatprep.subr.bf16.mxu0 0
        %2089 = vmatpush1.bf16.msra.mxu0 %v2081
        %2090 = vmatprep.subr.bf16.mxu0 0
        %2091 = vmatpush1.bf16.msra.mxu0 %v2082
        %2092 = vmatprep.subr.bf16.mxu0 0
        %2093 = vmatpush1.bf16.msra.mxu0 0
        %2094 = vmatprep.subr.bf16.mxu0 0
        %2095 = vmatpush1.bf16.msra.mxu0 0
        %2096 = vmatprep.subr.bf16.mxu0 0
        %2097 = vmatpush1.bf16.msra.mxu0 0
        %2098 = vmatprep.subr.bf16.mxu0 0
        %2099 = vmatpush1.bf16.msra.mxu0 0
        %2100 = vmatprep.subr.bf16.mxu0 0
        %2101 = vmatpush1.bf16.msra.mxu0 0
        %2102 = vmatprep.subr.bf16.mxu0 0
        %2103 = vmatpush1.bf16.msra.mxu0 0
        %2104 = vmatprep.subr.bf16.mxu0 0
        %2105 = vmatpush1.bf16.msra.mxu0 0
        %2106 = vmatprep.subr.bf16.mxu0 0
        %2107 = vmatpush1.bf16.msra.mxu0 0
        %2108 = vmatprep.subr.bf16.mxu0 0
        %2109 = vmatpush1.bf16.msra.mxu0 0
        %2110 = vmatprep.subr.bf16.mxu0 0
        %2111 = vmatpush1.bf16.msra.mxu0 0
        %2112 = vmatprep.subr.bf16.mxu0 0
        %2113 = vmatpush1.bf16.msra.mxu0 0
        %2114 = vmatprep.subr.bf16.mxu0 0
        %2115 = vmatpush1.bf16.msra.mxu0 0
        %2116 = vmatprep.subr.bf16.mxu0 0
        %2117 = vmatpush1.bf16.msra.mxu0 0
        %2118 = vmatprep.subr.bf16.mxu0 0
        %2119 = vmatpush1.bf16.msra.mxu0 0
        %2120 = vmatprep.mubr.bf16.mxu0 0
        %2121 = vmatmul.mubr.bf16.gmra.mrb[0].mxu0 %v2086
        %v2122 = vpop.f32.mrb[0].mxu0
        %v2123 = vadd.f32 %v2071, %v2122
        %v2124 = vpop.f32.mrb[0].mxu0
        %v2125 = vpop.f32.mrb[0].mxu0
        %v2126 = vadd.f32 %v2071, %v2125
        %v2127 = vpop.f32.mrb[0].mxu0
        %2128 = vdwg.mxu0
        %v2129 = vadd.f32 %v844, %v2123
        %v2130 = vadd.f32 %v845, %v2126
        %v2131 = vld [vmem:[%s791] sm:$0x1]
        %v2132 = vld [vmem:[%s794] sm:$0x1]
        %v2133 = vsel %vm870, %v2129, 0.0
        %2134 = vadd.xlane.f32.xlu0 %v2133
        %v2135 = vpop.xlane.xlu0 %2134
        %v2136 = vsel %vm870, %v2130, 0.0
        %2137 = vadd.xlane.f32.xlu0 %v2136
        %v2138 = vpop.xlane.xlu0 %2137
        %v2139 = vrcp.pop 32.0
        %v2140 = vmul.f32 %v2135, %v2139
        %v2141 = vmul.f32 %v2138, %v2139
        %v2142 = vsub.f32 %v2129, %v2140
        %v2143 = vsub.f32 %v2130, %v2141
        %v2144 = vmul.f32 %v2142, %v2142
        %v2145 = vmul.f32 %v2143, %v2143
        %v2146 = vsel %vm870, %v2144, 0.0
        %2147 = vadd.xlane.f32.xlu0 %v2146
        %v2148 = vpop.xlane.xlu0 %2147
        %v2149 = vsel %vm870, %v2145, 0.0
        %2150 = vadd.xlane.f32.xlu0 %v2149
        %v2151 = vpop.xlane.xlu0 %2150
        %v2152 = vmul.f32 %v2148, %v2139
        %v2153 = vmul.f32 %v2151, %v2139
        %v2154 = vadd.f32 %v2152, 1e-05
        %v2155 = vadd.f32 %v2153, 1e-05
        %v2156 = vrsqrt.pop %v2154
        %v2157 = vrsqrt.pop %v2155
        %v2158 = vmul.f32 %v2142, %v2156
        %v2159 = vmul.f32 %v2143, %v2157
        %v2161 = vlaneseq
        %v2162 = vshrl.u32 %v2161, 7
        %v2163 = vsub.s32 0, %v2162
        %v2164 = vrot.slane %v2131, %v2163
        %v2166 = vmul.f32 %v2158, %v2164
        %v2167 = vmul.f32 %v2159, %v2164
        %v2169 = vlaneseq
        %v2170 = vshrl.u32 %v2169, 7
        %v2171 = vsub.s32 0, %v2170
        %v2172 = vrot.slane %v2132, %v2171
        %v2174 = vadd.f32 %v2166, %v2172
        %v2175 = vadd.f32 %v2167, %v2172
        %v2176 = vpack.c.bf16 %v2175, %v2174
        %v2177 = vld [vmem:[%s799] sm:$0xf]
        %v2178 = vld [vmem:[%s799 + $0x4] sm:$0xf]
        %v2179 = vld [vmem:[%s799 + $0x8] sm:$0xf]
        %v2180 = vld [vmem:[%s799 + $0xc] sm:$0xf]
        %v2181 = vld [vmem:[%s802] sm:$0x1]
        %v2183 = vlaneseq
        %v2184 = vshrl.u32 %v2183, 7
        %v2185 = vsub.s32 0, %v2184
        %v2186 = vrot.slane %v2181, %v2185
        %v2192 = vunpack.c.l.b16 %v2177
        %v2193 = vunpack.c.l.b16 %v2178
        %v2194 = vunpack.c.l.b16 %v2179
        %v2195 = vunpack.c.l.b16 %v2180
        %v2196 = vpack.c.b16 %v2193, %v2192
        %v2197 = vpack.c.b16 %v2195, %v2194
        %v2201 = vsel %vm870, %v2176, 0
        %2203 = vmatprep.subr.bf16.mxu0 0
        %2204 = vmatpush1.bf16.msra.mxu0 %v2196
        %2205 = vmatprep.subr.bf16.mxu0 0
        %2206 = vmatpush1.bf16.msra.mxu0 %v2197
        %2207 = vmatprep.subr.bf16.mxu0 0
        %2208 = vmatpush1.bf16.msra.mxu0 0
        %2209 = vmatprep.subr.bf16.mxu0 0
        %2210 = vmatpush1.bf16.msra.mxu0 0
        %2211 = vmatprep.subr.bf16.mxu0 0
        %2212 = vmatpush1.bf16.msra.mxu0 0
        %2213 = vmatprep.subr.bf16.mxu0 0
        %2214 = vmatpush1.bf16.msra.mxu0 0
        %2215 = vmatprep.subr.bf16.mxu0 0
        %2216 = vmatpush1.bf16.msra.mxu0 0
        %2217 = vmatprep.subr.bf16.mxu0 0
        %2218 = vmatpush1.bf16.msra.mxu0 0
        %2219 = vmatprep.subr.bf16.mxu0 0
        %2220 = vmatpush1.bf16.msra.mxu0 0
        %2221 = vmatprep.subr.bf16.mxu0 0
        %2222 = vmatpush1.bf16.msra.mxu0 0
        %2223 = vmatprep.subr.bf16.mxu0 0
        %2224 = vmatpush1.bf16.msra.mxu0 0
        %2225 = vmatprep.subr.bf16.mxu0 0
        %2226 = vmatpush1.bf16.msra.mxu0 0
        %2227 = vmatprep.subr.bf16.mxu0 0
        %2228 = vmatpush1.bf16.msra.mxu0 0
        %2229 = vmatprep.subr.bf16.mxu0 0
        %2230 = vmatpush1.bf16.msra.mxu0 0
        %2231 = vmatprep.subr.bf16.mxu0 0
        %2232 = vmatpush1.bf16.msra.mxu0 0
        %2233 = vmatprep.subr.bf16.mxu0 0
        %2234 = vmatpush1.bf16.msra.mxu0 0
        %2235 = vmatprep.mubr.bf16.mxu0 0
        %2236 = vmatmul.mubr.bf16.gmra.mrb[0].mxu0 %v2201
        %v2237 = vpop.f32.mrb[0].mxu0
        %v2238 = vadd.f32 %v2186, %v2237
        %v2239 = vpop.f32.mrb[0].mxu0
        %v2240 = vpop.f32.mrb[0].mxu0
        %v2241 = vadd.f32 %v2186, %v2240
        %v2242 = vpop.f32.mrb[0].mxu0
        %2243 = vdwg.mxu0
        %v2244 = vmul.f32 %v2238, 0.5
        %v2245 = vmul.f32 %v2241, 0.5
        %v2246 = vmul.f32 %v2238, 0.044715
        %v2247 = vmul.f32 %v2241, 0.044715
        %v2248 = vmul.f32 %v2246, %v2238
        %v2249 = vmul.f32 %v2247, %v2241
        %v2250 = vmul.f32 %v2248, %v2238
        %v2251 = vmul.f32 %v2249, %v2241
        %v2252 = vadd.f32 %v2238, %v2250
        %v2253 = vadd.f32 %v2241, %v2251
        %v2254 = vmul.f32 %v2252, 0.7978846
        %v2255 = vmul.f32 %v2253, 0.7978846
        %v2256 = vtanh.pop %v2254
        %v2257 = vtanh.pop %v2255
        %v2258 = vadd.f32 %v2256, 1.0
        %v2259 = vadd.f32 %v2257, 1.0
        %v2260 = vmul.f32 %v2244, %v2258
        %v2261 = vmul.f32 %v2245, %v2259
        %v2262 = vpack.c.bf16 %v2261, %v2260
        %v2263 = vld [vmem:[%s807] sm:$0xf]
        %v2264 = vld [vmem:[%s807 + $0x4] sm:$0xf]
        %v2265 = vld [vmem:[%s807 + $0x8] sm:$0xf]
        %v2266 = vld [vmem:[%s807 + $0xc] sm:$0xf]
        %v2267 = vld [vmem:[%s807 + $0x10] sm:$0xf]
        %v2268 = vld [vmem:[%s807 + $0x14] sm:$0xf]
        %v2269 = vld [vmem:[%s807 + $0x18] sm:$0xf]
        %v2270 = vld [vmem:[%s807 + $0x1c] sm:$0xf]
        %v2271 = vld [vmem:[%s807 + $0x20] sm:$0xf]
        %v2272 = vld [vmem:[%s807 + $0x24] sm:$0xf]
        %v2273 = vld [vmem:[%s807 + $0x28] sm:$0xf]
        %v2274 = vld [vmem:[%s807 + $0x2c] sm:$0xf]
        %v2275 = vld [vmem:[%s807 + $0x30] sm:$0xf]
        %v2276 = vld [vmem:[%s807 + $0x34] sm:$0xf]
        %v2277 = vld [vmem:[%s807 + $0x38] sm:$0xf]
        %v2278 = vld [vmem:[%s807 + $0x3c] sm:$0xf]
        %v2279 = vld [vmem:[%s810] sm:$0x1]
        %v2281 = vlaneseq
        %v2282 = vshrl.u32 %v2281, 7
        %v2283 = vsub.s32 0, %v2282
        %v2284 = vrot.slane %v2279, %v2283
        %v2302 = vunpack.c.l.b16 %v2263
        %v2303 = vunpack.c.l.b16 %v2264
        %v2304 = vunpack.c.l.b16 %v2265
        %v2305 = vunpack.c.l.b16 %v2266
        %v2306 = vunpack.c.l.b16 %v2267
        %v2307 = vunpack.c.l.b16 %v2268
        %v2308 = vunpack.c.l.b16 %v2269
        %v2309 = vunpack.c.l.b16 %v2270
        %v2310 = vunpack.c.l.b16 %v2271
        %v2311 = vunpack.c.l.b16 %v2272
        %v2312 = vunpack.c.l.b16 %v2273
        %v2313 = vunpack.c.l.b16 %v2274
        %v2314 = vunpack.c.l.b16 %v2275
        %v2315 = vunpack.c.l.b16 %v2276
        %v2316 = vunpack.c.l.b16 %v2277
        %v2317 = vunpack.c.l.b16 %v2278
        %v2318 = vpack.c.b16 %v2303, %v2302
        %v2319 = vpack.c.b16 %v2305, %v2304
        %v2320 = vpack.c.b16 %v2307, %v2306
        %v2321 = vpack.c.b16 %v2309, %v2308
        %v2322 = vpack.c.b16 %v2311, %v2310
        %v2323 = vpack.c.b16 %v2313, %v2312
        %v2324 = vpack.c.b16 %v2315, %v2314
        %v2325 = vpack.c.b16 %v2317, %v2316
        %2334 = vmatprep.subr.bf16.mxu0 0
        %2335 = vmatpush1.bf16.msra.mxu0 %v2318
        %2336 = vmatprep.subr.bf16.mxu0 0
        %2337 = vmatpush1.bf16.msra.mxu0 %v2319
        %2338 = vmatprep.subr.bf16.mxu0 0
        %2339 = vmatpush1.bf16.msra.mxu0 %v2320
        %2340 = vmatprep.subr.bf16.mxu0 0
        %2341 = vmatpush1.bf16.msra.mxu0 %v2321
        %2342 = vmatprep.subr.bf16.mxu0 0
        %2343 = vmatpush1.bf16.msra.mxu0 %v2322
        %2344 = vmatprep.subr.bf16.mxu0 0
        %2345 = vmatpush1.bf16.msra.mxu0 %v2323
        %2346 = vmatprep.subr.bf16.mxu0 0
        %2347 = vmatpush1.bf16.msra.mxu0 %v2324
        %2348 = vmatprep.subr.bf16.mxu0 0
        %2349 = vmatpush1.bf16.msra.mxu0 %v2325
        %2350 = vmatprep.subr.bf16.mxu0 0
        %2351 = vmatpush1.bf16.msra.mxu0 0
        %2352 = vmatprep.subr.bf16.mxu0 0
        %2353 = vmatpush1.bf16.msra.mxu0 0
        %2354 = vmatprep.subr.bf16.mxu0 0
        %2355 = vmatpush1.bf16.msra.mxu0 0
        %2356 = vmatprep.subr.bf16.mxu0 0
        %2357 = vmatpush1.bf16.msra.mxu0 0
        %2358 = vmatprep.subr.bf16.mxu0 0
        %2359 = vmatpush1.bf16.msra.mxu0 0
        %2360 = vmatprep.subr.bf16.mxu0 0
        %2361 = vmatpush1.bf16.msra.mxu0 0
        %2362 = vmatprep.subr.bf16.mxu0 0
        %2363 = vmatpush1.bf16.msra.mxu0 0
        %2364 = vmatprep.subr.bf16.mxu0 0
        %2365 = vmatpush1.bf16.msra.mxu0 0
        %2366 = vmatprep.mubr.bf16.mxu0 0
        %2367 = vmatmul.mubr.bf16.gmra.mrb[0].mxu0 %v2262
        %v2368 = vpop.f32.mrb[0].mxu0
        %v2369 = vadd.f32 %v2284, %v2368
        %v2370 = vpop.f32.mrb[0].mxu0
        %v2371 = vpop.f32.mrb[0].mxu0
        %v2372 = vadd.f32 %v2284, %v2371
        %v2373 = vpop.f32.mrb[0].mxu0
        %2374 = vdwg.mxu0
        %v2375 = vadd.f32 %v2174, %v2369
        %v2376 = vadd.f32 %v2175, %v2372
        %v2377 = vld [vmem:[%s813] sm:$0x1]
        %v2378 = vld [vmem:[%s816] sm:$0x1]
        %v2379 = vsel %vm870, %v2375, 0.0
        %2380 = vadd.xlane.f32.xlu0 %v2379
        %v2381 = vpop.xlane.xlu0 %2380
        %v2382 = vsel %vm870, %v2376, 0.0
        %2383 = vadd.xlane.f32.xlu0 %v2382
        %v2384 = vpop.xlane.xlu0 %2383
        %v2385 = vmul.f32 %v2381, %v2139
        %v2386 = vmul.f32 %v2384, %v2139
        %v2387 = vsub.f32 %v2375, %v2385
        %v2388 = vsub.f32 %v2376, %v2386
        %v2389 = vmul.f32 %v2387, %v2387
        %v2390 = vmul.f32 %v2388, %v2388
        %v2391 = vsel %vm870, %v2389, 0.0
        %2392 = vadd.xlane.f32.xlu0 %v2391
        %v2393 = vpop.xlane.xlu0 %2392
        %v2394 = vsel %vm870, %v2390, 0.0
        %2395 = vadd.xlane.f32.xlu0 %v2394
        %v2396 = vpop.xlane.xlu0 %2395
        %v2397 = vmul.f32 %v2393, %v2139
        %v2398 = vmul.f32 %v2396, %v2139
        %v2399 = vadd.f32 %v2397, 1e-05
        %v2400 = vadd.f32 %v2398, 1e-05
        %v2401 = vrsqrt.pop %v2399
        %v2402 = vrsqrt.pop %v2400
        %v2403 = vmul.f32 %v2387, %v2401
        %v2404 = vmul.f32 %v2388, %v2402
        %v2406 = vlaneseq
        %v2407 = vshrl.u32 %v2406, 7
        %v2408 = vsub.s32 0, %v2407
        %v2409 = vrot.slane %v2377, %v2408
        %v2411 = vmul.f32 %v2403, %v2409
        %v2412 = vmul.f32 %v2404, %v2409
        %v2414 = vlaneseq
        %v2415 = vshrl.u32 %v2414, 7
        %v2416 = vsub.s32 0, %v2415
        %v2417 = vrot.slane %v2378, %v2416
        %v2419 = vadd.f32 %v2411, %v2417
        %v2420 = vadd.f32 %v2412, %v2417
        %2421 = vst.msk [vmem:[#allocation2] sm:$0xff] %vm870, %v2419
        %2422 = vst.msk [vmem:[#allocation2 + $0x8] sm:$0xff] %vm870, %v2420
        %s2423 = smul.u32 2, %s34
        %p2424 = scmp.lt.s32.totalorder %s2423, 1
        %s2425 = scalar_select %p2424, %s2423, 1
        %s2426 = smul.addr %s2425, 4
        %s2427 = smul.addr %s2426, 8
        %s2428 = scalar_lea.vmem %s17, %s2427
        // Predicated region
        $region89: #{tpu_custom_call.1} parent=83 // pred_check
          %p2429 = pneg %p476
        $region90: #{tpu_custom_call.1} parent=83 // pred_check_branch
          %2431 = sbr.rel (%p2429) target = $region92
        $region91: #{tpu_custom_call.1} parent=83 // pred_region
          %s2432 = smul.u32 2, %s34
          %s2434 = ssub.s32 256, 256
          %2435 = vsyncadd [#allocation3], %s2434
          %s2436 = smul.addr %s2432, 128
          %s2437 = scalar_lea.hbm %s16, %s2436
          %s2438 = sshll.u32 [#allocation2], 4
          %s2439 = int_to_ptr.vmem [resolvable:$true] %s2438
          %2444 = dma.vmem_to_hbm [thread:$0]  %s2439, 256, %s2437, [#allocation3], 128, 128, 8
        $region92: #{tpu_custom_call.1} parent=83 // pred_fallthru
          _
        // Predicated region
        $region93: #{tpu_custom_call.1} parent=83 // pred_check
          %p2445 = pneg %p502
        $region94: #{tpu_custom_call.1} parent=83 // pred_check_branch
          %2447 = sbr.rel (%p2445) target = $region96
        $region95: #{tpu_custom_call.1} parent=83 // pred_region
          %s2448 = smul.u32 2, %s34
        $region96: #{tpu_custom_call.1} parent=83 // pred_fallthru
          _
        // Predicated region
        $region97: #{tpu_custom_call.1} parent=83 // pred_check
          %p2449 = pneg %p476
        $region98: #{tpu_custom_call.1} parent=83 // pred_check_branch
          %2451 = sbr.rel (%p2449) target = $region100
        $region99: #{tpu_custom_call.1} parent=83 // pred_region
          %2452 = dma.done [#allocation3], 256
        $region100: #{tpu_custom_call.1} parent=83 // pred_fallthru
          _
        // Predicated region
        $region101: #{tpu_custom_call.1} parent=83 // pred_check
          %p2453 = pneg %p502
        $region102: #{tpu_custom_call.1} parent=83 // pred_check_branch
          %2455 = sbr.rel (%p2453) target = $region104
        $region103: #{tpu_custom_call.1} parent=83 // pred_region
          %s2456 = smul.u32 2, %s34
          %p2457 = scmp.lt.s32.totalorder %s2456, 1
          %s2458 = scalar_select %p2457, %s2456, 1
          %s2459 = smul.addr %s2458, 4
          %s2460 = smul.addr %s2459, 8
          %s2461 = scalar_lea.vmem %s17, %s2460
        $region104: #{tpu_custom_call.1} parent=83 // pred_fallthru
          _
      $region84: #{tpu_custom_call.1} parent=5 // pred_fallthru
        _
      %p2462 = scmp.le.s32.totalorder 2, %s25
      // Predicated region
      $region105: #{tpu_custom_call.1} parent=5 // pred_check
        %p2463 = pneg %p2462
      $region106: #{tpu_custom_call.1} parent=5 // pred_check_branch
        %2465 = sbr.rel (%p2463) target = $region108
      $region107: #{tpu_custom_call.1} parent=5 // pred_region
        %s2466 = ssub.s32 %s25, 2
      $region108: #{tpu_custom_call.1} parent=5 // pred_fallthru
        _
    $region6: #{tpu_custom_call.1} parent=1 // loop_footer
      %s29 = sadd.s32 1, %s25
    $region7: #{tpu_custom_call.1} parent=1 // loop_footer_branch
      %24 = sbr.rel target = $region3
    $region8: #{tpu_custom_call.1} parent=1 // loop_exit
      _
    %2467 = vsyncpa [#allocation3], 1
    %s2468 = scalar_lea.sflag [#allocation3], 1
    %2469 = vsyncpa %s2468, 1

</llo_original>
